<compile_context>
chip_gen: v6e
topology: v6e:2x2x1
jax: 0.10.0
libtpu: 0.0.40
codegen_flags: <defaults>
</compile_context>

<pallas_src>
import functools

import jax
import jax.numpy as jnp
from jax import lax
from jax.experimental import pallas as pl
from jax.experimental.pallas import tpu as pltpu

LN_EPS = 1e-5          # torch nn.LayerNorm default
NEG_INF = -1.0e9       # matches the -1e9 constant in the torch forward


def _layer_norm(x, g_ref, b_ref):
    mean = jnp.mean(x, axis=-1, keepdims=True)
    var = jnp.mean(jnp.square(x - mean), axis=-1, keepdims=True)
    return (x - mean) * lax.rsqrt(var + LN_EPS) * g_ref[...] + b_ref[...]


def _fold_minor(x):
    """[..., A, B] -> [..., A*B] using static slices + lane-concat only."""
    a = x.shape[-2]
    parts = [x[..., i:i + 1, :] for i in range(a)]
    return jnp.concatenate(parts, axis=-1)[..., 0, :]


def _tile_lanes(x, n):
    """Repeat the lane axis n times: [..., W] -> [..., n*W]."""
    return jnp.concatenate([x] * n, axis=-1)


def pgn_kernel(dims, z_ref, ef_ref, gf_ref, adj_ref,
               zw_ref, zb_ref, ew_ref, eb_ref, gw_ref, gb_ref,
               l1w_ref, l1b_ref, l2w_ref, l2b_ref,
               o2w_ref, o2b_ref, o3w_ref, o3b_ref,
               lng_ref, lnb_ref,
               out_ref, tri_ref):
    N, mid, T, out_sz = dims["N"], dims["mid"], dims["T"], dims["out"]
    zo, eo, go = dims["z_offs"], dims["e_offs"], dims["g_offs"]
    Bblk = z_ref.shape[0]
    bf16 = jnp.bfloat16

    def matmul(x, w_ref, b_ref):
        return jnp.dot(x, w_ref[...],
                       preferred_element_type=jnp.float32) + b_ref[...]

    # ---- fused node-side matmul: m_1 / m_2 / t_1 / t_2 / o1 in one pass ----
    z2 = z_ref[...].reshape(Bblk * N, -1)                         # bf16
    zout = matmul(z2, zw_ref, zb_ref).reshape(Bblk, N, -1)        # f32
    msg_1 = zout[..., zo[0]:zo[0] + mid]
    msg_2 = zout[..., zo[1]:zo[1] + mid]
    tri_1 = zout[..., zo[2]:zo[2] + T]
    tri_2 = zout[..., zo[3]:zo[3] + T]
    h_1 = zout[..., zo[4]:zo[4] + out_sz]
    tri_3 = tri_1        # torch forward reuses t_1's weights for tri_3

    # ---- fused edge-side matmul: m_e / t_e_1 / t_e_2 / t_e_3 ----
    ef = ef_ref[...].reshape(Bblk * N * N, -1)                    # bf16
    eout = matmul(ef, ew_ref, eb_ref).reshape(Bblk, N, N, -1)     # f32
    msg_e = eout[..., eo[0]:eo[0] + mid]
    te1 = eout[..., eo[1]:eo[1] + T]
    te2 = eout[..., eo[2]:eo[2] + T]
    te3 = eout[..., eo[3]:eo[3] + T]

    # ---- fused graph-side matmul: m_g / t_g ----
    gout = matmul(gf_ref[...].reshape(Bblk, -1), gw_ref, gb_ref)  # [Bblk, Wg]
    msg_g = gout[:, go[0]:go[0] + mid]
    tg = gout[:, go[1]:go[1] + T]

    # ---- pairwise messages + message MLP ----
    msgs = (msg_1[:, None, :, :] + msg_2[:, :, None, :]
            + msg_e + msg_g[:, None, None, :])                    # [Bblk,N,N,mid]
    m = jnp.maximum(msgs, 0.0).reshape(Bblk * N * N, mid)
    m = jnp.maximum(matmul(m.astype(bf16), l1w_ref, l1b_ref), 0.0)
    m = matmul(m.astype(bf16), l2w_ref, l2b_ref)
    msgs = m.reshape(Bblk, N, N, mid)

    # ---- adjacency-masked max aggregation over the source axis ----
    mask = adj_ref[...][..., None] > 0.5          # wrapper ships an exact 0/1 mask
    msgs_agg = jnp.max(jnp.where(mask, msgs, NEG_INF), axis=1)    # [Bblk,N,mid]

    h_2 = matmul(msgs_agg.reshape(Bblk * N, mid).astype(bf16), o2w_ref, o2b_ref)
    node_out = jnp.maximum(h_1.reshape(Bblk * N, out_sz) + h_2, 0.0)
    node_out = _layer_norm(node_out, lng_ref, lnb_ref)            # [Bblk*N, out]
    node3 = node_out.reshape(Bblk, N, out_sz)
    # lane-dense (B, 1, N*out) store instead of a masked 32-lane store
    out_row = jnp.concatenate([node3[:, j:j + 1, :] for j in range(N)], axis=-1)
    out_ref[...] = out_row.astype(out_ref.dtype)

    # ---- triplet messages (Dudzik & Velickovic 2022) ----
    # tri[j,k] = max_i(tri_1[i] + te1[i,j] + te2[i,k])
    #            + tri_2[j] + tri_3[k] + te3[j,k] + tg
    # (k, T) stays fused on the lane axis (N*T lanes) throughout; the
    # [N,N,N,T] cube only exists one i-chunk at a time.
    A = tri_1[:, :, None, :] + te1                     # [Bblk, N(i), N(j), T]
    C = _fold_minor(te2)                               # [Bblk, N(i), N(k)*T]
    CH = min(8, N)
    n_chunks = -(-N // CH)
    if n_chunks == 1:
        cube = _tile_lanes(A, N) + C[:, :, None, :]    # [Bblk, N(i), N(j), N*T]
        acc = jnp.max(cube, axis=1)                    # [Bblk, N(j), N(k)*T]
    else:
        pad = n_chunks * CH - N
        if pad:
            A = jnp.concatenate(
                [A, jnp.full((Bblk, pad, N, T), -jnp.inf, jnp.float32)], axis=1)
            C = jnp.concatenate(
                [C, jnp.zeros((Bblk, pad, N * T), jnp.float32)], axis=1)

        def chunk_body(s, acc):
            a_c = lax.dynamic_slice_in_dim(A, s * CH, CH, axis=1)
            c_c = lax.dynamic_slice_in_dim(C, s * CH, CH, axis=1)
            cube = _tile_lanes(a_c, N) + c_c[:, :, None, :]
            return jnp.maximum(acc, jnp.max(cube, axis=1))

        acc = lax.fori_loop(0, n_chunks, chunk_body,
                            jnp.full((Bblk, N, N * T), -jnp.inf, jnp.float32))
    # TODO(synk): for large N, tile the destination (j) rows over a second
    # grid axis so eout / msgs / acc stay inside the per-step VMEM budget.

    pre = (acc
           + _tile_lanes(tri_2, N)                     # tri_2[j] over all k
           + _fold_minor(tri_3)[:, None, :]            # tri_3[k] over all j
           + _fold_minor(te3)                          # te3[j, k]
           + _tile_lanes(tg, N)[:, None, :])           # tri_g
    # o3 + ReLU + LayerNorm per k-segment; concatenating the segments along
    # lanes yields the lane-dense (B, N, N*out) layout directly.
    segs = []
    for k in range(N):
        seg = pre[..., k * T:(k + 1) * T].reshape(Bblk * N, T)
        seg = jnp.maximum(matmul(seg.astype(bf16), o3w_ref, o3b_ref), 0.0)
        segs.append(_layer_norm(seg, lng_ref, lnb_ref))
    tri_out = jnp.concatenate(segs, axis=-1)           # [Bblk*N(j), N(k)*out]
    tri_ref[...] = tri_out.reshape(Bblk, N, N * out_sz).astype(tri_ref.dtype)
    # TODO(synk): gated=False in the default config, so the gating branch is
    # not implemented.


def _fuse_padded(ws, bs, align):
    """Concatenate [in, w_i] weight blocks along the output dim, zero-padding
    each segment to a multiple of `align` lanes so in-kernel slices land at
    vreg-aligned offsets.  Returns (bf16 fused W, f32 fused b, offsets)."""
    segs_w, segs_b, offs = [], [], []
    off = 0
    for w, b in zip(ws, bs):
        width = w.shape[1]
        pad = (-width) % align
        segs_w.append(jnp.pad(w, ((0, 0), (0, pad))))
        segs_b.append(jnp.pad(b, ((0, 0), (0, pad))))
        offs.append(off)
        off += width + pad
    fused_w = jnp.concatenate(segs_w, axis=1).astype(jnp.bfloat16)
    fused_b = jnp.concatenate(segs_b, axis=1).astype(jnp.float32)
    return fused_w, fused_b, tuple(offs)


def _pick_config(B, N, F, Wz, We, Wg, mid, T, out_sz, weight_bytes):
    """Derive (b_block, vmem_limit_bytes) from the physical VMEM size."""
    try:
        phys = int(pltpu.get_tpu_info().vmem_capacity_bytes)
    except Exception:                      # off-TPU / API fallback
        phys = 64 * 1024 * 1024            # conservative (v7x per-core VMEM)
    vmem_limit = min(int(phys * 0.75), 100 * 1024 * 1024)
    budget = int(vmem_limit * 0.85)

    def est(bb):
        f32, bf = 4, 2
        ch = min(8, N)
        e = 2 * bb * N * 2 * F * bf            # z (double-buffered input)
        e += 2 * bb * N * N * F * bf           # edge features
        e += 2 * bb * F * bf                   # graph features
        e += 2 * bb * N * N * f32              # adjacency
        e += 2 * bb * N * out_sz * f32         # out (double-buffered output)
        e += 2 * bb * N * N * out_sz * f32     # tri
        e += 2 * weight_bytes                  # fused / small weights
        e += bb * N * Wz * f32                 # zout
        e += bb * N * N * We * f32             # eout
        e += 4 * bb * N * N * mid * f32        # msgs, MLP temps, masked
        e += 4 * bb * N * N * T * f32          # A, C, acc, pre
        e += 2 * bb * ch * N * N * T * f32     # lane-tiled chunk + cube
        e += 2 * bb * N * N * out_sz * f32     # o3 / LayerNorm temps
        return int(e * 1.4)                    # headroom for spills / scratch

    cap = max(1, B // 2)                       # grid length >= 2 for dual-TC v7x
    b_block = 1
    for d in range(1, cap + 1):
        if B % d == 0 and est(d) <= budget:
            b_block = d
    return b_block, vmem_limit


def pgn_forward(node_fts, edge_fts, graph_fts, hidden, adj_matrix, params,
                *, b_block=None, seg_align=128, out_dtype=jnp.float32):
    B, N, F = node_fts.shape
    mid = params["l1_w"].shape[0]
    T = params["o3_w"].shape[0]
    out_size = params["o1_w"].shape[1]
    bf16 = jnp.bfloat16

    # fold the per-layer weights/biases into three fused, lane-aligned operands
    zw, zb, z_offs = _fuse_padded(
        [params["m1_w"], params["m2_w"], params["t1_w"], params["t2_w"],
         params["o1_w"]],
        [params["m1_b"], params["m2_b"], params["t1_b"], params["t2_b"],
         params["o1_b"]], seg_align)
    ew, eb, e_offs = _fuse_padded(
        [params["me_w"], params["te1_w"], params["te2_w"], params["te3_w"]],
        [params["me_b"], params["te1_b"], params["te2_b"], params["te3_b"]],
        seg_align)
    gw, gb, g_offs = _fuse_padded(
        [params["mg_w"], params["tg_w"]],
        [params["mg_b"], params["tg_b"]], seg_align)

    weight_args = [
        zw, zb, ew, eb, gw, gb,
        params["l1_w"].astype(bf16), params["l1_b"],
        params["l2_w"].astype(bf16), params["l2_b"],
        params["o2_w"].astype(bf16), params["o2_b"],
        params["o3_w"].astype(bf16), params["o3_b"],
        params["ln_g"], params["ln_b"],
    ]
    weight_bytes = sum(int(w.size) * w.dtype.itemsize for w in weight_args)

    auto_bb, vmem_limit = _pick_config(B, N, F, zw.shape[1], ew.shape[1],
                                       gw.shape[1], mid, T, out_size,
                                       weight_bytes)
    if b_block is None:
        b_block = auto_bb

    # glue: MXU operands in bf16; exact {0,1} adjacency mask built here so the
    # kernel never does a float equality.
    z = jnp.concatenate([node_fts, hidden], axis=-1).astype(bf16)   # [B, N, 2F]
    ef = edge_fts.reshape(B, N * N, F).astype(bf16)
    gf = graph_fts.reshape(B, 1, F).astype(bf16)
    adj = (adj_matrix == 1).astype(jnp.float32)   # torch forward: adj == 1
    # TODO(synk): adj could be shipped as int8 to quarter its DMA bytes.

    dims = dict(N=N, mid=mid, T=T, out=out_size,
                z_offs=z_offs, e_offs=e_offs, g_offs=g_offs)

    def full_spec(arr):
        nd = arr.ndim
        return pl.BlockSpec(arr.shape, lambda b, _nd=nd: (0,) * _nd)

    in_specs = [
        pl.BlockSpec((b_block, N, 2 * F), lambda b: (b, 0, 0)),
        pl.BlockSpec((b_block, N * N, F), lambda b: (b, 0, 0)),
        pl.BlockSpec((b_block, 1, F), lambda b: (b, 0, 0)),
        pl.BlockSpec((b_block, N, N), lambda b: (b, 0, 0)),
    ] + [full_spec(w) for w in weight_args]

    # lane-dense output slabs; reshaped back to (B,N,out) / (B,N,N,out) below.
    out_specs = (
        pl.BlockSpec((b_block, 1, N * out_size), lambda b: (b, 0, 0)),
        pl.BlockSpec((b_block, N, N * out_size), lambda b: (b, 0, 0)),
    )
    out_shape = (
        jax.ShapeDtypeStruct((B, 1, N * out_size), out_dtype),
        jax.ShapeDtypeStruct((B, N, N * out_size), out_dtype),
    )

    out, tri = pl.pallas_call(
        functools.partial(pgn_kernel, dims),
        grid=(B // b_block,),
        in_specs=in_specs,
        out_specs=out_specs,
        out_shape=out_shape,
        compiler_params=pltpu.CompilerParams(
            dimension_semantics=("parallel",),
            vmem_limit_bytes=vmem_limit),
    )(z, ef, gf, adj, *weight_args)

    return out.reshape(B, N, out_size), tri.reshape(B, N, N, out_size)


def make_params(key, in_size, out_size, nb_triplet_fts):
    mid = out_size
    shapes = {
        "m1_w": (2 * in_size, mid), "m1_b": (1, mid),
        "m2_w": (2 * in_size, mid), "m2_b": (1, mid),
        "me_w": (in_size, mid), "me_b": (1, mid),
        "mg_w": (in_size, mid), "mg_b": (1, mid),
        "l1_w": (mid, mid), "l1_b": (1, mid),
        "l2_w": (mid, mid), "l2_b": (1, mid),
        "t1_w": (2 * in_size, nb_triplet_fts), "t1_b": (1, nb_triplet_fts),
        "t2_w": (2 * in_size, nb_triplet_fts), "t2_b": (1, nb_triplet_fts),
        "te1_w": (in_size, nb_triplet_fts), "te1_b": (1, nb_triplet_fts),
        "te2_w": (in_size, nb_triplet_fts), "te2_b": (1, nb_triplet_fts),
        "te3_w": (in_size, nb_triplet_fts), "te3_b": (1, nb_triplet_fts),
        "tg_w": (in_size, nb_triplet_fts), "tg_b": (1, nb_triplet_fts),
        "o1_w": (2 * in_size, out_size), "o1_b": (1, out_size),
        "o2_w": (mid, out_size), "o2_b": (1, out_size),
        "o3_w": (nb_triplet_fts, out_size), "o3_b": (1, out_size),
    }
    # (t_3 / gate params exist in __init__ but are unused in forward for gated=False.)
    params = {}
    keys = jax.random.split(key, len(shapes))
    for k, (name, shp) in zip(keys, shapes.items()):
        fan_in = shp[0] if name.endswith("_w") else shp[1]
        params[name] = (jax.random.normal(k, shp, jnp.float32)
                        / jnp.sqrt(fan_in)).astype(jnp.float32)
    params["ln_g"] = jnp.ones((1, out_size), jnp.float32)
    params["ln_b"] = jnp.zeros((1, out_size), jnp.float32)
    return params


def pgn_reference(node_fts, edge_fts, graph_fts, hidden, adj_matrix, p):
    """Plain-JAX f32 reference mirroring the PyTorch forward."""
    def lin(x, w, b):
        return x @ w + b[0]

    def ln(x):
        mu = x.mean(-1, keepdims=True)
        var = ((x - mu) ** 2).mean(-1, keepdims=True)
        return (x - mu) / jnp.sqrt(var + LN_EPS) * p["ln_g"][0] + p["ln_b"][0]

    z = jnp.concatenate([node_fts, hidden], -1)
    msg_1 = lin(z, p["m1_w"], p["m1_b"])
    msg_2 = lin(z, p["m2_w"], p["m2_b"])
    msg_e = lin(edge_fts, p["me_w"], p["me_b"])
    msg_g = lin(graph_fts, p["mg_w"], p["mg_b"])
    msgs = msg_1[:, None, :, :] + msg_2[:, :, None, :] + msg_e + msg_g[:, None, None, :]
    m = jax.nn.relu(msgs)
    m = jax.nn.relu(lin(m, p["l1_w"], p["l1_b"]))
    msgs = lin(m, p["l2_w"], p["l2_b"])

    tri_1 = lin(z, p["t1_w"], p["t1_b"])
    tri_2 = lin(z, p["t2_w"], p["t2_b"])
    tri_3 = lin(z, p["t1_w"], p["t1_b"])  # same t_1 reuse as the torch reference
    te1 = lin(edge_fts, p["te1_w"], p["te1_b"])
    te2 = lin(edge_fts, p["te2_w"], p["te2_b"])
    te3 = lin(edge_fts, p["te3_w"], p["te3_b"])
    tg = lin(graph_fts, p["tg_w"], p["tg_b"])
    triplets = (tri_1[:, :, None, None, :] + tri_2[:, None, :, None, :]
                + tri_3[:, None, None, :, :] + te1[:, :, :, None, :]
                + te2[:, :, None, :, :] + te3[:, None, :, :, :]
                + tg[:, None, None, None, :])
    tri_msgs = ln(jax.nn.relu(lin(jnp.max(triplets, axis=1), p["o3_w"], p["o3_b"])))

    maxarg = jnp.where(adj_matrix[..., None] == 1, msgs, NEG_INF)
    msgs_agg = jnp.max(maxarg, axis=1)
    out = jax.nn.relu(lin(z, p["o1_w"], p["o1_b"]) + lin(msgs_agg, p["o2_w"], p["o2_b"]))
    return ln(out), tri_msgs


if __name__ == "__main__":
    B, N, F = 2, 8, 16
    OUT, T = 32, 8

    root = jax.random.PRNGKey(0)
    k_node, k_edge, k_graph, k_hid, k_adj, k_par = jax.random.split(root, 6)

    node_fts = jax.random.normal(k_node, (B, N, F), jnp.float32)
    edge_fts = jax.random.normal(k_edge, (B, N, N, F), jnp.float32)
    graph_fts = jax.random.normal(k_graph, (B, F), jnp.float32)
    hidden = jax.random.normal(k_hid, (B, N, F), jnp.float32)
    adj_matrix = jax.random.bernoulli(k_adj, 0.5, (B, N, N)).astype(jnp.float32)
    # Self-loops so every node has >= 1 incoming edge (avoids the numerically
    # fragile all -1e9 aggregation path in this random test input; kernel
    # semantics are unchanged).
    adj_matrix = jnp.maximum(adj_matrix, jnp.eye(N, dtype=jnp.float32)[None])

    params = make_params(k_par, F, OUT, T)

    out, tri_msgs = jax.jit(pgn_forward)(node_fts, edge_fts, graph_fts,
                                         hidden, adj_matrix, params)
    jax.block_until_ready((out, tri_msgs))

    out_ref, tri_ref = pgn_reference(node_fts, edge_fts, graph_fts,
                                     hidden, adj_matrix, params)
    assert out.shape == (B, N, OUT) and tri_msgs.shape == (B, N, N, OUT)
    # bf16 MXU operands with f32 accumulation vs. a pure-f32 reference.
    assert jnp.allclose(out, out_ref, atol=1e-1, rtol=1e-1)
    assert jnp.allclose(tri_msgs, tri_ref, atol=1e-1, rtol=1e-1)

    print("KERNEL_OK")
</pallas_src>

<mosaic_0001>
module attributes {stable_mosaic.version = 11 : i64} {
  func.func @pgn_kernel(%arg0: i32, %arg1: memref<1x8x32xbf16, #tpu.memory_space<vmem>>, %arg2: memref<1x64x16xbf16, #tpu.memory_space<vmem>>, %arg3: memref<1x1x16xbf16, #tpu.memory_space<vmem>>, %arg4: memref<1x8x8xf32, #tpu.memory_space<vmem>>, %arg5: memref<32x640xbf16, #tpu.memory_space<vmem>>, %arg6: memref<1x640xf32, #tpu.memory_space<vmem>>, %arg7: memref<16x512xbf16, #tpu.memory_space<vmem>>, %arg8: memref<1x512xf32, #tpu.memory_space<vmem>>, %arg9: memref<16x256xbf16, #tpu.memory_space<vmem>>, %arg10: memref<1x256xf32, #tpu.memory_space<vmem>>, %arg11: memref<32x32xbf16, #tpu.memory_space<vmem>>, %arg12: memref<1x32xf32, #tpu.memory_space<vmem>>, %arg13: memref<32x32xbf16, #tpu.memory_space<vmem>>, %arg14: memref<1x32xf32, #tpu.memory_space<vmem>>, %arg15: memref<32x32xbf16, #tpu.memory_space<vmem>>, %arg16: memref<1x32xf32, #tpu.memory_space<vmem>>, %arg17: memref<8x32xbf16, #tpu.memory_space<vmem>>, %arg18: memref<1x32xf32, #tpu.memory_space<vmem>>, %arg19: memref<1x32xf32, #tpu.memory_space<vmem>>, %arg20: memref<1x32xf32, #tpu.memory_space<vmem>>, %arg21: memref<1x1x256xf32, #tpu.memory_space<vmem>>, %arg22: memref<1x8x256xf32, #tpu.memory_space<vmem>>) attributes {dimension_semantics = [#tpu.dimension_semantics<parallel>], iteration_bounds = array<i64: 2>, scalar_prefetch = 0 : i64, scratch_operands = 0 : i64, tpu.core_type = #tpu.core_type<tc>, window_params = [{transform_indices = @transform_0, window_bounds = array<i64: 1, 8, 32>}, {transform_indices = @transform_1, window_bounds = array<i64: 1, 64, 16>}, {transform_indices = @transform_2, window_bounds = array<i64: 1, 1, 16>}, {transform_indices = @transform_3, window_bounds = array<i64: 1, 8, 8>}, {pipeline_mode = #tpu.pipeline_mode<synchronous>, transform_indices = @transform_4, window_bounds = array<i64: 32, 640>}, {pipeline_mode = #tpu.pipeline_mode<synchronous>, transform_indices = @transform_5, window_bounds = array<i64: 1, 640>}, {pipeline_mode = #tpu.pipeline_mode<synchronous>, transform_indices = @transform_6, window_bounds = array<i64: 16, 512>}, {pipeline_mode = #tpu.pipeline_mode<synchronous>, transform_indices = @transform_7, window_bounds = array<i64: 1, 512>}, {pipeline_mode = #tpu.pipeline_mode<synchronous>, transform_indices = @transform_8, window_bounds = array<i64: 16, 256>}, {pipeline_mode = #tpu.pipeline_mode<synchronous>, transform_indices = @transform_9, window_bounds = array<i64: 1, 256>}, {pipeline_mode = #tpu.pipeline_mode<synchronous>, transform_indices = @transform_10, window_bounds = array<i64: 32, 32>}, {pipeline_mode = #tpu.pipeline_mode<synchronous>, transform_indices = @transform_11, window_bounds = array<i64: 1, 32>}, {pipeline_mode = #tpu.pipeline_mode<synchronous>, transform_indices = @transform_12, window_bounds = array<i64: 32, 32>}, {pipeline_mode = #tpu.pipeline_mode<synchronous>, transform_indices = @transform_13, window_bounds = array<i64: 1, 32>}, {pipeline_mode = #tpu.pipeline_mode<synchronous>, transform_indices = @transform_14, window_bounds = array<i64: 32, 32>}, {pipeline_mode = #tpu.pipeline_mode<synchronous>, transform_indices = @transform_15, window_bounds = array<i64: 1, 32>}, {pipeline_mode = #tpu.pipeline_mode<synchronous>, transform_indices = @transform_16, window_bounds = array<i64: 8, 32>}, {pipeline_mode = #tpu.pipeline_mode<synchronous>, transform_indices = @transform_17, window_bounds = array<i64: 1, 32>}, {pipeline_mode = #tpu.pipeline_mode<synchronous>, transform_indices = @transform_18, window_bounds = array<i64: 1, 32>}, {pipeline_mode = #tpu.pipeline_mode<synchronous>, transform_indices = @transform_19, window_bounds = array<i64: 1, 32>}, {transform_indices = @transform_20, window_bounds = array<i64: 1, 1, 256>}, {transform_indices = @transform_21, window_bounds = array<i64: 1, 8, 256>}]} {
    %c0 = arith.constant 0 : index
    %c0_0 = arith.constant 0 : index
    %c0_1 = arith.constant 0 : index
    %0 = vector.load %arg1[%c0, %c0_0, %c0_1] : memref<1x8x32xbf16, #tpu.memory_space<vmem>>, vector<1x8x32xbf16>
    %1 = vector.shape_cast %0 : vector<1x8x32xbf16> to vector<8x32xbf16>
    %c0_2 = arith.constant 0 : index
    %c0_3 = arith.constant 0 : index
    %2 = vector.load %arg5[%c0_2, %c0_3] : memref<32x640xbf16, #tpu.memory_space<vmem>>, vector<32x640xbf16>
    %cst = arith.constant dense<0.000000e+00> : vector<8x640xf32>
    %3 = tpu.matmul %1, %2, %cst {dimension_numbers = #tpu.dot_dimension_numbers<[1], [0], [0], [1], [0, 0, 1, 1], [], []>} : vector<8x32xbf16>, vector<32x640xbf16>, vector<8x640xf32> -> vector<8x640xf32>
    %c0_4 = arith.constant 0 : index
    %c0_5 = arith.constant 0 : index
    %4 = vector.load %arg6[%c0_4, %c0_5] : memref<1x640xf32, #tpu.memory_space<vmem>>, vector<1x640xf32>
    %5 = vector.broadcast %4 : vector<1x640xf32> to vector<8x640xf32>
    %6 = arith.addf %3, %5 : vector<8x640xf32>
    %7 = vector.shape_cast %6 : vector<8x640xf32> to vector<1x8x640xf32>
    %8 = vector.extract_strided_slice %7 {offsets = [0, 0, 0], sizes = [1, 8, 32], strides = [1, 1, 1]} : vector<1x8x640xf32> to vector<1x8x32xf32>
    %9 = vector.extract_strided_slice %7 {offsets = [0, 0, 128], sizes = [1, 8, 32], strides = [1, 1, 1]} : vector<1x8x640xf32> to vector<1x8x32xf32>
    %10 = vector.extract_strided_slice %7 {offsets = [0, 0, 256], sizes = [1, 8, 8], strides = [1, 1, 1]} : vector<1x8x640xf32> to vector<1x8x8xf32>
    %11 = vector.extract_strided_slice %7 {offsets = [0, 0, 384], sizes = [1, 8, 8], strides = [1, 1, 1]} : vector<1x8x640xf32> to vector<1x8x8xf32>
    %12 = vector.extract_strided_slice %7 {offsets = [0, 0, 512], sizes = [1, 8, 32], strides = [1, 1, 1]} : vector<1x8x640xf32> to vector<1x8x32xf32>
    %c0_6 = arith.constant 0 : index
    %c0_7 = arith.constant 0 : index
    %c0_8 = arith.constant 0 : index
    %13 = vector.load %arg2[%c0_6, %c0_7, %c0_8] : memref<1x64x16xbf16, #tpu.memory_space<vmem>>, vector<1x64x16xbf16>
    %14 = vector.shape_cast %13 : vector<1x64x16xbf16> to vector<64x16xbf16>
    %c0_9 = arith.constant 0 : index
    %c0_10 = arith.constant 0 : index
    %15 = vector.load %arg7[%c0_9, %c0_10] : memref<16x512xbf16, #tpu.memory_space<vmem>>, vector<16x512xbf16>
    %cst_11 = arith.constant dense<0.000000e+00> : vector<64x512xf32>
    %16 = tpu.matmul %14, %15, %cst_11 {dimension_numbers = #tpu.dot_dimension_numbers<[1], [0], [0], [1], [0, 0, 1, 1], [], []>} : vector<64x16xbf16>, vector<16x512xbf16>, vector<64x512xf32> -> vector<64x512xf32>
    %c0_12 = arith.constant 0 : index
    %c0_13 = arith.constant 0 : index
    %17 = vector.load %arg8[%c0_12, %c0_13] : memref<1x512xf32, #tpu.memory_space<vmem>>, vector<1x512xf32>
    %18 = vector.broadcast %17 : vector<1x512xf32> to vector<64x512xf32>
    %19 = arith.addf %16, %18 : vector<64x512xf32>
    %20 = vector.shape_cast %19 : vector<64x512xf32> to vector<1x8x8x512xf32>
    %21 = vector.extract_strided_slice %20 {offsets = [0, 0, 0, 0], sizes = [1, 8, 8, 32], strides = [1, 1, 1, 1]} : vector<1x8x8x512xf32> to vector<1x8x8x32xf32>
    %22 = vector.extract_strided_slice %20 {offsets = [0, 0, 0, 128], sizes = [1, 8, 8, 8], strides = [1, 1, 1, 1]} : vector<1x8x8x512xf32> to vector<1x8x8x8xf32>
    %23 = vector.extract_strided_slice %20 {offsets = [0, 0, 0, 256], sizes = [1, 8, 8, 8], strides = [1, 1, 1, 1]} : vector<1x8x8x512xf32> to vector<1x8x8x8xf32>
    %24 = vector.extract_strided_slice %20 {offsets = [0, 0, 0, 384], sizes = [1, 8, 8, 8], strides = [1, 1, 1, 1]} : vector<1x8x8x512xf32> to vector<1x8x8x8xf32>
    %c0_14 = arith.constant 0 : index
    %c0_15 = arith.constant 0 : index
    %c0_16 = arith.constant 0 : index
    %25 = vector.load %arg3[%c0_14, %c0_15, %c0_16] : memref<1x1x16xbf16, #tpu.memory_space<vmem>>, vector<1x1x16xbf16>
    %26 = vector.shape_cast %25 : vector<1x1x16xbf16> to vector<1x16xbf16>
    %c0_17 = arith.constant 0 : index
    %c0_18 = arith.constant 0 : index
    %27 = vector.load %arg9[%c0_17, %c0_18] : memref<16x256xbf16, #tpu.memory_space<vmem>>, vector<16x256xbf16>
    %cst_19 = arith.constant dense<0.000000e+00> : vector<1x256xf32>
    %28 = tpu.matmul %26, %27, %cst_19 {dimension_numbers = #tpu.dot_dimension_numbers<[1], [0], [0], [1], [0, 0, 1, 1], [], []>} : vector<1x16xbf16>, vector<16x256xbf16>, vector<1x256xf32> -> vector<1x256xf32>
    %c0_20 = arith.constant 0 : index
    %c0_21 = arith.constant 0 : index
    %29 = vector.load %arg10[%c0_20, %c0_21] : memref<1x256xf32, #tpu.memory_space<vmem>>, vector<1x256xf32>
    %30 = arith.addf %28, %29 : vector<1x256xf32>
    %31 = vector.extract_strided_slice %30 {offsets = [0, 0], sizes = [1, 32], strides = [1, 1]} : vector<1x256xf32> to vector<1x32xf32>
    %32 = vector.extract_strided_slice %30 {offsets = [0, 128], sizes = [1, 8], strides = [1, 1]} : vector<1x256xf32> to vector<1x8xf32>
    %33 = vector.shape_cast %8 : vector<1x8x32xf32> to vector<1x1x8x32xf32>
    %34 = vector.shape_cast %9 : vector<1x8x32xf32> to vector<1x8x1x32xf32>
    %35 = vector.broadcast %33 : vector<1x1x8x32xf32> to vector<1x8x8x32xf32>
    %36 = vector.broadcast %34 : vector<1x8x1x32xf32> to vector<1x8x8x32xf32>
    %37 = arith.addf %35, %36 : vector<1x8x8x32xf32>
    %38 = arith.addf %37, %21 : vector<1x8x8x32xf32>
    %39 = vector.shape_cast %31 : vector<1x32xf32> to vector<1x1x1x32xf32>
    %40 = vector.broadcast %39 : vector<1x1x1x32xf32> to vector<1x8x8x32xf32>
    %41 = arith.addf %38, %40 : vector<1x8x8x32xf32>
    %cst_22 = arith.constant 0.000000e+00 : f32
    %42 = vector.broadcast %cst_22 : f32 to vector<1x8x8x32xf32>
    %43 = arith.maximumf %41, %42 : vector<1x8x8x32xf32>
    %44 = vector.shape_cast %43 : vector<1x8x8x32xf32> to vector<64x32xf32>
    %45 = arith.truncf %44 : vector<64x32xf32> to vector<64x32xbf16>
    %c0_23 = arith.constant 0 : index
    %c0_24 = arith.constant 0 : index
    %46 = vector.load %arg11[%c0_23, %c0_24] : memref<32x32xbf16, #tpu.memory_space<vmem>>, vector<32x32xbf16>
    %cst_25 = arith.constant dense<0.000000e+00> : vector<64x32xf32>
    %47 = tpu.matmul %45, %46, %cst_25 {dimension_numbers = #tpu.dot_dimension_numbers<[1], [0], [0], [1], [0, 0, 1, 1], [], []>} : vector<64x32xbf16>, vector<32x32xbf16>, vector<64x32xf32> -> vector<64x32xf32>
    %c0_26 = arith.constant 0 : index
    %c0_27 = arith.constant 0 : index
    %48 = vector.load %arg12[%c0_26, %c0_27] : memref<1x32xf32, #tpu.memory_space<vmem>>, vector<1x32xf32>
    %49 = vector.broadcast %48 : vector<1x32xf32> to vector<64x32xf32>
    %50 = arith.addf %47, %49 : vector<64x32xf32>
    %cst_28 = arith.constant 0.000000e+00 : f32
    %51 = vector.broadcast %cst_28 : f32 to vector<64x32xf32>
    %52 = arith.maximumf %50, %51 : vector<64x32xf32>
    %53 = arith.truncf %52 : vector<64x32xf32> to vector<64x32xbf16>
    %c0_29 = arith.constant 0 : index
    %c0_30 = arith.constant 0 : index
    %54 = vector.load %arg13[%c0_29, %c0_30] : memref<32x32xbf16, #tpu.memory_space<vmem>>, vector<32x32xbf16>
    %cst_31 = arith.constant dense<0.000000e+00> : vector<64x32xf32>
    %55 = tpu.matmul %53, %54, %cst_31 {dimension_numbers = #tpu.dot_dimension_numbers<[1], [0], [0], [1], [0, 0, 1, 1], [], []>} : vector<64x32xbf16>, vector<32x32xbf16>, vector<64x32xf32> -> vector<64x32xf32>
    %c0_32 = arith.constant 0 : index
    %c0_33 = arith.constant 0 : index
    %56 = vector.load %arg14[%c0_32, %c0_33] : memref<1x32xf32, #tpu.memory_space<vmem>>, vector<1x32xf32>
    %57 = vector.broadcast %56 : vector<1x32xf32> to vector<64x32xf32>
    %58 = arith.addf %55, %57 : vector<64x32xf32>
    %59 = vector.shape_cast %58 : vector<64x32xf32> to vector<1x8x8x32xf32>
    %c0_34 = arith.constant 0 : index
    %c0_35 = arith.constant 0 : index
    %c0_36 = arith.constant 0 : index
    %60 = vector.load %arg4[%c0_34, %c0_35, %c0_36] : memref<1x8x8xf32, #tpu.memory_space<vmem>>, vector<1x8x8xf32>
    %61 = vector.shape_cast %60 : vector<1x8x8xf32> to vector<1x8x8x1xf32>
    %cst_37 = arith.constant 5.000000e-01 : f32
    %62 = vector.broadcast %cst_37 : f32 to vector<1x8x8x1xf32>
    %63 = arith.cmpf ogt, %61, %62 : vector<1x8x8x1xf32>
    %cst_38 = arith.constant -1.000000e+09 : f32
    %64 = vector.shape_cast %63 : vector<1x8x8x1xi1> to vector<1x8x8x1xi1>
    %65 = vector.broadcast %64 : vector<1x8x8x1xi1> to vector<1x8x8x32xi1>
    %66 = vector.broadcast %cst_38 : f32 to vector<1x8x8x32xf32>
    %67 = arith.select %65, %59, %66 : vector<1x8x8x32xi1>, vector<1x8x8x32xf32>
    %cst_39 = arith.constant dense<0xFF800000> : vector<1x8x32xf32>
    %68 = vector.multi_reduction <maximumf>, %67, %cst_39 [1] : vector<1x8x8x32xf32> to vector<1x8x32xf32>
    %69 = vector.shape_cast %68 : vector<1x8x32xf32> to vector<8x32xf32>
    %70 = arith.truncf %69 : vector<8x32xf32> to vector<8x32xbf16>
    %c0_40 = arith.constant 0 : index
    %c0_41 = arith.constant 0 : index
    %71 = vector.load %arg15[%c0_40, %c0_41] : memref<32x32xbf16, #tpu.memory_space<vmem>>, vector<32x32xbf16>
    %cst_42 = arith.constant dense<0.000000e+00> : vector<8x32xf32>
    %72 = tpu.matmul %70, %71, %cst_42 {dimension_numbers = #tpu.dot_dimension_numbers<[1], [0], [0], [1], [0, 0, 1, 1], [], []>} : vector<8x32xbf16>, vector<32x32xbf16>, vector<8x32xf32> -> vector<8x32xf32>
    %c0_43 = arith.constant 0 : index
    %c0_44 = arith.constant 0 : index
    %73 = vector.load %arg16[%c0_43, %c0_44] : memref<1x32xf32, #tpu.memory_space<vmem>>, vector<1x32xf32>
    %74 = vector.broadcast %73 : vector<1x32xf32> to vector<8x32xf32>
    %75 = arith.addf %72, %74 : vector<8x32xf32>
    %76 = vector.shape_cast %12 : vector<1x8x32xf32> to vector<8x32xf32>
    %77 = arith.addf %76, %75 : vector<8x32xf32>
    %cst_45 = arith.constant 0.000000e+00 : f32
    %78 = vector.broadcast %cst_45 : f32 to vector<8x32xf32>
    %79 = arith.maximumf %77, %78 : vector<8x32xf32>
    %cst_46 = arith.constant dense<0.000000e+00> : vector<8xf32>
    %80 = vector.multi_reduction <add>, %79, %cst_46 [1] : vector<8x32xf32> to vector<8xf32>
    %81 = vector.shape_cast %80 : vector<8xf32> to vector<8x1xf32>
    %cst_47 = arith.constant 3.200000e+01 : f32
    %82 = vector.broadcast %cst_47 : f32 to vector<8x1xf32>
    %83 = arith.divf %81, %82 : vector<8x1xf32>
    %84 = vector.broadcast %83 : vector<8x1xf32> to vector<8x32xf32>
    %85 = arith.subf %79, %84 : vector<8x32xf32>
    %86 = arith.mulf %85, %85 : vector<8x32xf32>
    %cst_48 = arith.constant dense<0.000000e+00> : vector<8xf32>
    %87 = vector.multi_reduction <add>, %86, %cst_48 [1] : vector<8x32xf32> to vector<8xf32>
    %88 = vector.shape_cast %87 : vector<8xf32> to vector<8x1xf32>
    %cst_49 = arith.constant 3.200000e+01 : f32
    %89 = vector.broadcast %cst_49 : f32 to vector<8x1xf32>
    %90 = arith.divf %88, %89 : vector<8x1xf32>
    %91 = vector.broadcast %83 : vector<8x1xf32> to vector<8x32xf32>
    %92 = arith.subf %79, %91 : vector<8x32xf32>
    %cst_50 = arith.constant 9.99999974E-6 : f32
    %93 = vector.broadcast %cst_50 : f32 to vector<8x1xf32>
    %94 = arith.addf %90, %93 : vector<8x1xf32>
    %95 = math.rsqrt %94 : vector<8x1xf32>
    %96 = vector.broadcast %95 : vector<8x1xf32> to vector<8x32xf32>
    %97 = arith.mulf %92, %96 : vector<8x32xf32>
    %c0_51 = arith.constant 0 : index
    %c0_52 = arith.constant 0 : index
    %98 = vector.load %arg19[%c0_51, %c0_52] : memref<1x32xf32, #tpu.memory_space<vmem>>, vector<1x32xf32>
    %99 = vector.broadcast %98 : vector<1x32xf32> to vector<8x32xf32>
    %100 = arith.mulf %97, %99 : vector<8x32xf32>
    %c0_53 = arith.constant 0 : index
    %c0_54 = arith.constant 0 : index
    %101 = vector.load %arg20[%c0_53, %c0_54] : memref<1x32xf32, #tpu.memory_space<vmem>>, vector<1x32xf32>
    %102 = vector.broadcast %101 : vector<1x32xf32> to vector<8x32xf32>
    %103 = arith.addf %100, %102 : vector<8x32xf32>
    %104 = vector.shape_cast %103 : vector<8x32xf32> to vector<1x8x32xf32>
    %105 = vector.extract_strided_slice %104 {offsets = [0, 0, 0], sizes = [1, 1, 32], strides = [1, 1, 1]} : vector<1x8x32xf32> to vector<1x1x32xf32>
    %106 = vector.extract_strided_slice %104 {offsets = [0, 1, 0], sizes = [1, 1, 32], strides = [1, 1, 1]} : vector<1x8x32xf32> to vector<1x1x32xf32>
    %107 = vector.extract_strided_slice %104 {offsets = [0, 2, 0], sizes = [1, 1, 32], strides = [1, 1, 1]} : vector<1x8x32xf32> to vector<1x1x32xf32>
    %108 = vector.extract_strided_slice %104 {offsets = [0, 3, 0], sizes = [1, 1, 32], strides = [1, 1, 1]} : vector<1x8x32xf32> to vector<1x1x32xf32>
    %109 = vector.extract_strided_slice %104 {offsets = [0, 4, 0], sizes = [1, 1, 32], strides = [1, 1, 1]} : vector<1x8x32xf32> to vector<1x1x32xf32>
    %110 = vector.extract_strided_slice %104 {offsets = [0, 5, 0], sizes = [1, 1, 32], strides = [1, 1, 1]} : vector<1x8x32xf32> to vector<1x1x32xf32>
    %111 = vector.extract_strided_slice %104 {offsets = [0, 6, 0], sizes = [1, 1, 32], strides = [1, 1, 1]} : vector<1x8x32xf32> to vector<1x1x32xf32>
    %112 = vector.extract_strided_slice %104 {offsets = [0, 7, 0], sizes = [1, 1, 32], strides = [1, 1, 1]} : vector<1x8x32xf32> to vector<1x1x32xf32>
    %113 = tpu.concatenate %105, %106, %107, %108, %109, %110, %111, %112 in 2 : vector<1x1x32xf32>, vector<1x1x32xf32>, vector<1x1x32xf32>, vector<1x1x32xf32>, vector<1x1x32xf32>, vector<1x1x32xf32>, vector<1x1x32xf32>, vector<1x1x32xf32> -> vector<1x1x256xf32>
    %c0_55 = arith.constant 0 : index
    %c0_56 = arith.constant 0 : index
    %c0_57 = arith.constant 0 : index
    %114 = vector.load %arg21[%c0_55, %c0_56, %c0_57] : memref<1x1x256xf32, #tpu.memory_space<vmem>>, vector<1x1x256xf32>
    tpu.vector_store %arg21[%c0_55, %c0_56, %c0_57], %113 {strides = array<i32>} : memref<1x1x256xf32, #tpu.memory_space<vmem>>, vector<1x1x256xf32>,
    %115 = vector.shape_cast %10 : vector<1x8x8xf32> to vector<1x8x1x8xf32>
    %116 = vector.broadcast %115 : vector<1x8x1x8xf32> to vector<1x8x8x8xf32>
    %117 = arith.addf %116, %22 : vector<1x8x8x8xf32>
    %118 = vector.extract_strided_slice %23 {offsets = [0, 0, 0, 0], sizes = [1, 8, 1, 8], strides = [1, 1, 1, 1]} : vector<1x8x8x8xf32> to vector<1x8x1x8xf32>
    %119 = vector.extract_strided_slice %23 {offsets = [0, 0, 1, 0], sizes = [1, 8, 1, 8], strides = [1, 1, 1, 1]} : vector<1x8x8x8xf32> to vector<1x8x1x8xf32>
    %120 = vector.extract_strided_slice %23 {offsets = [0, 0, 2, 0], sizes = [1, 8, 1, 8], strides = [1, 1, 1, 1]} : vector<1x8x8x8xf32> to vector<1x8x1x8xf32>
    %121 = vector.extract_strided_slice %23 {offsets = [0, 0, 3, 0], sizes = [1, 8, 1, 8], strides = [1, 1, 1, 1]} : vector<1x8x8x8xf32> to vector<1x8x1x8xf32>
    %122 = vector.extract_strided_slice %23 {offsets = [0, 0, 4, 0], sizes = [1, 8, 1, 8], strides = [1, 1, 1, 1]} : vector<1x8x8x8xf32> to vector<1x8x1x8xf32>
    %123 = vector.extract_strided_slice %23 {offsets = [0, 0, 5, 0], sizes = [1, 8, 1, 8], strides = [1, 1, 1, 1]} : vector<1x8x8x8xf32> to vector<1x8x1x8xf32>
    %124 = vector.extract_strided_slice %23 {offsets = [0, 0, 6, 0], sizes = [1, 8, 1, 8], strides = [1, 1, 1, 1]} : vector<1x8x8x8xf32> to vector<1x8x1x8xf32>
    %125 = vector.extract_strided_slice %23 {offsets = [0, 0, 7, 0], sizes = [1, 8, 1, 8], strides = [1, 1, 1, 1]} : vector<1x8x8x8xf32> to vector<1x8x1x8xf32>
    %126 = tpu.concatenate %118, %119, %120, %121, %122, %123, %124, %125 in 3 : vector<1x8x1x8xf32>, vector<1x8x1x8xf32>, vector<1x8x1x8xf32>, vector<1x8x1x8xf32>, vector<1x8x1x8xf32>, vector<1x8x1x8xf32>, vector<1x8x1x8xf32>, vector<1x8x1x8xf32> -> vector<1x8x1x64xf32>
    %127 = vector.shape_cast %126 : vector<1x8x1x64xf32> to vector<1x8x64xf32>
    %128 = tpu.concatenate %117, %117, %117, %117, %117, %117, %117, %117 in 3 : vector<1x8x8x8xf32>, vector<1x8x8x8xf32>, vector<1x8x8x8xf32>, vector<1x8x8x8xf32>, vector<1x8x8x8xf32>, vector<1x8x8x8xf32>, vector<1x8x8x8xf32>, vector<1x8x8x8xf32> -> vector<1x8x8x64xf32>
    %129 = vector.shape_cast %127 : vector<1x8x64xf32> to vector<1x8x1x64xf32>
    %130 = vector.broadcast %129 : vector<1x8x1x64xf32> to vector<1x8x8x64xf32>
    %131 = arith.addf %128, %130 : vector<1x8x8x64xf32>
    %cst_58 = arith.constant dense<0xFF800000> : vector<1x8x64xf32>
    %132 = vector.multi_reduction <maximumf>, %131, %cst_58 [1] : vector<1x8x8x64xf32> to vector<1x8x64xf32>
    %133 = tpu.concatenate %11, %11, %11, %11, %11, %11, %11, %11 in 2 : vector<1x8x8xf32>, vector<1x8x8xf32>, vector<1x8x8xf32>, vector<1x8x8xf32>, vector<1x8x8xf32>, vector<1x8x8xf32>, vector<1x8x8xf32>, vector<1x8x8xf32> -> vector<1x8x64xf32>
    %134 = arith.addf %132, %133 : vector<1x8x64xf32>
    %135 = vector.extract_strided_slice %10 {offsets = [0, 0, 0], sizes = [1, 1, 8], strides = [1, 1, 1]} : vector<1x8x8xf32> to vector<1x1x8xf32>
    %136 = vector.extract_strided_slice %10 {offsets = [0, 1, 0], sizes = [1, 1, 8], strides = [1, 1, 1]} : vector<1x8x8xf32> to vector<1x1x8xf32>
    %137 = vector.extract_strided_slice %10 {offsets = [0, 2, 0], sizes = [1, 1, 8], strides = [1, 1, 1]} : vector<1x8x8xf32> to vector<1x1x8xf32>
    %138 = vector.extract_strided_slice %10 {offsets = [0, 3, 0], sizes = [1, 1, 8], strides = [1, 1, 1]} : vector<1x8x8xf32> to vector<1x1x8xf32>
    %139 = vector.extract_strided_slice %10 {offsets = [0, 4, 0], sizes = [1, 1, 8], strides = [1, 1, 1]} : vector<1x8x8xf32> to vector<1x1x8xf32>
    %140 = vector.extract_strided_slice %10 {offsets = [0, 5, 0], sizes = [1, 1, 8], strides = [1, 1, 1]} : vector<1x8x8xf32> to vector<1x1x8xf32>
    %141 = vector.extract_strided_slice %10 {offsets = [0, 6, 0], sizes = [1, 1, 8], strides = [1, 1, 1]} : vector<1x8x8xf32> to vector<1x1x8xf32>
    %142 = vector.extract_strided_slice %10 {offsets = [0, 7, 0], sizes = [1, 1, 8], strides = [1, 1, 1]} : vector<1x8x8xf32> to vector<1x1x8xf32>
    %143 = tpu.concatenate %135, %136, %137, %138, %139, %140, %141, %142 in 2 : vector<1x1x8xf32>, vector<1x1x8xf32>, vector<1x1x8xf32>, vector<1x1x8xf32>, vector<1x1x8xf32>, vector<1x1x8xf32>, vector<1x1x8xf32>, vector<1x1x8xf32> -> vector<1x1x64xf32>
    %144 = vector.shape_cast %143 : vector<1x1x64xf32> to vector<1x64xf32>
    %145 = vector.shape_cast %144 : vector<1x64xf32> to vector<1x1x64xf32>
    %146 = vector.broadcast %145 : vector<1x1x64xf32> to vector<1x8x64xf32>
    %147 = arith.addf %134, %146 : vector<1x8x64xf32>
    %148 = vector.extract_strided_slice %24 {offsets = [0, 0, 0, 0], sizes = [1, 8, 1, 8], strides = [1, 1, 1, 1]} : vector<1x8x8x8xf32> to vector<1x8x1x8xf32>
    %149 = vector.extract_strided_slice %24 {offsets = [0, 0, 1, 0], sizes = [1, 8, 1, 8], strides = [1, 1, 1, 1]} : vector<1x8x8x8xf32> to vector<1x8x1x8xf32>
    %150 = vector.extract_strided_slice %24 {offsets = [0, 0, 2, 0], sizes = [1, 8, 1, 8], strides = [1, 1, 1, 1]} : vector<1x8x8x8xf32> to vector<1x8x1x8xf32>
    %151 = vector.extract_strided_slice %24 {offsets = [0, 0, 3, 0], sizes = [1, 8, 1, 8], strides = [1, 1, 1, 1]} : vector<1x8x8x8xf32> to vector<1x8x1x8xf32>
    %152 = vector.extract_strided_slice %24 {offsets = [0, 0, 4, 0], sizes = [1, 8, 1, 8], strides = [1, 1, 1, 1]} : vector<1x8x8x8xf32> to vector<1x8x1x8xf32>
    %153 = vector.extract_strided_slice %24 {offsets = [0, 0, 5, 0], sizes = [1, 8, 1, 8], strides = [1, 1, 1, 1]} : vector<1x8x8x8xf32> to vector<1x8x1x8xf32>
    %154 = vector.extract_strided_slice %24 {offsets = [0, 0, 6, 0], sizes = [1, 8, 1, 8], strides = [1, 1, 1, 1]} : vector<1x8x8x8xf32> to vector<1x8x1x8xf32>
    %155 = vector.extract_strided_slice %24 {offsets = [0, 0, 7, 0], sizes = [1, 8, 1, 8], strides = [1, 1, 1, 1]} : vector<1x8x8x8xf32> to vector<1x8x1x8xf32>
    %156 = tpu.concatenate %148, %149, %150, %151, %152, %153, %154, %155 in 3 : vector<1x8x1x8xf32>, vector<1x8x1x8xf32>, vector<1x8x1x8xf32>, vector<1x8x1x8xf32>, vector<1x8x1x8xf32>, vector<1x8x1x8xf32>, vector<1x8x1x8xf32>, vector<1x8x1x8xf32> -> vector<1x8x1x64xf32>
    %157 = vector.shape_cast %156 : vector<1x8x1x64xf32> to vector<1x8x64xf32>
    %158 = arith.addf %147, %157 : vector<1x8x64xf32>
    %159 = tpu.concatenate %32, %32, %32, %32, %32, %32, %32, %32 in 1 : vector<1x8xf32>, vector<1x8xf32>, vector<1x8xf32>, vector<1x8xf32>, vector<1x8xf32>, vector<1x8xf32>, vector<1x8xf32>, vector<1x8xf32> -> vector<1x64xf32>
    %160 = vector.shape_cast %159 : vector<1x64xf32> to vector<1x1x64xf32>
    %161 = vector.broadcast %160 : vector<1x1x64xf32> to vector<1x8x64xf32>
    %162 = arith.addf %158, %161 : vector<1x8x64xf32>
    %163 = vector.extract_strided_slice %162 {offsets = [0, 0, 0], sizes = [1, 8, 8], strides = [1, 1, 1]} : vector<1x8x64xf32> to vector<1x8x8xf32>
    %164 = vector.shape_cast %163 : vector<1x8x8xf32> to vector<8x8xf32>
    %165 = arith.truncf %164 : vector<8x8xf32> to vector<8x8xbf16>
    %c0_59 = arith.constant 0 : index
    %c0_60 = arith.constant 0 : index
    %166 = vector.load %arg17[%c0_59, %c0_60] : memref<8x32xbf16, #tpu.memory_space<vmem>>, vector<8x32xbf16>
    %cst_61 = arith.constant dense<0.000000e+00> : vector<8x32xf32>
    %167 = tpu.matmul %165, %166, %cst_61 {dimension_numbers = #tpu.dot_dimension_numbers<[1], [0], [0], [1], [0, 0, 1, 1], [], []>} : vector<8x8xbf16>, vector<8x32xbf16>, vector<8x32xf32> -> vector<8x32xf32>
    %c0_62 = arith.constant 0 : index
    %c0_63 = arith.constant 0 : index
    %168 = vector.load %arg18[%c0_62, %c0_63] : memref<1x32xf32, #tpu.memory_space<vmem>>, vector<1x32xf32>
    %169 = vector.broadcast %168 : vector<1x32xf32> to vector<8x32xf32>
    %170 = arith.addf %167, %169 : vector<8x32xf32>
    %cst_64 = arith.constant 0.000000e+00 : f32
    %171 = vector.broadcast %cst_64 : f32 to vector<8x32xf32>
    %172 = arith.maximumf %170, %171 : vector<8x32xf32>
    %cst_65 = arith.constant dense<0.000000e+00> : vector<8xf32>
    %173 = vector.multi_reduction <add>, %172, %cst_65 [1] : vector<8x32xf32> to vector<8xf32>
    %174 = vector.shape_cast %173 : vector<8xf32> to vector<8x1xf32>
    %cst_66 = arith.constant 3.200000e+01 : f32
    %175 = vector.broadcast %cst_66 : f32 to vector<8x1xf32>
    %176 = arith.divf %174, %175 : vector<8x1xf32>
    %177 = vector.broadcast %176 : vector<8x1xf32> to vector<8x32xf32>
    %178 = arith.subf %172, %177 : vector<8x32xf32>
    %179 = arith.mulf %178, %178 : vector<8x32xf32>
    %cst_67 = arith.constant dense<0.000000e+00> : vector<8xf32>
    %180 = vector.multi_reduction <add>, %179, %cst_67 [1] : vector<8x32xf32> to vector<8xf32>
    %181 = vector.shape_cast %180 : vector<8xf32> to vector<8x1xf32>
    %cst_68 = arith.constant 3.200000e+01 : f32
    %182 = vector.broadcast %cst_68 : f32 to vector<8x1xf32>
    %183 = arith.divf %181, %182 : vector<8x1xf32>
    %184 = vector.broadcast %176 : vector<8x1xf32> to vector<8x32xf32>
    %185 = arith.subf %172, %184 : vector<8x32xf32>
    %cst_69 = arith.constant 9.99999974E-6 : f32
    %186 = vector.broadcast %cst_69 : f32 to vector<8x1xf32>
    %187 = arith.addf %183, %186 : vector<8x1xf32>
    %188 = math.rsqrt %187 : vector<8x1xf32>
    %189 = vector.broadcast %188 : vector<8x1xf32> to vector<8x32xf32>
    %190 = arith.mulf %185, %189 : vector<8x32xf32>
    %c0_70 = arith.constant 0 : index
    %c0_71 = arith.constant 0 : index
    %191 = vector.load %arg19[%c0_70, %c0_71] : memref<1x32xf32, #tpu.memory_space<vmem>>, vector<1x32xf32>
    %192 = vector.broadcast %191 : vector<1x32xf32> to vector<8x32xf32>
    %193 = arith.mulf %190, %192 : vector<8x32xf32>
    %c0_72 = arith.constant 0 : index
    %c0_73 = arith.constant 0 : index
    %194 = vector.load %arg20[%c0_72, %c0_73] : memref<1x32xf32, #tpu.memory_space<vmem>>, vector<1x32xf32>
    %195 = vector.broadcast %194 : vector<1x32xf32> to vector<8x32xf32>
    %196 = arith.addf %193, %195 : vector<8x32xf32>
    %197 = vector.extract_strided_slice %162 {offsets = [0, 0, 8], sizes = [1, 8, 8], strides = [1, 1, 1]} : vector<1x8x64xf32> to vector<1x8x8xf32>
    %198 = vector.shape_cast %197 : vector<1x8x8xf32> to vector<8x8xf32>
    %199 = arith.truncf %198 : vector<8x8xf32> to vector<8x8xbf16>
    %c0_74 = arith.constant 0 : index
    %c0_75 = arith.constant 0 : index
    %200 = vector.load %arg17[%c0_74, %c0_75] : memref<8x32xbf16, #tpu.memory_space<vmem>>, vector<8x32xbf16>
    %cst_76 = arith.constant dense<0.000000e+00> : vector<8x32xf32>
    %201 = tpu.matmul %199, %200, %cst_76 {dimension_numbers = #tpu.dot_dimension_numbers<[1], [0], [0], [1], [0, 0, 1, 1], [], []>} : vector<8x8xbf16>, vector<8x32xbf16>, vector<8x32xf32> -> vector<8x32xf32>
    %c0_77 = arith.constant 0 : index
    %c0_78 = arith.constant 0 : index
    %202 = vector.load %arg18[%c0_77, %c0_78] : memref<1x32xf32, #tpu.memory_space<vmem>>, vector<1x32xf32>
    %203 = vector.broadcast %202 : vector<1x32xf32> to vector<8x32xf32>
    %204 = arith.addf %201, %203 : vector<8x32xf32>
    %cst_79 = arith.constant 0.000000e+00 : f32
    %205 = vector.broadcast %cst_79 : f32 to vector<8x32xf32>
    %206 = arith.maximumf %204, %205 : vector<8x32xf32>
    %cst_80 = arith.constant dense<0.000000e+00> : vector<8xf32>
    %207 = vector.multi_reduction <add>, %206, %cst_80 [1] : vector<8x32xf32> to vector<8xf32>
    %208 = vector.shape_cast %207 : vector<8xf32> to vector<8x1xf32>
    %cst_81 = arith.constant 3.200000e+01 : f32
    %209 = vector.broadcast %cst_81 : f32 to vector<8x1xf32>
    %210 = arith.divf %208, %209 : vector<8x1xf32>
    %211 = vector.broadcast %210 : vector<8x1xf32> to vector<8x32xf32>
    %212 = arith.subf %206, %211 : vector<8x32xf32>
    %213 = arith.mulf %212, %212 : vector<8x32xf32>
    %cst_82 = arith.constant dense<0.000000e+00> : vector<8xf32>
    %214 = vector.multi_reduction <add>, %213, %cst_82 [1] : vector<8x32xf32> to vector<8xf32>
    %215 = vector.shape_cast %214 : vector<8xf32> to vector<8x1xf32>
    %cst_83 = arith.constant 3.200000e+01 : f32
    %216 = vector.broadcast %cst_83 : f32 to vector<8x1xf32>
    %217 = arith.divf %215, %216 : vector<8x1xf32>
    %218 = vector.broadcast %210 : vector<8x1xf32> to vector<8x32xf32>
    %219 = arith.subf %206, %218 : vector<8x32xf32>
    %cst_84 = arith.constant 9.99999974E-6 : f32
    %220 = vector.broadcast %cst_84 : f32 to vector<8x1xf32>
    %221 = arith.addf %217, %220 : vector<8x1xf32>
    %222 = math.rsqrt %221 : vector<8x1xf32>
    %223 = vector.broadcast %222 : vector<8x1xf32> to vector<8x32xf32>
    %224 = arith.mulf %219, %223 : vector<8x32xf32>
    %c0_85 = arith.constant 0 : index
    %c0_86 = arith.constant 0 : index
    %225 = vector.load %arg19[%c0_85, %c0_86] : memref<1x32xf32, #tpu.memory_space<vmem>>, vector<1x32xf32>
    %226 = vector.broadcast %225 : vector<1x32xf32> to vector<8x32xf32>
    %227 = arith.mulf %224, %226 : vector<8x32xf32>
    %c0_87 = arith.constant 0 : index
    %c0_88 = arith.constant 0 : index
    %228 = vector.load %arg20[%c0_87, %c0_88] : memref<1x32xf32, #tpu.memory_space<vmem>>, vector<1x32xf32>
    %229 = vector.broadcast %228 : vector<1x32xf32> to vector<8x32xf32>
    %230 = arith.addf %227, %229 : vector<8x32xf32>
    %231 = vector.extract_strided_slice %162 {offsets = [0, 0, 16], sizes = [1, 8, 8], strides = [1, 1, 1]} : vector<1x8x64xf32> to vector<1x8x8xf32>
    %232 = vector.shape_cast %231 : vector<1x8x8xf32> to vector<8x8xf32>
    %233 = arith.truncf %232 : vector<8x8xf32> to vector<8x8xbf16>
    %c0_89 = arith.constant 0 : index
    %c0_90 = arith.constant 0 : index
    %234 = vector.load %arg17[%c0_89, %c0_90] : memref<8x32xbf16, #tpu.memory_space<vmem>>, vector<8x32xbf16>
    %cst_91 = arith.constant dense<0.000000e+00> : vector<8x32xf32>
    %235 = tpu.matmul %233, %234, %cst_91 {dimension_numbers = #tpu.dot_dimension_numbers<[1], [0], [0], [1], [0, 0, 1, 1], [], []>} : vector<8x8xbf16>, vector<8x32xbf16>, vector<8x32xf32> -> vector<8x32xf32>
    %c0_92 = arith.constant 0 : index
    %c0_93 = arith.constant 0 : index
    %236 = vector.load %arg18[%c0_92, %c0_93] : memref<1x32xf32, #tpu.memory_space<vmem>>, vector<1x32xf32>
    %237 = vector.broadcast %236 : vector<1x32xf32> to vector<8x32xf32>
    %238 = arith.addf %235, %237 : vector<8x32xf32>
    %cst_94 = arith.constant 0.000000e+00 : f32
    %239 = vector.broadcast %cst_94 : f32 to vector<8x32xf32>
    %240 = arith.maximumf %238, %239 : vector<8x32xf32>
    %cst_95 = arith.constant dense<0.000000e+00> : vector<8xf32>
    %241 = vector.multi_reduction <add>, %240, %cst_95 [1] : vector<8x32xf32> to vector<8xf32>
    %242 = vector.shape_cast %241 : vector<8xf32> to vector<8x1xf32>
    %cst_96 = arith.constant 3.200000e+01 : f32
    %243 = vector.broadcast %cst_96 : f32 to vector<8x1xf32>
    %244 = arith.divf %242, %243 : vector<8x1xf32>
    %245 = vector.broadcast %244 : vector<8x1xf32> to vector<8x32xf32>
    %246 = arith.subf %240, %245 : vector<8x32xf32>
    %247 = arith.mulf %246, %246 : vector<8x32xf32>
    %cst_97 = arith.constant dense<0.000000e+00> : vector<8xf32>
    %248 = vector.multi_reduction <add>, %247, %cst_97 [1] : vector<8x32xf32> to vector<8xf32>
    %249 = vector.shape_cast %248 : vector<8xf32> to vector<8x1xf32>
    %cst_98 = arith.constant 3.200000e+01 : f32
    %250 = vector.broadcast %cst_98 : f32 to vector<8x1xf32>
    %251 = arith.divf %249, %250 : vector<8x1xf32>
    %252 = vector.broadcast %244 : vector<8x1xf32> to vector<8x32xf32>
    %253 = arith.subf %240, %252 : vector<8x32xf32>
    %cst_99 = arith.constant 9.99999974E-6 : f32
    %254 = vector.broadcast %cst_99 : f32 to vector<8x1xf32>
    %255 = arith.addf %251, %254 : vector<8x1xf32>
    %256 = math.rsqrt %255 : vector<8x1xf32>
    %257 = vector.broadcast %256 : vector<8x1xf32> to vector<8x32xf32>
    %258 = arith.mulf %253, %257 : vector<8x32xf32>
    %c0_100 = arith.constant 0 : index
    %c0_101 = arith.constant 0 : index
    %259 = vector.load %arg19[%c0_100, %c0_101] : memref<1x32xf32, #tpu.memory_space<vmem>>, vector<1x32xf32>
    %260 = vector.broadcast %259 : vector<1x32xf32> to vector<8x32xf32>
    %261 = arith.mulf %258, %260 : vector<8x32xf32>
    %c0_102 = arith.constant 0 : index
    %c0_103 = arith.constant 0 : index
    %262 = vector.load %arg20[%c0_102, %c0_103] : memref<1x32xf32, #tpu.memory_space<vmem>>, vector<1x32xf32>
    %263 = vector.broadcast %262 : vector<1x32xf32> to vector<8x32xf32>
    %264 = arith.addf %261, %263 : vector<8x32xf32>
    %265 = vector.extract_strided_slice %162 {offsets = [0, 0, 24], sizes = [1, 8, 8], strides = [1, 1, 1]} : vector<1x8x64xf32> to vector<1x8x8xf32>
    %266 = vector.shape_cast %265 : vector<1x8x8xf32> to vector<8x8xf32>
    %267 = arith.truncf %266 : vector<8x8xf32> to vector<8x8xbf16>
    %c0_104 = arith.constant 0 : index
    %c0_105 = arith.constant 0 : index
    %268 = vector.load %arg17[%c0_104, %c0_105] : memref<8x32xbf16, #tpu.memory_space<vmem>>, vector<8x32xbf16>
    %cst_106 = arith.constant dense<0.000000e+00> : vector<8x32xf32>
    %269 = tpu.matmul %267, %268, %cst_106 {dimension_numbers = #tpu.dot_dimension_numbers<[1], [0], [0], [1], [0, 0, 1, 1], [], []>} : vector<8x8xbf16>, vector<8x32xbf16>, vector<8x32xf32> -> vector<8x32xf32>
    %c0_107 = arith.constant 0 : index
    %c0_108 = arith.constant 0 : index
    %270 = vector.load %arg18[%c0_107, %c0_108] : memref<1x32xf32, #tpu.memory_space<vmem>>, vector<1x32xf32>
    %271 = vector.broadcast %270 : vector<1x32xf32> to vector<8x32xf32>
    %272 = arith.addf %269, %271 : vector<8x32xf32>
    %cst_109 = arith.constant 0.000000e+00 : f32
    %273 = vector.broadcast %cst_109 : f32 to vector<8x32xf32>
    %274 = arith.maximumf %272, %273 : vector<8x32xf32>
    %cst_110 = arith.constant dense<0.000000e+00> : vector<8xf32>
    %275 = vector.multi_reduction <add>, %274, %cst_110 [1] : vector<8x32xf32> to vector<8xf32>
    %276 = vector.shape_cast %275 : vector<8xf32> to vector<8x1xf32>
    %cst_111 = arith.constant 3.200000e+01 : f32
    %277 = vector.broadcast %cst_111 : f32 to vector<8x1xf32>
    %278 = arith.divf %276, %277 : vector<8x1xf32>
    %279 = vector.broadcast %278 : vector<8x1xf32> to vector<8x32xf32>
    %280 = arith.subf %274, %279 : vector<8x32xf32>
    %281 = arith.mulf %280, %280 : vector<8x32xf32>
    %cst_112 = arith.constant dense<0.000000e+00> : vector<8xf32>
    %282 = vector.multi_reduction <add>, %281, %cst_112 [1] : vector<8x32xf32> to vector<8xf32>
    %283 = vector.shape_cast %282 : vector<8xf32> to vector<8x1xf32>
    %cst_113 = arith.constant 3.200000e+01 : f32
    %284 = vector.broadcast %cst_113 : f32 to vector<8x1xf32>
    %285 = arith.divf %283, %284 : vector<8x1xf32>
    %286 = vector.broadcast %278 : vector<8x1xf32> to vector<8x32xf32>
    %287 = arith.subf %274, %286 : vector<8x32xf32>
    %cst_114 = arith.constant 9.99999974E-6 : f32
    %288 = vector.broadcast %cst_114 : f32 to vector<8x1xf32>
    %289 = arith.addf %285, %288 : vector<8x1xf32>
    %290 = math.rsqrt %289 : vector<8x1xf32>
    %291 = vector.broadcast %290 : vector<8x1xf32> to vector<8x32xf32>
    %292 = arith.mulf %287, %291 : vector<8x32xf32>
    %c0_115 = arith.constant 0 : index
    %c0_116 = arith.constant 0 : index
    %293 = vector.load %arg19[%c0_115, %c0_116] : memref<1x32xf32, #tpu.memory_space<vmem>>, vector<1x32xf32>
    %294 = vector.broadcast %293 : vector<1x32xf32> to vector<8x32xf32>
    %295 = arith.mulf %292, %294 : vector<8x32xf32>
    %c0_117 = arith.constant 0 : index
    %c0_118 = arith.constant 0 : index
    %296 = vector.load %arg20[%c0_117, %c0_118] : memref<1x32xf32, #tpu.memory_space<vmem>>, vector<1x32xf32>
    %297 = vector.broadcast %296 : vector<1x32xf32> to vector<8x32xf32>
    %298 = arith.addf %295, %297 : vector<8x32xf32>
    %299 = vector.extract_strided_slice %162 {offsets = [0, 0, 32], sizes = [1, 8, 8], strides = [1, 1, 1]} : vector<1x8x64xf32> to vector<1x8x8xf32>
    %300 = vector.shape_cast %299 : vector<1x8x8xf32> to vector<8x8xf32>
    %301 = arith.truncf %300 : vector<8x8xf32> to vector<8x8xbf16>
    %c0_119 = arith.constant 0 : index
    %c0_120 = arith.constant 0 : index
    %302 = vector.load %arg17[%c0_119, %c0_120] : memref<8x32xbf16, #tpu.memory_space<vmem>>, vector<8x32xbf16>
    %cst_121 = arith.constant dense<0.000000e+00> : vector<8x32xf32>
    %303 = tpu.matmul %301, %302, %cst_121 {dimension_numbers = #tpu.dot_dimension_numbers<[1], [0], [0], [1], [0, 0, 1, 1], [], []>} : vector<8x8xbf16>, vector<8x32xbf16>, vector<8x32xf32> -> vector<8x32xf32>
    %c0_122 = arith.constant 0 : index
    %c0_123 = arith.constant 0 : index
    %304 = vector.load %arg18[%c0_122, %c0_123] : memref<1x32xf32, #tpu.memory_space<vmem>>, vector<1x32xf32>
    %305 = vector.broadcast %304 : vector<1x32xf32> to vector<8x32xf32>
    %306 = arith.addf %303, %305 : vector<8x32xf32>
    %cst_124 = arith.constant 0.000000e+00 : f32
    %307 = vector.broadcast %cst_124 : f32 to vector<8x32xf32>
    %308 = arith.maximumf %306, %307 : vector<8x32xf32>
    %cst_125 = arith.constant dense<0.000000e+00> : vector<8xf32>
    %309 = vector.multi_reduction <add>, %308, %cst_125 [1] : vector<8x32xf32> to vector<8xf32>
    %310 = vector.shape_cast %309 : vector<8xf32> to vector<8x1xf32>
    %cst_126 = arith.constant 3.200000e+01 : f32
    %311 = vector.broadcast %cst_126 : f32 to vector<8x1xf32>
    %312 = arith.divf %310, %311 : vector<8x1xf32>
    %313 = vector.broadcast %312 : vector<8x1xf32> to vector<8x32xf32>
    %314 = arith.subf %308, %313 : vector<8x32xf32>
    %315 = arith.mulf %314, %314 : vector<8x32xf32>
    %cst_127 = arith.constant dense<0.000000e+00> : vector<8xf32>
    %316 = vector.multi_reduction <add>, %315, %cst_127 [1] : vector<8x32xf32> to vector<8xf32>
    %317 = vector.shape_cast %316 : vector<8xf32> to vector<8x1xf32>
    %cst_128 = arith.constant 3.200000e+01 : f32
    %318 = vector.broadcast %cst_128 : f32 to vector<8x1xf32>
    %319 = arith.divf %317, %318 : vector<8x1xf32>
    %320 = vector.broadcast %312 : vector<8x1xf32> to vector<8x32xf32>
    %321 = arith.subf %308, %320 : vector<8x32xf32>
    %cst_129 = arith.constant 9.99999974E-6 : f32
    %322 = vector.broadcast %cst_129 : f32 to vector<8x1xf32>
    %323 = arith.addf %319, %322 : vector<8x1xf32>
    %324 = math.rsqrt %323 : vector<8x1xf32>
    %325 = vector.broadcast %324 : vector<8x1xf32> to vector<8x32xf32>
    %326 = arith.mulf %321, %325 : vector<8x32xf32>
    %c0_130 = arith.constant 0 : index
    %c0_131 = arith.constant 0 : index
    %327 = vector.load %arg19[%c0_130, %c0_131] : memref<1x32xf32, #tpu.memory_space<vmem>>, vector<1x32xf32>
    %328 = vector.broadcast %327 : vector<1x32xf32> to vector<8x32xf32>
    %329 = arith.mulf %326, %328 : vector<8x32xf32>
    %c0_132 = arith.constant 0 : index
    %c0_133 = arith.constant 0 : index
    %330 = vector.load %arg20[%c0_132, %c0_133] : memref<1x32xf32, #tpu.memory_space<vmem>>, vector<1x32xf32>
    %331 = vector.broadcast %330 : vector<1x32xf32> to vector<8x32xf32>
    %332 = arith.addf %329, %331 : vector<8x32xf32>
    %333 = vector.extract_strided_slice %162 {offsets = [0, 0, 40], sizes = [1, 8, 8], strides = [1, 1, 1]} : vector<1x8x64xf32> to vector<1x8x8xf32>
    %334 = vector.shape_cast %333 : vector<1x8x8xf32> to vector<8x8xf32>
    %335 = arith.truncf %334 : vector<8x8xf32> to vector<8x8xbf16>
    %c0_134 = arith.constant 0 : index
    %c0_135 = arith.constant 0 : index
    %336 = vector.load %arg17[%c0_134, %c0_135] : memref<8x32xbf16, #tpu.memory_space<vmem>>, vector<8x32xbf16>
    %cst_136 = arith.constant dense<0.000000e+00> : vector<8x32xf32>
    %337 = tpu.matmul %335, %336, %cst_136 {dimension_numbers = #tpu.dot_dimension_numbers<[1], [0], [0], [1], [0, 0, 1, 1], [], []>} : vector<8x8xbf16>, vector<8x32xbf16>, vector<8x32xf32> -> vector<8x32xf32>
    %c0_137 = arith.constant 0 : index
    %c0_138 = arith.constant 0 : index
    %338 = vector.load %arg18[%c0_137, %c0_138] : memref<1x32xf32, #tpu.memory_space<vmem>>, vector<1x32xf32>
    %339 = vector.broadcast %338 : vector<1x32xf32> to vector<8x32xf32>
    %340 = arith.addf %337, %339 : vector<8x32xf32>
    %cst_139 = arith.constant 0.000000e+00 : f32
    %341 = vector.broadcast %cst_139 : f32 to vector<8x32xf32>
    %342 = arith.maximumf %340, %341 : vector<8x32xf32>
    %cst_140 = arith.constant dense<0.000000e+00> : vector<8xf32>
    %343 = vector.multi_reduction <add>, %342, %cst_140 [1] : vector<8x32xf32> to vector<8xf32>
    %344 = vector.shape_cast %343 : vector<8xf32> to vector<8x1xf32>
    %cst_141 = arith.constant 3.200000e+01 : f32
    %345 = vector.broadcast %cst_141 : f32 to vector<8x1xf32>
    %346 = arith.divf %344, %345 : vector<8x1xf32>
    %347 = vector.broadcast %346 : vector<8x1xf32> to vector<8x32xf32>
    %348 = arith.subf %342, %347 : vector<8x32xf32>
    %349 = arith.mulf %348, %348 : vector<8x32xf32>
    %cst_142 = arith.constant dense<0.000000e+00> : vector<8xf32>
    %350 = vector.multi_reduction <add>, %349, %cst_142 [1] : vector<8x32xf32> to vector<8xf32>
    %351 = vector.shape_cast %350 : vector<8xf32> to vector<8x1xf32>
    %cst_143 = arith.constant 3.200000e+01 : f32
    %352 = vector.broadcast %cst_143 : f32 to vector<8x1xf32>
    %353 = arith.divf %351, %352 : vector<8x1xf32>
    %354 = vector.broadcast %346 : vector<8x1xf32> to vector<8x32xf32>
    %355 = arith.subf %342, %354 : vector<8x32xf32>
    %cst_144 = arith.constant 9.99999974E-6 : f32
    %356 = vector.broadcast %cst_144 : f32 to vector<8x1xf32>
    %357 = arith.addf %353, %356 : vector<8x1xf32>
    %358 = math.rsqrt %357 : vector<8x1xf32>
    %359 = vector.broadcast %358 : vector<8x1xf32> to vector<8x32xf32>
    %360 = arith.mulf %355, %359 : vector<8x32xf32>
    %c0_145 = arith.constant 0 : index
    %c0_146 = arith.constant 0 : index
    %361 = vector.load %arg19[%c0_145, %c0_146] : memref<1x32xf32, #tpu.memory_space<vmem>>, vector<1x32xf32>
    %362 = vector.broadcast %361 : vector<1x32xf32> to vector<8x32xf32>
    %363 = arith.mulf %360, %362 : vector<8x32xf32>
    %c0_147 = arith.constant 0 : index
    %c0_148 = arith.constant 0 : index
    %364 = vector.load %arg20[%c0_147, %c0_148] : memref<1x32xf32, #tpu.memory_space<vmem>>, vector<1x32xf32>
    %365 = vector.broadcast %364 : vector<1x32xf32> to vector<8x32xf32>
    %366 = arith.addf %363, %365 : vector<8x32xf32>
    %367 = vector.extract_strided_slice %162 {offsets = [0, 0, 48], sizes = [1, 8, 8], strides = [1, 1, 1]} : vector<1x8x64xf32> to vector<1x8x8xf32>
    %368 = vector.shape_cast %367 : vector<1x8x8xf32> to vector<8x8xf32>
    %369 = arith.truncf %368 : vector<8x8xf32> to vector<8x8xbf16>
    %c0_149 = arith.constant 0 : index
    %c0_150 = arith.constant 0 : index
    %370 = vector.load %arg17[%c0_149, %c0_150] : memref<8x32xbf16, #tpu.memory_space<vmem>>, vector<8x32xbf16>
    %cst_151 = arith.constant dense<0.000000e+00> : vector<8x32xf32>
    %371 = tpu.matmul %369, %370, %cst_151 {dimension_numbers = #tpu.dot_dimension_numbers<[1], [0], [0], [1], [0, 0, 1, 1], [], []>} : vector<8x8xbf16>, vector<8x32xbf16>, vector<8x32xf32> -> vector<8x32xf32>
    %c0_152 = arith.constant 0 : index
    %c0_153 = arith.constant 0 : index
    %372 = vector.load %arg18[%c0_152, %c0_153] : memref<1x32xf32, #tpu.memory_space<vmem>>, vector<1x32xf32>
    %373 = vector.broadcast %372 : vector<1x32xf32> to vector<8x32xf32>
    %374 = arith.addf %371, %373 : vector<8x32xf32>
    %cst_154 = arith.constant 0.000000e+00 : f32
    %375 = vector.broadcast %cst_154 : f32 to vector<8x32xf32>
    %376 = arith.maximumf %374, %375 : vector<8x32xf32>
    %cst_155 = arith.constant dense<0.000000e+00> : vector<8xf32>
    %377 = vector.multi_reduction <add>, %376, %cst_155 [1] : vector<8x32xf32> to vector<8xf32>
    %378 = vector.shape_cast %377 : vector<8xf32> to vector<8x1xf32>
    %cst_156 = arith.constant 3.200000e+01 : f32
    %379 = vector.broadcast %cst_156 : f32 to vector<8x1xf32>
    %380 = arith.divf %378, %379 : vector<8x1xf32>
    %381 = vector.broadcast %380 : vector<8x1xf32> to vector<8x32xf32>
    %382 = arith.subf %376, %381 : vector<8x32xf32>
    %383 = arith.mulf %382, %382 : vector<8x32xf32>
    %cst_157 = arith.constant dense<0.000000e+00> : vector<8xf32>
    %384 = vector.multi_reduction <add>, %383, %cst_157 [1] : vector<8x32xf32> to vector<8xf32>
    %385 = vector.shape_cast %384 : vector<8xf32> to vector<8x1xf32>
    %cst_158 = arith.constant 3.200000e+01 : f32
    %386 = vector.broadcast %cst_158 : f32 to vector<8x1xf32>
    %387 = arith.divf %385, %386 : vector<8x1xf32>
    %388 = vector.broadcast %380 : vector<8x1xf32> to vector<8x32xf32>
    %389 = arith.subf %376, %388 : vector<8x32xf32>
    %cst_159 = arith.constant 9.99999974E-6 : f32
    %390 = vector.broadcast %cst_159 : f32 to vector<8x1xf32>
    %391 = arith.addf %387, %390 : vector<8x1xf32>
    %392 = math.rsqrt %391 : vector<8x1xf32>
    %393 = vector.broadcast %392 : vector<8x1xf32> to vector<8x32xf32>
    %394 = arith.mulf %389, %393 : vector<8x32xf32>
    %c0_160 = arith.constant 0 : index
    %c0_161 = arith.constant 0 : index
    %395 = vector.load %arg19[%c0_160, %c0_161] : memref<1x32xf32, #tpu.memory_space<vmem>>, vector<1x32xf32>
    %396 = vector.broadcast %395 : vector<1x32xf32> to vector<8x32xf32>
    %397 = arith.mulf %394, %396 : vector<8x32xf32>
    %c0_162 = arith.constant 0 : index
    %c0_163 = arith.constant 0 : index
    %398 = vector.load %arg20[%c0_162, %c0_163] : memref<1x32xf32, #tpu.memory_space<vmem>>, vector<1x32xf32>
    %399 = vector.broadcast %398 : vector<1x32xf32> to vector<8x32xf32>
    %400 = arith.addf %397, %399 : vector<8x32xf32>
    %401 = vector.extract_strided_slice %162 {offsets = [0, 0, 56], sizes = [1, 8, 8], strides = [1, 1, 1]} : vector<1x8x64xf32> to vector<1x8x8xf32>
    %402 = vector.shape_cast %401 : vector<1x8x8xf32> to vector<8x8xf32>
    %403 = arith.truncf %402 : vector<8x8xf32> to vector<8x8xbf16>
    %c0_164 = arith.constant 0 : index
    %c0_165 = arith.constant 0 : index
    %404 = vector.load %arg17[%c0_164, %c0_165] : memref<8x32xbf16, #tpu.memory_space<vmem>>, vector<8x32xbf16>
    %cst_166 = arith.constant dense<0.000000e+00> : vector<8x32xf32>
    %405 = tpu.matmul %403, %404, %cst_166 {dimension_numbers = #tpu.dot_dimension_numbers<[1], [0], [0], [1], [0, 0, 1, 1], [], []>} : vector<8x8xbf16>, vector<8x32xbf16>, vector<8x32xf32> -> vector<8x32xf32>
    %c0_167 = arith.constant 0 : index
    %c0_168 = arith.constant 0 : index
    %406 = vector.load %arg18[%c0_167, %c0_168] : memref<1x32xf32, #tpu.memory_space<vmem>>, vector<1x32xf32>
    %407 = vector.broadcast %406 : vector<1x32xf32> to vector<8x32xf32>
    %408 = arith.addf %405, %407 : vector<8x32xf32>
    %cst_169 = arith.constant 0.000000e+00 : f32
    %409 = vector.broadcast %cst_169 : f32 to vector<8x32xf32>
    %410 = arith.maximumf %408, %409 : vector<8x32xf32>
    %cst_170 = arith.constant dense<0.000000e+00> : vector<8xf32>
    %411 = vector.multi_reduction <add>, %410, %cst_170 [1] : vector<8x32xf32> to vector<8xf32>
    %412 = vector.shape_cast %411 : vector<8xf32> to vector<8x1xf32>
    %cst_171 = arith.constant 3.200000e+01 : f32
    %413 = vector.broadcast %cst_171 : f32 to vector<8x1xf32>
    %414 = arith.divf %412, %413 : vector<8x1xf32>
    %415 = vector.broadcast %414 : vector<8x1xf32> to vector<8x32xf32>
    %416 = arith.subf %410, %415 : vector<8x32xf32>
    %417 = arith.mulf %416, %416 : vector<8x32xf32>
    %cst_172 = arith.constant dense<0.000000e+00> : vector<8xf32>
    %418 = vector.multi_reduction <add>, %417, %cst_172 [1] : vector<8x32xf32> to vector<8xf32>
    %419 = vector.shape_cast %418 : vector<8xf32> to vector<8x1xf32>
    %cst_173 = arith.constant 3.200000e+01 : f32
    %420 = vector.broadcast %cst_173 : f32 to vector<8x1xf32>
    %421 = arith.divf %419, %420 : vector<8x1xf32>
    %422 = vector.broadcast %414 : vector<8x1xf32> to vector<8x32xf32>
    %423 = arith.subf %410, %422 : vector<8x32xf32>
    %cst_174 = arith.constant 9.99999974E-6 : f32
    %424 = vector.broadcast %cst_174 : f32 to vector<8x1xf32>
    %425 = arith.addf %421, %424 : vector<8x1xf32>
    %426 = math.rsqrt %425 : vector<8x1xf32>
    %427 = vector.broadcast %426 : vector<8x1xf32> to vector<8x32xf32>
    %428 = arith.mulf %423, %427 : vector<8x32xf32>
    %c0_175 = arith.constant 0 : index
    %c0_176 = arith.constant 0 : index
    %429 = vector.load %arg19[%c0_175, %c0_176] : memref<1x32xf32, #tpu.memory_space<vmem>>, vector<1x32xf32>
    %430 = vector.broadcast %429 : vector<1x32xf32> to vector<8x32xf32>
    %431 = arith.mulf %428, %430 : vector<8x32xf32>
    %c0_177 = arith.constant 0 : index
    %c0_178 = arith.constant 0 : index
    %432 = vector.load %arg20[%c0_177, %c0_178] : memref<1x32xf32, #tpu.memory_space<vmem>>, vector<1x32xf32>
    %433 = vector.broadcast %432 : vector<1x32xf32> to vector<8x32xf32>
    %434 = arith.addf %431, %433 : vector<8x32xf32>
    %435 = tpu.concatenate %196, %230, %264, %298, %332, %366, %400, %434 in 1 : vector<8x32xf32>, vector<8x32xf32>, vector<8x32xf32>, vector<8x32xf32>, vector<8x32xf32>, vector<8x32xf32>, vector<8x32xf32>, vector<8x32xf32> -> vector<8x256xf32>
    %436 = vector.shape_cast %435 : vector<8x256xf32> to vector<1x8x256xf32>
    %c0_179 = arith.constant 0 : index
    %c0_180 = arith.constant 0 : index
    %c0_181 = arith.constant 0 : index
    %437 = vector.load %arg22[%c0_179, %c0_180, %c0_181] : memref<1x8x256xf32, #tpu.memory_space<vmem>>, vector<1x8x256xf32>
    tpu.vector_store %arg22[%c0_179, %c0_180, %c0_181], %436 {strides = array<i32>} : memref<1x8x256xf32, #tpu.memory_space<vmem>>, vector<1x8x256xf32>,
    return
  }
  func.func @transform_0(%arg0: i32) -> (i32, i32, i32) {
    %c0_i32 = arith.constant 0 : i32
    %c0_i32_0 = arith.constant 0 : i32
    %c0_i32_1 = arith.constant 0 : i32
    return %arg0, %c0_i32, %c0_i32_0 : i32, i32, i32
  }
  func.func @transform_1(%arg0: i32) -> (i32, i32, i32) {
    %c0_i32 = arith.constant 0 : i32
    %c0_i32_0 = arith.constant 0 : i32
    %c0_i32_1 = arith.constant 0 : i32
    return %arg0, %c0_i32, %c0_i32_0 : i32, i32, i32
  }
  func.func @transform_2(%arg0: i32) -> (i32, i32, i32) {
    %c0_i32 = arith.constant 0 : i32
    %c0_i32_0 = arith.constant 0 : i32
    %c0_i32_1 = arith.constant 0 : i32
    return %arg0, %c0_i32, %c0_i32_0 : i32, i32, i32
  }
  func.func @transform_3(%arg0: i32) -> (i32, i32, i32) {
    %c0_i32 = arith.constant 0 : i32
    %c0_i32_0 = arith.constant 0 : i32
    %c0_i32_1 = arith.constant 0 : i32
    return %arg0, %c0_i32, %c0_i32_0 : i32, i32, i32
  }
  func.func @transform_4(%arg0: i32) -> (i32, i32) {
    %c0_i32 = arith.constant 0 : i32
    %c0_i32_0 = arith.constant 0 : i32
    %c0_i32_1 = arith.constant 0 : i32
    return %c0_i32, %c0_i32_0 : i32, i32
  }
  func.func @transform_5(%arg0: i32) -> (i32, i32) {
    %c0_i32 = arith.constant 0 : i32
    %c0_i32_0 = arith.constant 0 : i32
    %c0_i32_1 = arith.constant 0 : i32
    return %c0_i32, %c0_i32_0 : i32, i32
  }
  func.func @transform_6(%arg0: i32) -> (i32, i32) {
    %c0_i32 = arith.constant 0 : i32
    %c0_i32_0 = arith.constant 0 : i32
    %c0_i32_1 = arith.constant 0 : i32
    return %c0_i32, %c0_i32_0 : i32, i32
  }
  func.func @transform_7(%arg0: i32) -> (i32, i32) {
    %c0_i32 = arith.constant 0 : i32
    %c0_i32_0 = arith.constant 0 : i32
    %c0_i32_1 = arith.constant 0 : i32
    return %c0_i32, %c0_i32_0 : i32, i32
  }
  func.func @transform_8(%arg0: i32) -> (i32, i32) {
    %c0_i32 = arith.constant 0 : i32
    %c0_i32_0 = arith.constant 0 : i32
    %c0_i32_1 = arith.constant 0 : i32
    return %c0_i32, %c0_i32_0 : i32, i32
  }
  func.func @transform_9(%arg0: i32) -> (i32, i32) {
    %c0_i32 = arith.constant 0 : i32
    %c0_i32_0 = arith.constant 0 : i32
    %c0_i32_1 = arith.constant 0 : i32
    return %c0_i32, %c0_i32_0 : i32, i32
  }
  func.func @transform_10(%arg0: i32) -> (i32, i32) {
    %c0_i32 = arith.constant 0 : i32
    %c0_i32_0 = arith.constant 0 : i32
    %c0_i32_1 = arith.constant 0 : i32
    return %c0_i32, %c0_i32_0 : i32, i32
  }
  func.func @transform_11(%arg0: i32) -> (i32, i32) {
    %c0_i32 = arith.constant 0 : i32
    %c0_i32_0 = arith.constant 0 : i32
    %c0_i32_1 = arith.constant 0 : i32
    return %c0_i32, %c0_i32_0 : i32, i32
  }
  func.func @transform_12(%arg0: i32) -> (i32, i32) {
    %c0_i32 = arith.constant 0 : i32
    %c0_i32_0 = arith.constant 0 : i32
    %c0_i32_1 = arith.constant 0 : i32
    return %c0_i32, %c0_i32_0 : i32, i32
  }
  func.func @transform_13(%arg0: i32) -> (i32, i32) {
    %c0_i32 = arith.constant 0 : i32
    %c0_i32_0 = arith.constant 0 : i32
    %c0_i32_1 = arith.constant 0 : i32
    return %c0_i32, %c0_i32_0 : i32, i32
  }
  func.func @transform_14(%arg0: i32) -> (i32, i32) {
    %c0_i32 = arith.constant 0 : i32
    %c0_i32_0 = arith.constant 0 : i32
    %c0_i32_1 = arith.constant 0 : i32
    return %c0_i32, %c0_i32_0 : i32, i32
  }
  func.func @transform_15(%arg0: i32) -> (i32, i32) {
    %c0_i32 = arith.constant 0 : i32
    %c0_i32_0 = arith.constant 0 : i32
    %c0_i32_1 = arith.constant 0 : i32
    return %c0_i32, %c0_i32_0 : i32, i32
  }
  func.func @transform_16(%arg0: i32) -> (i32, i32) {
    %c0_i32 = arith.constant 0 : i32
    %c0_i32_0 = arith.constant 0 : i32
    %c0_i32_1 = arith.constant 0 : i32
    return %c0_i32, %c0_i32_0 : i32, i32
  }
  func.func @transform_17(%arg0: i32) -> (i32, i32) {
    %c0_i32 = arith.constant 0 : i32
    %c0_i32_0 = arith.constant 0 : i32
    %c0_i32_1 = arith.constant 0 : i32
    return %c0_i32, %c0_i32_0 : i32, i32
  }
  func.func @transform_18(%arg0: i32) -> (i32, i32) {
    %c0_i32 = arith.constant 0 : i32
    %c0_i32_0 = arith.constant 0 : i32
    %c0_i32_1 = arith.constant 0 : i32
    return %c0_i32, %c0_i32_0 : i32, i32
  }
  func.func @transform_19(%arg0: i32) -> (i32, i32) {
    %c0_i32 = arith.constant 0 : i32
    %c0_i32_0 = arith.constant 0 : i32
    %c0_i32_1 = arith.constant 0 : i32
    return %c0_i32, %c0_i32_0 : i32, i32
  }
  func.func @transform_20(%arg0: i32) -> (i32, i32, i32) {
    %c0_i32 = arith.constant 0 : i32
    %c0_i32_0 = arith.constant 0 : i32
    %c0_i32_1 = arith.constant 0 : i32
    return %arg0, %c0_i32, %c0_i32_0 : i32, i32, i32
  }
  func.func @transform_21(%arg0: i32) -> (i32, i32, i32) {
    %c0_i32 = arith.constant 0 : i32
    %c0_i32_0 = arith.constant 0 : i32
    %c0_i32_1 = arith.constant 0 : i32
    return %arg0, %c0_i32, %c0_i32_0 : i32, i32, i32
  }
}

</mosaic_0001>

<llo_original>
// kernel: pgn_forward.1
$region0: #{pgn_forward.1}
  #allocation0 [shape = 'u32[]', space=smem, size = 0x4, offset = 0x4, fixed_abs, tag = 'smem constant byte address 0x4 - core index']
  #allocation1 [shape = 'u32[144,128]{1,0:T(1,128)}', space=vmem, size = 0x12000, scoped, tag = 'internal scratch']
  %s0 = inlined_call_operand.vmem [shape: bf16[2,8,32], index: 0, kind: input, shape index: {}]
  %s1 = inlined_call_operand.vmem [shape: bf16[2,64,16], index: 1, kind: input, shape index: {}]
  %s2 = inlined_call_operand.vmem [shape: bf16[2,1,16], index: 2, kind: input, shape index: {}]
  %s3 = inlined_call_operand.vmem [shape: f32[2,8,8], index: 3, kind: input, shape index: {}]
  %s4 = inlined_call_operand.vmem [shape: bf16[32,640], index: 4, kind: input, shape index: {}]
  %s5 = inlined_call_operand.vmem [shape: f32[1,640], index: 5, kind: input, shape index: {}]
  %s6 = inlined_call_operand.vmem [shape: bf16[16,512], index: 6, kind: input, shape index: {}]
  %s7 = inlined_call_operand.vmem [shape: f32[1,512], index: 7, kind: input, shape index: {}]
  %s8 = inlined_call_operand.vmem [shape: bf16[16,256], index: 8, kind: input, shape index: {}]
  %s9 = inlined_call_operand.vmem [shape: f32[1,256], index: 9, kind: input, shape index: {}]
  %s10 = inlined_call_operand.vmem [shape: bf16[32,32], index: 10, kind: input, shape index: {}]
  %s11 = inlined_call_operand.vmem [shape: f32[1,32], index: 11, kind: input, shape index: {}]
  %s12 = inlined_call_operand.vmem [shape: bf16[32,32], index: 12, kind: input, shape index: {}]
  %s13 = inlined_call_operand.vmem [shape: f32[1,32], index: 13, kind: input, shape index: {}]
  %s14 = inlined_call_operand.vmem [shape: bf16[32,32], index: 14, kind: input, shape index: {}]
  %s15 = inlined_call_operand.vmem [shape: f32[1,32], index: 15, kind: input, shape index: {}]
  %s16 = inlined_call_operand.vmem [shape: bf16[8,32], index: 16, kind: input, shape index: {}]
  %s17 = inlined_call_operand.vmem [shape: f32[1,32], index: 17, kind: input, shape index: {}]
  %s18 = inlined_call_operand.vmem [shape: f32[1,32], index: 18, kind: input, shape index: {}]
  %s19 = inlined_call_operand.vmem [shape: f32[1,32], index: 19, kind: input, shape index: {}]
  %s20 = inlined_call_operand.vmem [shape: f32[2,1,256], index: 20, kind: output, shape index: {0}]
  %s21 = inlined_call_operand.vmem [shape: f32[2,8,256], index: 21, kind: output, shape index: {1}]
  %22 = xla_tuple %s20, %s21
  %s23 = sld [smem:[#allocation0]]
  $region121: #{pgn_forward.1} parent=0
    _
  %s25 = ssub.s32 1, %s23
  %s26 = scalar_select 0, %s25, %s23
  loop: start=0, step=1, limit=4
  $region2: #{pgn_forward.1} parent=0 // loop_pre_header
    _
  $region3: #{pgn_forward.1} parent=0 // loop_header
    %s28 = sphi 0, %s32
    %p29 = scmp.ge.s32.totalorder %s28, 4
    %s38 = sphi 0, %s40
    %s41 = sphi 0, %s38
    %s42 = sphi 0, %s41
    %s58 = sphi 0, %s42
    %s64 = sphi 0, %s66
    %s67 = sphi 0, %s64
    %s68 = sphi 0, %s67
    %s84 = sphi 0, %s68
    %s90 = sphi 0, %s92
    %s93 = sphi 0, %s90
    %s94 = sphi 0, %s93
    %s110 = sphi 0, %s94
    %s116 = sphi 0, %s118
    %s119 = sphi 0, %s116
    %s120 = sphi 0, %s119
    %s136 = sphi 0, %s120
    %s140 = sphi 0, %s140
    %s142 = sphi 0, %s140
    %s143 = sphi 0, %s142
    %s157 = sphi 0, %s143
    %s161 = sphi 0, %s161
    %s163 = sphi 0, %s161
    %s164 = sphi 0, %s163
    %s178 = sphi 0, %s164
    %s182 = sphi 0, %s182
    %s184 = sphi 0, %s182
    %s185 = sphi 0, %s184
    %s199 = sphi 0, %s185
    %s203 = sphi 0, %s203
    %s205 = sphi 0, %s203
    %s206 = sphi 0, %s205
    %s220 = sphi 0, %s206
    %s224 = sphi 0, %s224
    %s226 = sphi 0, %s224
    %s227 = sphi 0, %s226
    %s241 = sphi 0, %s227
    %s245 = sphi 0, %s245
    %s247 = sphi 0, %s245
    %s248 = sphi 0, %s247
    %s262 = sphi 0, %s248
    %s266 = sphi 0, %s266
    %s268 = sphi 0, %s266
    %s269 = sphi 0, %s268
    %s283 = sphi 0, %s269
    %s287 = sphi 0, %s287
    %s289 = sphi 0, %s287
    %s290 = sphi 0, %s289
    %s304 = sphi 0, %s290
    %s308 = sphi 0, %s308
    %s310 = sphi 0, %s308
    %s311 = sphi 0, %s310
    %s325 = sphi 0, %s311
    %s329 = sphi 0, %s329
    %s331 = sphi 0, %s329
    %s332 = sphi 0, %s331
    %s346 = sphi 0, %s332
    %s350 = sphi 0, %s350
    %s352 = sphi 0, %s350
    %s353 = sphi 0, %s352
    %s367 = sphi 0, %s353
    %s371 = sphi 0, %s371
    %s373 = sphi 0, %s371
    %s374 = sphi 0, %s373
    %s388 = sphi 0, %s374
    %s392 = sphi 0, %s392
    %s394 = sphi 0, %s392
    %s395 = sphi 0, %s394
    %s409 = sphi 0, %s395
    %s413 = sphi 0, %s413
    %s415 = sphi 0, %s413
    %s416 = sphi 0, %s415
    %s430 = sphi 0, %s416
    %s434 = sphi 0, %s434
    %s436 = sphi 0, %s434
    %s437 = sphi 0, %s436
    %s451 = sphi 0, %s437
    %s455 = sphi 0, %s455
    %s457 = sphi 0, %s455
    %s458 = sphi 0, %s457
    %s472 = sphi 0, %s458
    %s478 = sphi 0, %s480
    %s481 = sphi 0, %s478
    %s482 = sphi 0, %s481
    %s498 = sphi 0, %s482
    %s504 = sphi 0, %s506
    %s507 = sphi 0, %s504
    %s508 = sphi 0, %s507
    %s524 = sphi 0, %s508
  $region4: #{pgn_forward.1} parent=0 // loop_header_branch
    %31 = sbr.rel (%p29) target = $region8
  $region5: #{pgn_forward.1} parent=0 // loop_body
    %s33 = ssub.s32 %s28, 1
    %s34 = ssub.s32 %s28, 2
    %s35 = sadd.s32 %s28, 1
    %s36 = ssub.s32 %s28, %s35
    %p37 = scmp.eq.s32.totalorder %s36, 0
    %s39 = sadd.s32 %s38, 1
    %s40 = scalar_select %p37, %s38, %s39
    %p43 = pneg %p37
    %p44 = scmp.eq.s32.totalorder %s28, 1
    %p45 = por %p43, %p44
    %p46 = scmp.ne.s32.totalorder %s38, %s41
    %p47 = scmp.eq.s32.totalorder %s28, 0
    %p48 = por %p46, %p47
    %p49 = scmp.ne.s32.totalorder %s38, %s41
    %p50 = scmp.eq.s32.totalorder %s33, 1
    %p51 = por %p49, %p50
    %p52 = scmp.ne.s32.totalorder %s41, %s42
    %p53 = scmp.eq.s32.totalorder %s33, 0
    %p54 = por %p52, %p53
    %p55 = scmp.ne.s32.totalorder %s41, %s42
    %p56 = scmp.eq.s32.totalorder %s34, 1
    %p57 = por %p55, %p56
    %p59 = scmp.ne.s32.totalorder %s42, %s58
    %p60 = scmp.eq.s32.totalorder %s34, 0
    %p61 = por %p59, %p60
    %s62 = ssub.s32 %s28, %s35
    %p63 = scmp.eq.s32.totalorder %s62, 0
    %s65 = sadd.s32 %s64, 1
    %s66 = scalar_select %p63, %s64, %s65
    %p69 = pneg %p63
    %p70 = scmp.eq.s32.totalorder %s28, 1
    %p71 = por %p69, %p70
    %p72 = scmp.ne.s32.totalorder %s64, %s67
    %p73 = scmp.eq.s32.totalorder %s28, 0
    %p74 = por %p72, %p73
    %p75 = scmp.ne.s32.totalorder %s64, %s67
    %p76 = scmp.eq.s32.totalorder %s33, 1
    %p77 = por %p75, %p76
    %p78 = scmp.ne.s32.totalorder %s67, %s68
    %p79 = scmp.eq.s32.totalorder %s33, 0
    %p80 = por %p78, %p79
    %p81 = scmp.ne.s32.totalorder %s67, %s68
    %p82 = scmp.eq.s32.totalorder %s34, 1
    %p83 = por %p81, %p82
    %p85 = scmp.ne.s32.totalorder %s68, %s84
    %p86 = scmp.eq.s32.totalorder %s34, 0
    %p87 = por %p85, %p86
    %s88 = ssub.s32 %s28, %s35
    %p89 = scmp.eq.s32.totalorder %s88, 0
    %s91 = sadd.s32 %s90, 1
    %s92 = scalar_select %p89, %s90, %s91
    %p95 = pneg %p89
    %p96 = scmp.eq.s32.totalorder %s28, 1
    %p97 = por %p95, %p96
    %p98 = scmp.ne.s32.totalorder %s90, %s93
    %p99 = scmp.eq.s32.totalorder %s28, 0
    %p100 = por %p98, %p99
    %p101 = scmp.ne.s32.totalorder %s90, %s93
    %p102 = scmp.eq.s32.totalorder %s33, 1
    %p103 = por %p101, %p102
    %p104 = scmp.ne.s32.totalorder %s93, %s94
    %p105 = scmp.eq.s32.totalorder %s33, 0
    %p106 = por %p104, %p105
    %p107 = scmp.ne.s32.totalorder %s93, %s94
    %p108 = scmp.eq.s32.totalorder %s34, 1
    %p109 = por %p107, %p108
    %p111 = scmp.ne.s32.totalorder %s94, %s110
    %p112 = scmp.eq.s32.totalorder %s34, 0
    %p113 = por %p111, %p112
    %s114 = ssub.s32 %s28, %s35
    %p115 = scmp.eq.s32.totalorder %s114, 0
    %s117 = sadd.s32 %s116, 1
    %s118 = scalar_select %p115, %s116, %s117
    %p121 = pneg %p115
    %p122 = scmp.eq.s32.totalorder %s28, 1
    %p123 = por %p121, %p122
    %p124 = scmp.ne.s32.totalorder %s116, %s119
    %p125 = scmp.eq.s32.totalorder %s28, 0
    %p126 = por %p124, %p125
    %p127 = scmp.ne.s32.totalorder %s116, %s119
    %p128 = scmp.eq.s32.totalorder %s33, 1
    %p129 = por %p127, %p128
    %p130 = scmp.ne.s32.totalorder %s119, %s120
    %p131 = scmp.eq.s32.totalorder %s33, 0
    %p132 = por %p130, %p131
    %p133 = scmp.ne.s32.totalorder %s119, %s120
    %p134 = scmp.eq.s32.totalorder %s34, 1
    %p135 = por %p133, %p134
    %p137 = scmp.ne.s32.totalorder %s120, %s136
    %p138 = scmp.eq.s32.totalorder %s34, 0
    %p139 = por %p137, %p138
    %s141 = sadd.s32 %s140, 1
    %p144 = scmp.eq.s32.totalorder %s28, 1
    %p145 = scmp.ne.s32.totalorder %s140, %s142
    %p146 = scmp.eq.s32.totalorder %s28, 0
    %p147 = por %p145, %p146
    %p148 = scmp.ne.s32.totalorder %s140, %s142
    %p149 = scmp.eq.s32.totalorder %s33, 1
    %p150 = por %p148, %p149
    %p151 = scmp.ne.s32.totalorder %s142, %s143
    %p152 = scmp.eq.s32.totalorder %s33, 0
    %p153 = por %p151, %p152
    %p154 = scmp.ne.s32.totalorder %s142, %s143
    %p155 = scmp.eq.s32.totalorder %s34, 1
    %p156 = por %p154, %p155
    %p158 = scmp.ne.s32.totalorder %s143, %s157
    %p159 = scmp.eq.s32.totalorder %s34, 0
    %p160 = por %p158, %p159
    %s162 = sadd.s32 %s161, 1
    %p165 = scmp.eq.s32.totalorder %s28, 1
    %p166 = scmp.ne.s32.totalorder %s161, %s163
    %p167 = scmp.eq.s32.totalorder %s28, 0
    %p168 = por %p166, %p167
    %p169 = scmp.ne.s32.totalorder %s161, %s163
    %p170 = scmp.eq.s32.totalorder %s33, 1
    %p171 = por %p169, %p170
    %p172 = scmp.ne.s32.totalorder %s163, %s164
    %p173 = scmp.eq.s32.totalorder %s33, 0
    %p174 = por %p172, %p173
    %p175 = scmp.ne.s32.totalorder %s163, %s164
    %p176 = scmp.eq.s32.totalorder %s34, 1
    %p177 = por %p175, %p176
    %p179 = scmp.ne.s32.totalorder %s164, %s178
    %p180 = scmp.eq.s32.totalorder %s34, 0
    %p181 = por %p179, %p180
    %s183 = sadd.s32 %s182, 1
    %p186 = scmp.eq.s32.totalorder %s28, 1
    %p187 = scmp.ne.s32.totalorder %s182, %s184
    %p188 = scmp.eq.s32.totalorder %s28, 0
    %p189 = por %p187, %p188
    %p190 = scmp.ne.s32.totalorder %s182, %s184
    %p191 = scmp.eq.s32.totalorder %s33, 1
    %p192 = por %p190, %p191
    %p193 = scmp.ne.s32.totalorder %s184, %s185
    %p194 = scmp.eq.s32.totalorder %s33, 0
    %p195 = por %p193, %p194
    %p196 = scmp.ne.s32.totalorder %s184, %s185
    %p197 = scmp.eq.s32.totalorder %s34, 1
    %p198 = por %p196, %p197
    %p200 = scmp.ne.s32.totalorder %s185, %s199
    %p201 = scmp.eq.s32.totalorder %s34, 0
    %p202 = por %p200, %p201
    %s204 = sadd.s32 %s203, 1
    %p207 = scmp.eq.s32.totalorder %s28, 1
    %p208 = scmp.ne.s32.totalorder %s203, %s205
    %p209 = scmp.eq.s32.totalorder %s28, 0
    %p210 = por %p208, %p209
    %p211 = scmp.ne.s32.totalorder %s203, %s205
    %p212 = scmp.eq.s32.totalorder %s33, 1
    %p213 = por %p211, %p212
    %p214 = scmp.ne.s32.totalorder %s205, %s206
    %p215 = scmp.eq.s32.totalorder %s33, 0
    %p216 = por %p214, %p215
    %p217 = scmp.ne.s32.totalorder %s205, %s206
    %p218 = scmp.eq.s32.totalorder %s34, 1
    %p219 = por %p217, %p218
    %p221 = scmp.ne.s32.totalorder %s206, %s220
    %p222 = scmp.eq.s32.totalorder %s34, 0
    %p223 = por %p221, %p222
    %s225 = sadd.s32 %s224, 1
    %p228 = scmp.eq.s32.totalorder %s28, 1
    %p229 = scmp.ne.s32.totalorder %s224, %s226
    %p230 = scmp.eq.s32.totalorder %s28, 0
    %p231 = por %p229, %p230
    %p232 = scmp.ne.s32.totalorder %s224, %s226
    %p233 = scmp.eq.s32.totalorder %s33, 1
    %p234 = por %p232, %p233
    %p235 = scmp.ne.s32.totalorder %s226, %s227
    %p236 = scmp.eq.s32.totalorder %s33, 0
    %p237 = por %p235, %p236
    %p238 = scmp.ne.s32.totalorder %s226, %s227
    %p239 = scmp.eq.s32.totalorder %s34, 1
    %p240 = por %p238, %p239
    %p242 = scmp.ne.s32.totalorder %s227, %s241
    %p243 = scmp.eq.s32.totalorder %s34, 0
    %p244 = por %p242, %p243
    %s246 = sadd.s32 %s245, 1
    %p249 = scmp.eq.s32.totalorder %s28, 1
    %p250 = scmp.ne.s32.totalorder %s245, %s247
    %p251 = scmp.eq.s32.totalorder %s28, 0
    %p252 = por %p250, %p251
    %p253 = scmp.ne.s32.totalorder %s245, %s247
    %p254 = scmp.eq.s32.totalorder %s33, 1
    %p255 = por %p253, %p254
    %p256 = scmp.ne.s32.totalorder %s247, %s248
    %p257 = scmp.eq.s32.totalorder %s33, 0
    %p258 = por %p256, %p257
    %p259 = scmp.ne.s32.totalorder %s247, %s248
    %p260 = scmp.eq.s32.totalorder %s34, 1
    %p261 = por %p259, %p260
    %p263 = scmp.ne.s32.totalorder %s248, %s262
    %p264 = scmp.eq.s32.totalorder %s34, 0
    %p265 = por %p263, %p264
    %s267 = sadd.s32 %s266, 1
    %p270 = scmp.eq.s32.totalorder %s28, 1
    %p271 = scmp.ne.s32.totalorder %s266, %s268
    %p272 = scmp.eq.s32.totalorder %s28, 0
    %p273 = por %p271, %p272
    %p274 = scmp.ne.s32.totalorder %s266, %s268
    %p275 = scmp.eq.s32.totalorder %s33, 1
    %p276 = por %p274, %p275
    %p277 = scmp.ne.s32.totalorder %s268, %s269
    %p278 = scmp.eq.s32.totalorder %s33, 0
    %p279 = por %p277, %p278
    %p280 = scmp.ne.s32.totalorder %s268, %s269
    %p281 = scmp.eq.s32.totalorder %s34, 1
    %p282 = por %p280, %p281
    %p284 = scmp.ne.s32.totalorder %s269, %s283
    %p285 = scmp.eq.s32.totalorder %s34, 0
    %p286 = por %p284, %p285
    %s288 = sadd.s32 %s287, 1
    %p291 = scmp.eq.s32.totalorder %s28, 1
    %p292 = scmp.ne.s32.totalorder %s287, %s289
    %p293 = scmp.eq.s32.totalorder %s28, 0
    %p294 = por %p292, %p293
    %p295 = scmp.ne.s32.totalorder %s287, %s289
    %p296 = scmp.eq.s32.totalorder %s33, 1
    %p297 = por %p295, %p296
    %p298 = scmp.ne.s32.totalorder %s289, %s290
    %p299 = scmp.eq.s32.totalorder %s33, 0
    %p300 = por %p298, %p299
    %p301 = scmp.ne.s32.totalorder %s289, %s290
    %p302 = scmp.eq.s32.totalorder %s34, 1
    %p303 = por %p301, %p302
    %p305 = scmp.ne.s32.totalorder %s290, %s304
    %p306 = scmp.eq.s32.totalorder %s34, 0
    %p307 = por %p305, %p306
    %s309 = sadd.s32 %s308, 1
    %p312 = scmp.eq.s32.totalorder %s28, 1
    %p313 = scmp.ne.s32.totalorder %s308, %s310
    %p314 = scmp.eq.s32.totalorder %s28, 0
    %p315 = por %p313, %p314
    %p316 = scmp.ne.s32.totalorder %s308, %s310
    %p317 = scmp.eq.s32.totalorder %s33, 1
    %p318 = por %p316, %p317
    %p319 = scmp.ne.s32.totalorder %s310, %s311
    %p320 = scmp.eq.s32.totalorder %s33, 0
    %p321 = por %p319, %p320
    %p322 = scmp.ne.s32.totalorder %s310, %s311
    %p323 = scmp.eq.s32.totalorder %s34, 1
    %p324 = por %p322, %p323
    %p326 = scmp.ne.s32.totalorder %s311, %s325
    %p327 = scmp.eq.s32.totalorder %s34, 0
    %p328 = por %p326, %p327
    %s330 = sadd.s32 %s329, 1
    %p333 = scmp.eq.s32.totalorder %s28, 1
    %p334 = scmp.ne.s32.totalorder %s329, %s331
    %p335 = scmp.eq.s32.totalorder %s28, 0
    %p336 = por %p334, %p335
    %p337 = scmp.ne.s32.totalorder %s329, %s331
    %p338 = scmp.eq.s32.totalorder %s33, 1
    %p339 = por %p337, %p338
    %p340 = scmp.ne.s32.totalorder %s331, %s332
    %p341 = scmp.eq.s32.totalorder %s33, 0
    %p342 = por %p340, %p341
    %p343 = scmp.ne.s32.totalorder %s331, %s332
    %p344 = scmp.eq.s32.totalorder %s34, 1
    %p345 = por %p343, %p344
    %p347 = scmp.ne.s32.totalorder %s332, %s346
    %p348 = scmp.eq.s32.totalorder %s34, 0
    %p349 = por %p347, %p348
    %s351 = sadd.s32 %s350, 1
    %p354 = scmp.eq.s32.totalorder %s28, 1
    %p355 = scmp.ne.s32.totalorder %s350, %s352
    %p356 = scmp.eq.s32.totalorder %s28, 0
    %p357 = por %p355, %p356
    %p358 = scmp.ne.s32.totalorder %s350, %s352
    %p359 = scmp.eq.s32.totalorder %s33, 1
    %p360 = por %p358, %p359
    %p361 = scmp.ne.s32.totalorder %s352, %s353
    %p362 = scmp.eq.s32.totalorder %s33, 0
    %p363 = por %p361, %p362
    %p364 = scmp.ne.s32.totalorder %s352, %s353
    %p365 = scmp.eq.s32.totalorder %s34, 1
    %p366 = por %p364, %p365
    %p368 = scmp.ne.s32.totalorder %s353, %s367
    %p369 = scmp.eq.s32.totalorder %s34, 0
    %p370 = por %p368, %p369
    %s372 = sadd.s32 %s371, 1
    %p375 = scmp.eq.s32.totalorder %s28, 1
    %p376 = scmp.ne.s32.totalorder %s371, %s373
    %p377 = scmp.eq.s32.totalorder %s28, 0
    %p378 = por %p376, %p377
    %p379 = scmp.ne.s32.totalorder %s371, %s373
    %p380 = scmp.eq.s32.totalorder %s33, 1
    %p381 = por %p379, %p380
    %p382 = scmp.ne.s32.totalorder %s373, %s374
    %p383 = scmp.eq.s32.totalorder %s33, 0
    %p384 = por %p382, %p383
    %p385 = scmp.ne.s32.totalorder %s373, %s374
    %p386 = scmp.eq.s32.totalorder %s34, 1
    %p387 = por %p385, %p386
    %p389 = scmp.ne.s32.totalorder %s374, %s388
    %p390 = scmp.eq.s32.totalorder %s34, 0
    %p391 = por %p389, %p390
    %s393 = sadd.s32 %s392, 1
    %p396 = scmp.eq.s32.totalorder %s28, 1
    %p397 = scmp.ne.s32.totalorder %s392, %s394
    %p398 = scmp.eq.s32.totalorder %s28, 0
    %p399 = por %p397, %p398
    %p400 = scmp.ne.s32.totalorder %s392, %s394
    %p401 = scmp.eq.s32.totalorder %s33, 1
    %p402 = por %p400, %p401
    %p403 = scmp.ne.s32.totalorder %s394, %s395
    %p404 = scmp.eq.s32.totalorder %s33, 0
    %p405 = por %p403, %p404
    %p406 = scmp.ne.s32.totalorder %s394, %s395
    %p407 = scmp.eq.s32.totalorder %s34, 1
    %p408 = por %p406, %p407
    %p410 = scmp.ne.s32.totalorder %s395, %s409
    %p411 = scmp.eq.s32.totalorder %s34, 0
    %p412 = por %p410, %p411
    %s414 = sadd.s32 %s413, 1
    %p417 = scmp.eq.s32.totalorder %s28, 1
    %p418 = scmp.ne.s32.totalorder %s413, %s415
    %p419 = scmp.eq.s32.totalorder %s28, 0
    %p420 = por %p418, %p419
    %p421 = scmp.ne.s32.totalorder %s413, %s415
    %p422 = scmp.eq.s32.totalorder %s33, 1
    %p423 = por %p421, %p422
    %p424 = scmp.ne.s32.totalorder %s415, %s416
    %p425 = scmp.eq.s32.totalorder %s33, 0
    %p426 = por %p424, %p425
    %p427 = scmp.ne.s32.totalorder %s415, %s416
    %p428 = scmp.eq.s32.totalorder %s34, 1
    %p429 = por %p427, %p428
    %p431 = scmp.ne.s32.totalorder %s416, %s430
    %p432 = scmp.eq.s32.totalorder %s34, 0
    %p433 = por %p431, %p432
    %s435 = sadd.s32 %s434, 1
    %p438 = scmp.eq.s32.totalorder %s28, 1
    %p439 = scmp.ne.s32.totalorder %s434, %s436
    %p440 = scmp.eq.s32.totalorder %s28, 0
    %p441 = por %p439, %p440
    %p442 = scmp.ne.s32.totalorder %s434, %s436
    %p443 = scmp.eq.s32.totalorder %s33, 1
    %p444 = por %p442, %p443
    %p445 = scmp.ne.s32.totalorder %s436, %s437
    %p446 = scmp.eq.s32.totalorder %s33, 0
    %p447 = por %p445, %p446
    %p448 = scmp.ne.s32.totalorder %s436, %s437
    %p449 = scmp.eq.s32.totalorder %s34, 1
    %p450 = por %p448, %p449
    %p452 = scmp.ne.s32.totalorder %s437, %s451
    %p453 = scmp.eq.s32.totalorder %s34, 0
    %p454 = por %p452, %p453
    %s456 = sadd.s32 %s455, 1
    %p459 = scmp.eq.s32.totalorder %s28, 1
    %p460 = scmp.ne.s32.totalorder %s455, %s457
    %p461 = scmp.eq.s32.totalorder %s28, 0
    %p462 = por %p460, %p461
    %p463 = scmp.ne.s32.totalorder %s455, %s457
    %p464 = scmp.eq.s32.totalorder %s33, 1
    %p465 = por %p463, %p464
    %p466 = scmp.ne.s32.totalorder %s457, %s458
    %p467 = scmp.eq.s32.totalorder %s33, 0
    %p468 = por %p466, %p467
    %p469 = scmp.ne.s32.totalorder %s457, %s458
    %p470 = scmp.eq.s32.totalorder %s34, 1
    %p471 = por %p469, %p470
    %p473 = scmp.ne.s32.totalorder %s458, %s472
    %p474 = scmp.eq.s32.totalorder %s34, 0
    %p475 = por %p473, %p474
    %s476 = ssub.s32 %s28, %s35
    %p477 = scmp.eq.s32.totalorder %s476, 0
    %s479 = sadd.s32 %s478, 1
    %s480 = scalar_select %p477, %s478, %s479
    %p483 = pneg %p477
    %p484 = scmp.eq.s32.totalorder %s28, 1
    %p485 = por %p483, %p484
    %p486 = scmp.ne.s32.totalorder %s478, %s481
    %p487 = scmp.eq.s32.totalorder %s28, 0
    %p488 = por %p486, %p487
    %p489 = scmp.ne.s32.totalorder %s478, %s481
    %p490 = scmp.eq.s32.totalorder %s33, 1
    %p491 = por %p489, %p490
    %p492 = scmp.ne.s32.totalorder %s481, %s482
    %p493 = scmp.eq.s32.totalorder %s33, 0
    %p494 = por %p492, %p493
    %p495 = scmp.ne.s32.totalorder %s481, %s482
    %p496 = scmp.eq.s32.totalorder %s34, 1
    %p497 = por %p495, %p496
    %p499 = scmp.ne.s32.totalorder %s482, %s498
    %p500 = scmp.eq.s32.totalorder %s34, 0
    %p501 = por %p499, %p500
    %s502 = ssub.s32 %s28, %s35
    %p503 = scmp.eq.s32.totalorder %s502, 0
    %s505 = sadd.s32 %s504, 1
    %s506 = scalar_select %p503, %s504, %s505
    %p509 = pneg %p503
    %p510 = scmp.eq.s32.totalorder %s28, 1
    %p511 = por %p509, %p510
    %p512 = scmp.ne.s32.totalorder %s504, %s507
    %p513 = scmp.eq.s32.totalorder %s28, 0
    %p514 = por %p512, %p513
    %p515 = scmp.ne.s32.totalorder %s504, %s507
    %p516 = scmp.eq.s32.totalorder %s33, 1
    %p517 = por %p515, %p516
    %p518 = scmp.ne.s32.totalorder %s507, %s508
    %p519 = scmp.eq.s32.totalorder %s33, 0
    %p520 = por %p518, %p519
    %p521 = scmp.ne.s32.totalorder %s507, %s508
    %p522 = scmp.eq.s32.totalorder %s34, 1
    %p523 = por %p521, %p522
    %p525 = scmp.ne.s32.totalorder %s508, %s524
    %p526 = scmp.eq.s32.totalorder %s34, 0
    %p527 = por %p525, %p526
    %p528 = scmp.le.s32.totalorder 1, %s28
    %p529 = scmp.lt.s32.totalorder %s28, 3
    %p530 = pnand %p528, %p529
    %p531 = pneg %p530
    // Predicated region
    $region9: #{pgn_forward.1} parent=5 // pred_check
      _
    $region10: #{pgn_forward.1} parent=5 // pred_check_branch
      %533 = sbr.rel (%p530) target = $region12
    $region11: #{pgn_forward.1} parent=5 // pred_region
      %s534 = ssub.s32 %s28, 1
      // Predicated region
      $region13: #{pgn_forward.1} parent=11 // pred_check
        %p535 = pneg %p153
      $region14: #{pgn_forward.1} parent=11 // pred_check_branch
        %537 = sbr.rel (%p535) target = $region16
      $region15: #{pgn_forward.1} parent=11 // pred_region
        _
      $region16: #{pgn_forward.1} parent=11 // pred_fallthru
        _
      // Predicated region
      $region17: #{pgn_forward.1} parent=11 // pred_check
        %p538 = pneg %p174
      $region18: #{pgn_forward.1} parent=11 // pred_check_branch
        %540 = sbr.rel (%p538) target = $region20
      $region19: #{pgn_forward.1} parent=11 // pred_region
        _
      $region20: #{pgn_forward.1} parent=11 // pred_fallthru
        _
      // Predicated region
      $region21: #{pgn_forward.1} parent=11 // pred_check
        %p541 = pneg %p195
      $region22: #{pgn_forward.1} parent=11 // pred_check_branch
        %543 = sbr.rel (%p541) target = $region24
      $region23: #{pgn_forward.1} parent=11 // pred_region
        _
      $region24: #{pgn_forward.1} parent=11 // pred_fallthru
        _
      // Predicated region
      $region25: #{pgn_forward.1} parent=11 // pred_check
        %p544 = pneg %p216
      $region26: #{pgn_forward.1} parent=11 // pred_check_branch
        %546 = sbr.rel (%p544) target = $region28
      $region27: #{pgn_forward.1} parent=11 // pred_region
        _
      $region28: #{pgn_forward.1} parent=11 // pred_fallthru
        _
      // Predicated region
      $region29: #{pgn_forward.1} parent=11 // pred_check
        %p547 = pneg %p237
      $region30: #{pgn_forward.1} parent=11 // pred_check_branch
        %549 = sbr.rel (%p547) target = $region32
      $region31: #{pgn_forward.1} parent=11 // pred_region
        _
      $region32: #{pgn_forward.1} parent=11 // pred_fallthru
        _
      // Predicated region
      $region33: #{pgn_forward.1} parent=11 // pred_check
        %p550 = pneg %p258
      $region34: #{pgn_forward.1} parent=11 // pred_check_branch
        %552 = sbr.rel (%p550) target = $region36
      $region35: #{pgn_forward.1} parent=11 // pred_region
        _
      $region36: #{pgn_forward.1} parent=11 // pred_fallthru
        _
      // Predicated region
      $region37: #{pgn_forward.1} parent=11 // pred_check
        %p553 = pneg %p279
      $region38: #{pgn_forward.1} parent=11 // pred_check_branch
        %555 = sbr.rel (%p553) target = $region40
      $region39: #{pgn_forward.1} parent=11 // pred_region
        _
      $region40: #{pgn_forward.1} parent=11 // pred_fallthru
        _
      // Predicated region
      $region41: #{pgn_forward.1} parent=11 // pred_check
        %p556 = pneg %p300
      $region42: #{pgn_forward.1} parent=11 // pred_check_branch
        %558 = sbr.rel (%p556) target = $region44
      $region43: #{pgn_forward.1} parent=11 // pred_region
        _
      $region44: #{pgn_forward.1} parent=11 // pred_fallthru
        _
      // Predicated region
      $region45: #{pgn_forward.1} parent=11 // pred_check
        %p559 = pneg %p321
      $region46: #{pgn_forward.1} parent=11 // pred_check_branch
        %561 = sbr.rel (%p559) target = $region48
      $region47: #{pgn_forward.1} parent=11 // pred_region
        _
      $region48: #{pgn_forward.1} parent=11 // pred_fallthru
        _
      // Predicated region
      $region49: #{pgn_forward.1} parent=11 // pred_check
        %p562 = pneg %p342
      $region50: #{pgn_forward.1} parent=11 // pred_check_branch
        %564 = sbr.rel (%p562) target = $region52
      $region51: #{pgn_forward.1} parent=11 // pred_region
        _
      $region52: #{pgn_forward.1} parent=11 // pred_fallthru
        _
      // Predicated region
      $region53: #{pgn_forward.1} parent=11 // pred_check
        %p565 = pneg %p363
      $region54: #{pgn_forward.1} parent=11 // pred_check_branch
        %567 = sbr.rel (%p565) target = $region56
      $region55: #{pgn_forward.1} parent=11 // pred_region
        _
      $region56: #{pgn_forward.1} parent=11 // pred_fallthru
        _
      // Predicated region
      $region57: #{pgn_forward.1} parent=11 // pred_check
        %p568 = pneg %p384
      $region58: #{pgn_forward.1} parent=11 // pred_check_branch
        %570 = sbr.rel (%p568) target = $region60
      $region59: #{pgn_forward.1} parent=11 // pred_region
        _
      $region60: #{pgn_forward.1} parent=11 // pred_fallthru
        _
      // Predicated region
      $region61: #{pgn_forward.1} parent=11 // pred_check
        %p571 = pneg %p405
      $region62: #{pgn_forward.1} parent=11 // pred_check_branch
        %573 = sbr.rel (%p571) target = $region64
      $region63: #{pgn_forward.1} parent=11 // pred_region
        _
      $region64: #{pgn_forward.1} parent=11 // pred_fallthru
        _
      // Predicated region
      $region65: #{pgn_forward.1} parent=11 // pred_check
        %p574 = pneg %p426
      $region66: #{pgn_forward.1} parent=11 // pred_check_branch
        %576 = sbr.rel (%p574) target = $region68
      $region67: #{pgn_forward.1} parent=11 // pred_region
        _
      $region68: #{pgn_forward.1} parent=11 // pred_fallthru
        _
      // Predicated region
      $region69: #{pgn_forward.1} parent=11 // pred_check
        %p577 = pneg %p447
      $region70: #{pgn_forward.1} parent=11 // pred_check_branch
        %579 = sbr.rel (%p577) target = $region72
      $region71: #{pgn_forward.1} parent=11 // pred_region
        _
      $region72: #{pgn_forward.1} parent=11 // pred_fallthru
        _
      // Predicated region
      $region73: #{pgn_forward.1} parent=11 // pred_check
        %p580 = pneg %p468
      $region74: #{pgn_forward.1} parent=11 // pred_check_branch
        %582 = sbr.rel (%p580) target = $region76
      $region75: #{pgn_forward.1} parent=11 // pred_region
        _
      $region76: #{pgn_forward.1} parent=11 // pred_fallthru
        _
    $region12: #{pgn_forward.1} parent=5 // pred_fallthru
      _
    %p583 = scmp.lt.s32.totalorder %s28, 2
    // Predicated region
    $region77: #{pgn_forward.1} parent=5 // pred_check
      %p584 = pneg %p583
    $region78: #{pgn_forward.1} parent=5 // pred_check_branch
      %586 = sbr.rel (%p584) target = $region80
    $region79: #{pgn_forward.1} parent=5 // pred_region
      // Predicated region
      $region81: #{pgn_forward.1} parent=79 // pred_check
        %p587 = pneg %p48
      $region82: #{pgn_forward.1} parent=79 // pred_check_branch
        %589 = sbr.rel (%p587) target = $region84
      $region83: #{pgn_forward.1} parent=79 // pred_region
        %p590 = scmp.lt.s32.totalorder %s28, 1
        %s591 = scalar_select %p590, %s28, 1
        %s592 = smul.addr %s591, 4
        %s593 = scalar_lea.vmem %s0, %s592
      $region84: #{pgn_forward.1} parent=79 // pred_fallthru
        _
      // Predicated region
      $region85: #{pgn_forward.1} parent=79 // pred_check
        %p594 = pneg %p74
      $region86: #{pgn_forward.1} parent=79 // pred_check_branch
        %596 = sbr.rel (%p594) target = $region88
      $region87: #{pgn_forward.1} parent=79 // pred_region
        %p597 = scmp.lt.s32.totalorder %s28, 1
        %s598 = scalar_select %p597, %s28, 1
        %s599 = smul.addr %s598, 8
        %s600 = smul.addr %s599, 4
        %s601 = scalar_lea.vmem %s1, %s600
      $region88: #{pgn_forward.1} parent=79 // pred_fallthru
        _
      // Predicated region
      $region89: #{pgn_forward.1} parent=79 // pred_check
        %p602 = pneg %p100
      $region90: #{pgn_forward.1} parent=79 // pred_check_branch
        %604 = sbr.rel (%p602) target = $region92
      $region91: #{pgn_forward.1} parent=79 // pred_region
        %p605 = scmp.lt.s32.totalorder %s28, 1
        %s606 = scalar_select %p605, %s28, 1
        %s607 = scalar_lea.vmem %s2, %s606
      $region92: #{pgn_forward.1} parent=79 // pred_fallthru
        _
      // Predicated region
      $region93: #{pgn_forward.1} parent=79 // pred_check
        %p608 = pneg %p126
      $region94: #{pgn_forward.1} parent=79 // pred_check_branch
        %610 = sbr.rel (%p608) target = $region96
      $region95: #{pgn_forward.1} parent=79 // pred_region
        %p611 = scmp.lt.s32.totalorder %s28, 1
        %s612 = scalar_select %p611, %s28, 1
        %s613 = smul.addr %s612, 8
        %s614 = scalar_lea.vmem %s3, %s613
      $region96: #{pgn_forward.1} parent=79 // pred_fallthru
        _
    $region80: #{pgn_forward.1} parent=5 // pred_fallthru
      _
    %p615 = scmp.le.s32.totalorder 1, %s28
    %p616 = scmp.lt.s32.totalorder %s28, 3
    %p617 = pnand %p615, %p616
    %p618 = pneg %p617
    // Predicated region
    $region97: #{pgn_forward.1} parent=5 // pred_check
      _
    $region98: #{pgn_forward.1} parent=5 // pred_check_branch
      %620 = sbr.rel (%p617) target = $region100
    $region99: #{pgn_forward.1} parent=5 // pred_region
      %s621 = ssub.s32 %s28, 1
      %p622 = scmp.lt.s32.totalorder %s33, 1
      %s623 = scalar_select %p622, %s33, 1
      %s624 = smul.addr %s623, 4
      %s625 = scalar_lea.vmem %s0, %s624
      %p626 = pneg %p54
      %p627 = pneg %p51
      %p628 = scmp.lt.s32.totalorder %s33, 1
      %s629 = scalar_select %p628, %s33, 1
      %s630 = smul.addr %s629, 8
      %s631 = smul.addr %s630, 4
      %s632 = scalar_lea.vmem %s1, %s631
      %p633 = pneg %p80
      %p634 = pneg %p77
      %p635 = scmp.lt.s32.totalorder %s33, 1
      %s636 = scalar_select %p635, %s33, 1
      %s637 = scalar_lea.vmem %s2, %s636
      %p638 = pneg %p106
      %p639 = pneg %p103
      %p640 = scmp.lt.s32.totalorder %s33, 1
      %s641 = scalar_select %p640, %s33, 1
      %s642 = smul.addr %s641, 8
      %s643 = scalar_lea.vmem %s3, %s642
      %p644 = pneg %p132
      %p645 = pneg %p129
      %p646 = pneg %p153
      %p647 = pneg %p150
      %p648 = pneg %p174
      %p649 = pneg %p171
      %p650 = pneg %p195
      %p651 = pneg %p192
      %p652 = pneg %p216
      %p653 = pneg %p213
      %p654 = pneg %p237
      %p655 = pneg %p234
      %p656 = pneg %p258
      %p657 = pneg %p255
      %p658 = pneg %p279
      %p659 = pneg %p276
      %p660 = pneg %p300
      %p661 = pneg %p297
      %p662 = pneg %p321
      %p663 = pneg %p318
      %p664 = pneg %p342
      %p665 = pneg %p339
      %p666 = pneg %p363
      %p667 = pneg %p360
      %p668 = pneg %p384
      %p669 = pneg %p381
      %p670 = pneg %p405
      %p671 = pneg %p402
      %p672 = pneg %p426
      %p673 = pneg %p423
      %p674 = pneg %p447
      %p675 = pneg %p444
      %p676 = pneg %p468
      %p677 = pneg %p465
      %p678 = pneg %p494
      %p679 = pneg %p491
      %p680 = scmp.lt.s32.totalorder %s33, 1
      %s681 = scalar_select %p680, %s33, 1
      %s682 = smul.addr %s681, 2
      %s683 = scalar_lea.vmem %s20, %s682
      %p684 = pneg %p520
      %p685 = pneg %p517
      %p686 = scmp.lt.s32.totalorder %s33, 1
      %s687 = scalar_select %p686, %s33, 1
      %s688 = smul.addr %s687, 2
      %s689 = smul.addr %s688, 8
      %s690 = scalar_lea.vmem %s21, %s689
      %p691 = scmp.lt.s32.totalorder %s33, 1
      %s692 = scalar_select %p691, %s33, 1
      %s693 = smul.addr %s692, 4
      %s694 = scalar_lea.vmem %s0, %s693
      %p695 = scmp.lt.s32.totalorder %s33, 1
      %s696 = scalar_select %p695, %s33, 1
      %s697 = smul.addr %s696, 8
      %s698 = smul.addr %s697, 4
      %s699 = scalar_lea.vmem %s1, %s698
      %p700 = scmp.lt.s32.totalorder %s33, 1
      %s701 = scalar_select %p700, %s33, 1
      %s702 = scalar_lea.vmem %s2, %s701
      %p703 = scmp.lt.s32.totalorder %s33, 1
      %s704 = scalar_select %p703, %s33, 1
      %s705 = smul.addr %s704, 8
      %s706 = scalar_lea.vmem %s3, %s705
      %p707 = scmp.lt.s32.totalorder %s33, 1
      %s708 = scalar_select %p707, %s33, 1
      %s709 = smul.addr %s708, 2
      %s710 = scalar_lea.vmem %s20, %s709
      %p711 = scmp.lt.s32.totalorder %s33, 1
      %s712 = scalar_select %p711, %s33, 1
      %s713 = smul.addr %s712, 2
      %s714 = smul.addr %s713, 8
      %s715 = scalar_lea.vmem %s21, %s714
      %v717 = vld [vmem:[%s694] sm:$0xf]
      %v718 = vld [vmem:[%s4] sm:$0xff]
      %v719 = vld [vmem:[%s4 + $0x8] sm:$0xff]
      %v720 = vld [vmem:[%s4 + $0x10] sm:$0xf]
      %v721 = vld [vmem:[%s4 + $0x14] sm:$0xff]
      %v722 = vld [vmem:[%s4 + $0x1c] sm:$0xff]
      %v723 = vld [vmem:[%s4 + $0x24] sm:$0xf]
      %v724 = vld [vmem:[%s4 + $0x28] sm:$0xff]
      %v725 = vld [vmem:[%s4 + $0x30] sm:$0xff]
      %v726 = vld [vmem:[%s4 + $0x38] sm:$0xf]
      %v727 = vld [vmem:[%s4 + $0x3c] sm:$0xff]
      %v728 = vld [vmem:[%s4 + $0x44] sm:$0xff]
      %v729 = vld [vmem:[%s4 + $0x4c] sm:$0xf]
      %v730 = vld [vmem:[%s5] sm:$0x1f]
      %v732 = vlaneseq
      %v733 = vshrl.u32 %v732, 7
      %v734 = vsub.s32 0, %v733
      %v735 = vrot.slane %v730, %v734
      %v736 = vlaneseq
      %v737 = vshrl.u32 %v736, 7
      %v738 = vsub.s32 1, %v737
      %v739 = vrot.slane %v730, %v738
      %v740 = vlaneseq
      %v741 = vshrl.u32 %v740, 7
      %v742 = vsub.s32 2, %v741
      %v743 = vrot.slane %v730, %v742
      %v744 = vlaneseq
      %v745 = vshrl.u32 %v744, 7
      %v746 = vsub.s32 3, %v745
      %v747 = vrot.slane %v730, %v746
      %v748 = vlaneseq
      %v749 = vshrl.u32 %v748, 7
      %v750 = vsub.s32 4, %v749
      %v751 = vrot.slane %v730, %v750
      %v769 = vunpack.c.l.b16 %v718
      %v770 = vunpack.c.h.b16 %v718
      %v771 = vunpack.c.l.b16 %v719
      %v772 = vunpack.c.h.b16 %v719
      %v773 = vunpack.c.l.b16 %v720
      %v774 = vunpack.c.l.b16 %v721
      %v775 = vunpack.c.h.b16 %v721
      %v776 = vunpack.c.l.b16 %v722
      %v777 = vunpack.c.h.b16 %v722
      %v778 = vunpack.c.l.b16 %v723
      %v779 = vunpack.c.l.b16 %v724
      %v780 = vunpack.c.h.b16 %v724
      %v781 = vunpack.c.l.b16 %v725
      %v782 = vunpack.c.h.b16 %v725
      %v783 = vunpack.c.l.b16 %v726
      %v784 = vunpack.c.l.b16 %v727
      %v785 = vunpack.c.h.b16 %v727
      %v786 = vunpack.c.l.b16 %v728
      %v787 = vunpack.c.h.b16 %v728
      %v788 = vunpack.c.l.b16 %v729
      %v789 = vpack.c.b16 %v774, %v769
      %v790 = vpack.c.b16 %v775, %v770
      %v791 = vpack.c.b16 %v776, %v771
      %v792 = vpack.c.b16 %v777, %v772
      %v793 = vpack.c.b16 %v778, %v773
      %v794 = vpack.c.b16 %v784, %v779
      %v795 = vpack.c.b16 %v785, %v780
      %v796 = vpack.c.b16 %v786, %v781
      %v797 = vpack.c.b16 %v787, %v782
      %v798 = vpack.c.b16 %v788, %v783
      %vm809 = vcmask 261120
      %v811 = vsel %vm809, %v717, 0
      %813 = vmatprep.subr.bf16.mxu0 0
      %814 = vmatpush1.bf16.msra.mxu0 0
      %815 = vmatprep.subr.bf16.mxu0 0
      %816 = vmatpush1.bf16.msra.mxu0 0
      %817 = vmatprep.subr.bf16.mxu0 0
      %818 = vmatpush1.bf16.msra.mxu0 0
      %819 = vmatprep.subr.bf16.mxu0 0
      %820 = vmatpush1.bf16.msra.mxu0 0
      %821 = vmatprep.subr.bf16.mxu0 0
      %822 = vmatpush1.bf16.msra.mxu0 0
      %823 = vmatprep.subr.bf16.mxu0 0
      %824 = vmatpush1.bf16.msra.mxu0 0
      %825 = vmatprep.subr.bf16.mxu0 %v795
      %826 = vmatpush1.bf16.msra.mxu0 %v794
      %827 = vmatprep.subr.bf16.mxu0 %v790
      %828 = vmatpush1.bf16.msra.mxu0 %v789
      %829 = vmatprep.subr.bf16.mxu0 0
      %830 = vmatpush2.bf16.msra.mxu0 0
      %831 = vmatprep.subr.bf16.mxu0 0
      %832 = vmatpush2.bf16.msra.mxu0 0
      %833 = vmatprep.subr.bf16.mxu0 0
      %834 = vmatpush2.bf16.msra.mxu0 0
      %835 = vmatprep.subr.bf16.mxu0 0
      %836 = vmatpush2.bf16.msra.mxu0 0
      %837 = vmatprep.subr.bf16.mxu0 0
      %838 = vmatpush2.bf16.msra.mxu0 0
      %839 = vmatprep.subr.bf16.mxu0 0
      %840 = vmatpush2.bf16.msra.mxu0 0
      %841 = vmatprep.subr.bf16.mxu0 0
      %842 = vmatpush2.bf16.msra.mxu0 0
      %843 = vmatprep.subr.bf16.mxu0 0
      %844 = vmatpush2.bf16.msra.mxu0 0
      %845 = vmatprep.mubr.bf16.mxu0 0
      %846 = vmatmul.mubr.bf16.gmra.mxu0 %v811
      %v847 = vpop.f32.mrf.mxu0
      %v848 = vadd.f32 %v735, %v847
      %v849 = vpop.f32.mrf.mxu0
      %v850 = vadd.f32 %v739, %v849
      %v851 = vpop.f32.mrf.mxu0
      %v852 = vpop.f32.mrf.mxu0
      %853 = vdwg.mxu0
      %854 = vmatprep.subr.bf16.mxu0 0
      %855 = vmatpush1.bf16.msra.mxu0 0
      %856 = vmatprep.subr.bf16.mxu0 0
      %857 = vmatpush1.bf16.msra.mxu0 0
      %858 = vmatprep.subr.bf16.mxu0 0
      %859 = vmatpush1.bf16.msra.mxu0 0
      %860 = vmatprep.subr.bf16.mxu0 0
      %861 = vmatpush1.bf16.msra.mxu0 0
      %862 = vmatprep.subr.bf16.mxu0 0
      %863 = vmatpush1.bf16.msra.mxu0 0
      %864 = vmatprep.subr.bf16.mxu0 0
      %865 = vmatpush1.bf16.msra.mxu0 0
      %866 = vmatprep.subr.bf16.mxu0 %v797
      %867 = vmatpush1.bf16.msra.mxu0 %v796
      %868 = vmatprep.subr.bf16.mxu0 %v792
      %869 = vmatpush1.bf16.msra.mxu0 %v791
      %870 = vmatprep.subr.bf16.mxu0 0
      %871 = vmatpush2.bf16.msra.mxu0 0
      %872 = vmatprep.subr.bf16.mxu0 0
      %873 = vmatpush2.bf16.msra.mxu0 0
      %874 = vmatprep.subr.bf16.mxu0 0
      %875 = vmatpush2.bf16.msra.mxu0 0
      %876 = vmatprep.subr.bf16.mxu0 0
      %877 = vmatpush2.bf16.msra.mxu0 0
      %878 = vmatprep.subr.bf16.mxu0 0
      %879 = vmatpush2.bf16.msra.mxu0 0
      %880 = vmatprep.subr.bf16.mxu0 0
      %881 = vmatpush2.bf16.msra.mxu0 0
      %882 = vmatprep.subr.bf16.mxu0 0
      %883 = vmatpush2.bf16.msra.mxu0 0
      %884 = vmatprep.subr.bf16.mxu0 0
      %885 = vmatpush2.bf16.msra.mxu0 0
      %886 = vmatprep.mubr.bf16.mxu0 0
      %887 = vmatmul.mubr.bf16.gmra.mxu0 %v811
      %v888 = vpop.f32.mrf.mxu0
      %v889 = vadd.f32 %v743, %v888
      %v890 = vpop.f32.mrf.mxu0
      %v891 = vadd.f32 %v747, %v890
      %v892 = vpop.f32.mrf.mxu0
      %v893 = vpop.f32.mrf.mxu0
      %894 = vdwg.mxu0
      %895 = vmatprep.subr.bf16.mxu0 0
      %896 = vmatpush1.bf16.msra.mxu0 0
      %897 = vmatprep.subr.bf16.mxu0 0
      %898 = vmatpush1.bf16.msra.mxu0 0
      %899 = vmatprep.subr.bf16.mxu0 0
      %900 = vmatpush1.bf16.msra.mxu0 0
      %901 = vmatprep.subr.bf16.mxu0 0
      %902 = vmatpush1.bf16.msra.mxu0 0
      %903 = vmatprep.subr.bf16.mxu0 0
      %904 = vmatpush1.bf16.msra.mxu0 0
      %905 = vmatprep.subr.bf16.mxu0 0
      %906 = vmatpush1.bf16.msra.mxu0 0
      %907 = vmatprep.subr.bf16.mxu0 0
      %908 = vmatpush1.bf16.msra.mxu0 %v798
      %909 = vmatprep.subr.bf16.mxu0 0
      %910 = vmatpush1.bf16.msra.mxu0 %v793
      %911 = vmatprep.subr.bf16.mxu0 0
      %912 = vmatpush2.bf16.msra.mxu0 0
      %913 = vmatprep.subr.bf16.mxu0 0
      %914 = vmatpush2.bf16.msra.mxu0 0
      %915 = vmatprep.subr.bf16.mxu0 0
      %916 = vmatpush2.bf16.msra.mxu0 0
      %917 = vmatprep.subr.bf16.mxu0 0
      %918 = vmatpush2.bf16.msra.mxu0 0
      %919 = vmatprep.subr.bf16.mxu0 0
      %920 = vmatpush2.bf16.msra.mxu0 0
      %921 = vmatprep.subr.bf16.mxu0 0
      %922 = vmatpush2.bf16.msra.mxu0 0
      %923 = vmatprep.subr.bf16.mxu0 0
      %924 = vmatpush2.bf16.msra.mxu0 0
      %925 = vmatprep.subr.bf16.mxu0 0
      %926 = vmatpush2.bf16.msra.mxu0 0
      %927 = vmatprep.mubr.bf16.mxu0 0
      %928 = vmatmul.mubr.bf16.gmra.mxu0 %v811
      %v929 = vpop.f32.mrf.mxu0
      %v930 = vadd.f32 %v751, %v929
      %v931 = vpop.f32.mrf.mxu0
      %v932 = vpop.f32.mrf.mxu0
      %v933 = vpop.f32.mrf.mxu0
      %934 = vdwg.mxu0
      %v935 = vld [vmem:[%s699] sm:$0xf]
      %v936 = vld [vmem:[%s699 + $0x4] sm:$0xf]
      %v937 = vld [vmem:[%s699 + $0x8] sm:$0xf]
      %v938 = vld [vmem:[%s699 + $0xc] sm:$0xf]
      %v939 = vld [vmem:[%s699 + $0x10] sm:$0xf]
      %v940 = vld [vmem:[%s699 + $0x14] sm:$0xf]
      %v941 = vld [vmem:[%s699 + $0x18] sm:$0xf]
      %v942 = vld [vmem:[%s699 + $0x1c] sm:$0xf]
      %v943 = vld [vmem:[%s6] sm:$0xff]
      %v944 = vld [vmem:[%s6 + $0x8] sm:$0xff]
      %v945 = vld [vmem:[%s6 + $0x10] sm:$0xff]
      %v946 = vld [vmem:[%s6 + $0x18] sm:$0xff]
      %v947 = vld [vmem:[%s7] sm:$0xf]
      %v949 = vlaneseq
      %v950 = vshrl.u32 %v949, 7
      %v951 = vsub.s32 0, %v950
      %v952 = vrot.slane %v947, %v951
      %v953 = vlaneseq
      %v954 = vshrl.u32 %v953, 7
      %v955 = vsub.s32 1, %v954
      %v956 = vrot.slane %v947, %v955
      %v957 = vlaneseq
      %v958 = vshrl.u32 %v957, 7
      %v959 = vsub.s32 2, %v958
      %v960 = vrot.slane %v947, %v959
      %v961 = vlaneseq
      %v962 = vshrl.u32 %v961, 7
      %v963 = vsub.s32 3, %v962
      %v964 = vrot.slane %v947, %v963
      %v977 = vunpack.c.l.b16 %v935
      %v978 = vunpack.c.l.b16 %v936
      %v979 = vunpack.c.l.b16 %v937
      %v980 = vunpack.c.l.b16 %v938
      %v981 = vunpack.c.l.b16 %v939
      %v982 = vunpack.c.l.b16 %v940
      %v983 = vunpack.c.l.b16 %v941
      %v984 = vunpack.c.l.b16 %v942
      %v985 = vpack.c.b16 %v978, %v977
      %v986 = vpack.c.b16 %v980, %v979
      %v987 = vpack.c.b16 %v982, %v981
      %v988 = vpack.c.b16 %v984, %v983
      %v993 = vunpack.c.l.b16 %v943
      %v994 = vunpack.c.h.b16 %v943
      %v995 = vunpack.c.l.b16 %v944
      %v996 = vunpack.c.h.b16 %v944
      %v997 = vunpack.c.l.b16 %v945
      %v998 = vunpack.c.h.b16 %v945
      %v999 = vunpack.c.l.b16 %v946
      %v1000 = vunpack.c.h.b16 %v946
      %v1001 = vpack.c.b16 %v997, %v993
      %v1002 = vpack.c.b16 %v998, %v994
      %v1003 = vpack.c.b16 %v999, %v995
      %v1004 = vpack.c.b16 %v1000, %v996
      %vm1009 = vcmask 130048
      %v1011 = vsel %vm1009, %v985, 0
      %v1014 = vsel %vm1009, %v986, 0
      %v1017 = vsel %vm1009, %v987, 0
      %v1020 = vsel %vm1009, %v988, 0
      %1022 = vmatprep.subr.bf16.mxu0 0
      %1023 = vmatpush1.bf16.msra.mxu0 0
      %1024 = vmatprep.subr.bf16.mxu0 0
      %1025 = vmatpush1.bf16.msra.mxu0 0
      %1026 = vmatprep.subr.bf16.mxu0 0
      %1027 = vmatpush1.bf16.msra.mxu0 0
      %1028 = vmatprep.subr.bf16.mxu0 0
      %1029 = vmatpush1.bf16.msra.mxu0 0
      %1030 = vmatprep.subr.bf16.mxu0 0
      %1031 = vmatpush1.bf16.msra.mxu0 0
      %1032 = vmatprep.subr.bf16.mxu0 0
      %1033 = vmatpush1.bf16.msra.mxu0 0
      %1034 = vmatprep.subr.bf16.mxu0 0
      %1035 = vmatpush1.bf16.msra.mxu0 0
      %1036 = vmatprep.subr.bf16.mxu0 %v1002
      %1037 = vmatpush1.bf16.msra.mxu0 %v1001
      %1038 = vmatprep.subr.bf16.mxu0 0
      %1039 = vmatpush2.bf16.msra.mxu0 0
      %1040 = vmatprep.subr.bf16.mxu0 0
      %1041 = vmatpush2.bf16.msra.mxu0 0
      %1042 = vmatprep.subr.bf16.mxu0 0
      %1043 = vmatpush2.bf16.msra.mxu0 0
      %1044 = vmatprep.subr.bf16.mxu0 0
      %1045 = vmatpush2.bf16.msra.mxu0 0
      %1046 = vmatprep.subr.bf16.mxu0 0
      %1047 = vmatpush2.bf16.msra.mxu0 0
      %1048 = vmatprep.subr.bf16.mxu0 0
      %1049 = vmatpush2.bf16.msra.mxu0 0
      %1050 = vmatprep.subr.bf16.mxu0 0
      %1051 = vmatpush2.bf16.msra.mxu0 0
      %1052 = vmatprep.subr.bf16.mxu0 0
      %1053 = vmatpush2.bf16.msra.mxu0 0
      %1054 = vmatprep.mubr.bf16.mxu0 0
      %1055 = vmatmul.mubr.bf16.gmra.mxu0 %v1011
      %v1056 = vpop.f32.mrf.mxu0
      %v1057 = vadd.f32 %v952, %v1056
      %v1058 = vpop.f32.mrf.mxu0
      %v1059 = vadd.f32 %v956, %v1058
      %v1060 = vpop.f32.mrf.mxu0
      %v1061 = vadd.f32 %v952, %v1060
      %v1062 = vpop.f32.mrf.mxu0
      %v1063 = vadd.f32 %v956, %v1062
      %1064 = vmatprep.mubr.bf16.mxu0 0
      %1065 = vmatmul.mubr.bf16.gmra.mxu0 %v1014
      %v1066 = vpop.f32.mrf.mxu0
      %v1067 = vadd.f32 %v952, %v1066
      %v1068 = vpop.f32.mrf.mxu0
      %v1069 = vadd.f32 %v956, %v1068
      %v1070 = vpop.f32.mrf.mxu0
      %v1071 = vadd.f32 %v952, %v1070
      %v1072 = vpop.f32.mrf.mxu0
      %v1073 = vadd.f32 %v956, %v1072
      %1074 = vmatprep.mubr.bf16.mxu0 0
      %1075 = vmatmul.mubr.bf16.gmra.mxu0 %v1017
      %v1076 = vpop.f32.mrf.mxu0
      %v1077 = vadd.f32 %v952, %v1076
      %v1078 = vpop.f32.mrf.mxu0
      %v1079 = vadd.f32 %v956, %v1078
      %v1080 = vpop.f32.mrf.mxu0
      %v1081 = vadd.f32 %v952, %v1080
      %v1082 = vpop.f32.mrf.mxu0
      %v1083 = vadd.f32 %v956, %v1082
      %1084 = vmatprep.mubr.bf16.mxu0 0
      %1085 = vmatmul.mubr.bf16.gmra.mxu0 %v1020
      %v1086 = vpop.f32.mrf.mxu0
      %v1087 = vadd.f32 %v952, %v1086
      %v1088 = vpop.f32.mrf.mxu0
      %v1089 = vadd.f32 %v956, %v1088
      %v1090 = vpop.f32.mrf.mxu0
      %v1091 = vadd.f32 %v952, %v1090
      %v1092 = vpop.f32.mrf.mxu0
      %v1093 = vadd.f32 %v956, %v1092
      %1094 = vdwg.mxu0
      %1095 = vmatprep.subr.bf16.mxu0 0
      %1096 = vmatpush1.bf16.msra.mxu0 0
      %1097 = vmatprep.subr.bf16.mxu0 0
      %1098 = vmatpush1.bf16.msra.mxu0 0
      %1099 = vmatprep.subr.bf16.mxu0 0
      %1100 = vmatpush1.bf16.msra.mxu0 0
      %1101 = vmatprep.subr.bf16.mxu0 0
      %1102 = vmatpush1.bf16.msra.mxu0 0
      %1103 = vmatprep.subr.bf16.mxu0 0
      %1104 = vmatpush1.bf16.msra.mxu0 0
      %1105 = vmatprep.subr.bf16.mxu0 0
      %1106 = vmatpush1.bf16.msra.mxu0 0
      %1107 = vmatprep.subr.bf16.mxu0 0
      %1108 = vmatpush1.bf16.msra.mxu0 0
      %1109 = vmatprep.subr.bf16.mxu0 %v1004
      %1110 = vmatpush1.bf16.msra.mxu0 %v1003
      %1111 = vmatprep.subr.bf16.mxu0 0
      %1112 = vmatpush2.bf16.msra.mxu0 0
      %1113 = vmatprep.subr.bf16.mxu0 0
      %1114 = vmatpush2.bf16.msra.mxu0 0
      %1115 = vmatprep.subr.bf16.mxu0 0
      %1116 = vmatpush2.bf16.msra.mxu0 0
      %1117 = vmatprep.subr.bf16.mxu0 0
      %1118 = vmatpush2.bf16.msra.mxu0 0
      %1119 = vmatprep.subr.bf16.mxu0 0
      %1120 = vmatpush2.bf16.msra.mxu0 0
      %1121 = vmatprep.subr.bf16.mxu0 0
      %1122 = vmatpush2.bf16.msra.mxu0 0
      %1123 = vmatprep.subr.bf16.mxu0 0
      %1124 = vmatpush2.bf16.msra.mxu0 0
      %1125 = vmatprep.subr.bf16.mxu0 0
      %1126 = vmatpush2.bf16.msra.mxu0 0
      %1127 = vmatprep.mubr.bf16.mxu0 0
      %1128 = vmatmul.mubr.bf16.gmra.mxu0 %v1011
      %v1129 = vpop.f32.mrf.mxu0
      %v1130 = vadd.f32 %v960, %v1129
      %v1131 = vpop.f32.mrf.mxu0
      %v1132 = vadd.f32 %v964, %v1131
      %v1133 = vpop.f32.mrf.mxu0
      %v1134 = vadd.f32 %v960, %v1133
      %v1135 = vpop.f32.mrf.mxu0
      %v1136 = vadd.f32 %v964, %v1135
      %1137 = vmatprep.mubr.bf16.mxu0 0
      %1138 = vmatmul.mubr.bf16.gmra.mxu0 %v1014
      %v1139 = vpop.f32.mrf.mxu0
      %v1140 = vadd.f32 %v960, %v1139
      %v1141 = vpop.f32.mrf.mxu0
      %v1142 = vadd.f32 %v964, %v1141
      %v1143 = vpop.f32.mrf.mxu0
      %v1144 = vadd.f32 %v960, %v1143
      %v1145 = vpop.f32.mrf.mxu0
      %v1146 = vadd.f32 %v964, %v1145
      %1147 = vmatprep.mubr.bf16.mxu0 0
      %1148 = vmatmul.mubr.bf16.gmra.mxu0 %v1017
      %v1149 = vpop.f32.mrf.mxu0
      %v1150 = vadd.f32 %v960, %v1149
      %v1151 = vpop.f32.mrf.mxu0
      %v1152 = vadd.f32 %v964, %v1151
      %v1153 = vpop.f32.mrf.mxu0
      %v1154 = vadd.f32 %v960, %v1153
      %v1155 = vpop.f32.mrf.mxu0
      %v1156 = vadd.f32 %v964, %v1155
      %1157 = vmatprep.mubr.bf16.mxu0 0
      %1158 = vmatmul.mubr.bf16.gmra.mxu0 %v1020
      %v1159 = vpop.f32.mrf.mxu0
      %v1160 = vadd.f32 %v960, %v1159
      %v1161 = vpop.f32.mrf.mxu0
      %v1162 = vadd.f32 %v964, %v1161
      %v1163 = vpop.f32.mrf.mxu0
      %v1164 = vadd.f32 %v960, %v1163
      %v1165 = vpop.f32.mrf.mxu0
      %v1166 = vadd.f32 %v964, %v1165
      %1167 = vdwg.mxu0
      %v1168 = vld [vmem:[%s702] sm:$0x1]
      %v1169 = vld [vmem:[%s8] sm:$0xff]
      %v1170 = vld [vmem:[%s8 + $0x8] sm:$0xff]
      %v1171 = vld [vmem:[%s9] sm:$0x3]
      %v1174 = vunpack.c.l.b16 %v1169
      %v1175 = vunpack.c.h.b16 %v1169
      %v1176 = vunpack.c.l.b16 %v1170
      %v1177 = vunpack.c.h.b16 %v1170
      %v1178 = vpack.c.b16 %v1176, %v1174
      %v1179 = vpack.c.b16 %v1177, %v1175
      %v1183 = vlaneseq
      %v1184 = vshrl.u32 %v1183, 7
      %v1185 = vsub.s32 0, %v1184
      %v1186 = vrot.slane %v1171, %v1185
      %v1187 = vlaneseq
      %v1188 = vshrl.u32 %v1187, 7
      %v1189 = vsub.s32 1, %v1188
      %v1190 = vrot.slane %v1171, %v1189
      %v1194 = vsel %vm1009, %v1168, 0
      %1196 = vmatprep.subr.bf16.mxu0 0
      %1197 = vmatpush1.bf16.msra.mxu0 0
      %1198 = vmatprep.subr.bf16.mxu0 0
      %1199 = vmatpush1.bf16.msra.mxu0 0
      %1200 = vmatprep.subr.bf16.mxu0 0
      %1201 = vmatpush1.bf16.msra.mxu0 0
      %1202 = vmatprep.subr.bf16.mxu0 0
      %1203 = vmatpush1.bf16.msra.mxu0 0
      %1204 = vmatprep.subr.bf16.mxu0 0
      %1205 = vmatpush1.bf16.msra.mxu0 0
      %1206 = vmatprep.subr.bf16.mxu0 0
      %1207 = vmatpush1.bf16.msra.mxu0 0
      %1208 = vmatprep.subr.bf16.mxu0 0
      %1209 = vmatpush1.bf16.msra.mxu0 0
      %1210 = vmatprep.subr.bf16.mxu0 %v1179
      %1211 = vmatpush1.bf16.msra.mxu0 %v1178
      %1212 = vmatprep.subr.bf16.mxu0 0
      %1213 = vmatpush2.bf16.msra.mxu0 0
      %1214 = vmatprep.subr.bf16.mxu0 0
      %1215 = vmatpush2.bf16.msra.mxu0 0
      %1216 = vmatprep.subr.bf16.mxu0 0
      %1217 = vmatpush2.bf16.msra.mxu0 0
      %1218 = vmatprep.subr.bf16.mxu0 0
      %1219 = vmatpush2.bf16.msra.mxu0 0
      %1220 = vmatprep.subr.bf16.mxu0 0
      %1221 = vmatpush2.bf16.msra.mxu0 0
      %1222 = vmatprep.subr.bf16.mxu0 0
      %1223 = vmatpush2.bf16.msra.mxu0 0
      %1224 = vmatprep.subr.bf16.mxu0 0
      %1225 = vmatpush2.bf16.msra.mxu0 0
      %1226 = vmatprep.subr.bf16.mxu0 0
      %1227 = vmatpush2.bf16.msra.mxu0 0
      %1228 = vmatprep.mubr.bf16.mxu0 0
      %1229 = vmatmul.mubr.bf16.gmra.mxu0 %v1194
      %v1230 = vpop.f32.mrf.mxu0
      %v1231 = vadd.f32 %v1186, %v1230
      %v1232 = vpop.f32.mrf.mxu0
      %v1233 = vadd.f32 %v1190, %v1232
      %v1234 = vpop.f32.mrf.mxu0
      %v1235 = vpop.f32.mrf.mxu0
      %1236 = vdwg.mxu0
      %v1238 = vcombine.high %v850, %v850
      %v1240 = vunpack.c.l.s4 1966171168
      %v1241 = vunpack.c.0.s8 %v1240
      %v1242 = vlaneseq
      %v1243 = vshrl.u32 %v1242, 7
      %v1244 = vsub.s32 %v1241, %v1243
      %v1245 = vrot.slane %v850, %v1244
      %v1247 = vunpack.c.l.s4 1966171168
      %v1248 = vunpack.c.0.s8 %v1247
      %v1249 = vlaneseq
      %v1250 = vshrl.u32 %v1249, 7
      %v1251 = vsub.s32 %v1248, %v1250
      %v1252 = vrot.slane %v1238, %v1251
      %v1253 = vcombine.high %v1245, %v1245
      %v1254 = vcombine.high %v1252, %v1252
      %v1256 = vunpack.c.l.s4 1966171168
      %v1257 = vunpack.c.0.s8 %v1256
      %v1258 = vlaneseq
      %v1259 = vshrl.u32 %v1258, 7
      %v1260 = vsub.s32 %v1257, %v1259
      %v1261 = vrot.slane %v1245, %v1260
      %v1263 = vunpack.c.l.s4 1966171168
      %v1264 = vunpack.c.0.s8 %v1263
      %v1265 = vlaneseq
      %v1266 = vshrl.u32 %v1265, 7
      %v1267 = vsub.s32 %v1264, %v1266
      %v1268 = vrot.slane %v1252, %v1267
      %v1270 = vunpack.c.l.s4 1966171168
      %v1271 = vunpack.c.0.s8 %v1270
      %v1272 = vlaneseq
      %v1273 = vshrl.u32 %v1272, 7
      %v1274 = vsub.s32 %v1271, %v1273
      %v1275 = vrot.slane %v1253, %v1274
      %v1277 = vunpack.c.l.s4 1966171168
      %v1278 = vunpack.c.0.s8 %v1277
      %v1279 = vlaneseq
      %v1280 = vshrl.u32 %v1279, 7
      %v1281 = vsub.s32 %v1278, %v1280
      %v1282 = vrot.slane %v1254, %v1281
      %v1283 = vcombine.high %v1261, %v1261
      %v1284 = vcombine.high %v1268, %v1268
      %v1285 = vcombine.high %v1275, %v1275
      %v1286 = vcombine.high %v1282, %v1282
      %v1287 = vlaneseq
      %v1288 = vshrl.u32 %v1287, 7
      %v1289 = vsub.s32 0, %v1288
      %v1290 = vrot.slane %v1261, %v1289
      %v1291 = vlaneseq
      %v1292 = vshrl.u32 %v1291, 7
      %v1293 = vsub.s32 0, %v1292
      %v1294 = vrot.slane %v1275, %v1293
      %v1295 = vlaneseq
      %v1296 = vshrl.u32 %v1295, 7
      %v1297 = vsub.s32 0, %v1296
      %v1298 = vrot.slane %v1283, %v1297
      %v1299 = vlaneseq
      %v1300 = vshrl.u32 %v1299, 7
      %v1301 = vsub.s32 0, %v1300
      %v1302 = vrot.slane %v1285, %v1301
      %v1303 = vlaneseq
      %v1304 = vshrl.u32 %v1303, 7
      %v1305 = vsub.s32 0, %v1304
      %v1306 = vrot.slane %v1268, %v1305
      %v1307 = vlaneseq
      %v1308 = vshrl.u32 %v1307, 7
      %v1309 = vsub.s32 0, %v1308
      %v1310 = vrot.slane %v1282, %v1309
      %v1311 = vlaneseq
      %v1312 = vshrl.u32 %v1311, 7
      %v1313 = vsub.s32 0, %v1312
      %v1314 = vrot.slane %v1284, %v1313
      %v1315 = vlaneseq
      %v1316 = vshrl.u32 %v1315, 7
      %v1317 = vsub.s32 0, %v1316
      %v1318 = vrot.slane %v1286, %v1317
      %v1327 = vadd.f32 %v848, %v1290
      %v1328 = vadd.f32 %v848, %v1294
      %v1329 = vadd.f32 %v848, %v1298
      %v1330 = vadd.f32 %v848, %v1302
      %v1331 = vadd.f32 %v848, %v1306
      %v1332 = vadd.f32 %v848, %v1310
      %v1333 = vadd.f32 %v848, %v1314
      %v1334 = vadd.f32 %v848, %v1318
      %v1335 = vadd.f32 %v1327, %v1057
      %v1336 = vadd.f32 %v1328, %v1061
      %v1337 = vadd.f32 %v1329, %v1067
      %v1338 = vadd.f32 %v1330, %v1071
      %v1339 = vadd.f32 %v1331, %v1077
      %v1340 = vadd.f32 %v1332, %v1081
      %v1341 = vadd.f32 %v1333, %v1087
      %v1342 = vadd.f32 %v1334, %v1091
      %v1343 = vlaneseq
      %v1344 = vshrl.u32 %v1343, 7
      %v1345 = vsub.s32 0, %v1344
      %v1346 = vrot.slane %v1231, %v1345
      %v1347 = vadd.f32 %v1335, %v1346
      %v1348 = vadd.f32 %v1336, %v1346
      %v1349 = vadd.f32 %v1337, %v1346
      %v1350 = vadd.f32 %v1338, %v1346
      %v1351 = vadd.f32 %v1339, %v1346
      %v1352 = vadd.f32 %v1340, %v1346
      %v1353 = vadd.f32 %v1341, %v1346
      %v1354 = vadd.f32 %v1342, %v1346
      %v1355 = vmax.f32 %v1347, 0.0
      %v1356 = vmax.f32 %v1348, 0.0
      %v1357 = vmax.f32 %v1349, 0.0
      %v1358 = vmax.f32 %v1350, 0.0
      %v1359 = vmax.f32 %v1351, 0.0
      %v1360 = vmax.f32 %v1352, 0.0
      %v1361 = vmax.f32 %v1353, 0.0
      %v1362 = vmax.f32 %v1354, 0.0
      %v1363 = vpack.c.bf16 %v1356, %v1355
      %v1364 = vpack.c.bf16 %v1358, %v1357
      %v1365 = vpack.c.bf16 %v1360, %v1359
      %v1366 = vpack.c.bf16 %v1362, %v1361
      %v1367 = vld [vmem:[%s10] sm:$0xf]
      %v1368 = vld [vmem:[%s10 + $0x4] sm:$0xf]
      %v1369 = vld [vmem:[%s10 + $0x8] sm:$0xf]
      %v1370 = vld [vmem:[%s10 + $0xc] sm:$0xf]
      %v1371 = vld [vmem:[%s11] sm:$0x1]
      %v1373 = vlaneseq
      %v1374 = vshrl.u32 %v1373, 7
      %v1375 = vsub.s32 0, %v1374
      %v1376 = vrot.slane %v1371, %v1375
      %v1382 = vunpack.c.l.b16 %v1367
      %v1383 = vunpack.c.l.b16 %v1368
      %v1384 = vunpack.c.l.b16 %v1369
      %v1385 = vunpack.c.l.b16 %v1370
      %v1386 = vpack.c.b16 %v1383, %v1382
      %v1387 = vpack.c.b16 %v1385, %v1384
      %v1391 = vsel %vm809, %v1363, 0
      %v1394 = vsel %vm809, %v1364, 0
      %v1397 = vsel %vm809, %v1365, 0
      %v1400 = vsel %vm809, %v1366, 0
      %1402 = vmatprep.subr.bf16.mxu0 0
      %1403 = vmatpush1.bf16.msra.mxu0 0
      %1404 = vmatprep.subr.bf16.mxu0 0
      %1405 = vmatpush1.bf16.msra.mxu0 0
      %1406 = vmatprep.subr.bf16.mxu0 0
      %1407 = vmatpush1.bf16.msra.mxu0 0
      %1408 = vmatprep.subr.bf16.mxu0 0
      %1409 = vmatpush1.bf16.msra.mxu0 0
      %1410 = vmatprep.subr.bf16.mxu0 0
      %1411 = vmatpush1.bf16.msra.mxu0 0
      %1412 = vmatprep.subr.bf16.mxu0 0
      %1413 = vmatpush1.bf16.msra.mxu0 0
      %1414 = vmatprep.subr.bf16.mxu0 0
      %1415 = vmatpush1.bf16.msra.mxu0 %v1387
      %1416 = vmatprep.subr.bf16.mxu0 0
      %1417 = vmatpush1.bf16.msra.mxu0 %v1386
      %1418 = vmatprep.subr.bf16.mxu0 0
      %1419 = vmatpush2.bf16.msra.mxu0 0
      %1420 = vmatprep.subr.bf16.mxu0 0
      %1421 = vmatpush2.bf16.msra.mxu0 0
      %1422 = vmatprep.subr.bf16.mxu0 0
      %1423 = vmatpush2.bf16.msra.mxu0 0
      %1424 = vmatprep.subr.bf16.mxu0 0
      %1425 = vmatpush2.bf16.msra.mxu0 0
      %1426 = vmatprep.subr.bf16.mxu0 0
      %1427 = vmatpush2.bf16.msra.mxu0 0
      %1428 = vmatprep.subr.bf16.mxu0 0
      %1429 = vmatpush2.bf16.msra.mxu0 0
      %1430 = vmatprep.subr.bf16.mxu0 0
      %1431 = vmatpush2.bf16.msra.mxu0 0
      %1432 = vmatprep.subr.bf16.mxu0 0
      %1433 = vmatpush2.bf16.msra.mxu0 0
      %1434 = vmatprep.mubr.bf16.mxu0 0
      %1435 = vmatmul.mubr.bf16.gmra.mxu0 %v1391
      %v1436 = vpop.f32.mrf.mxu0
      %v1437 = vadd.f32 %v1376, %v1436
      %v1438 = vpop.f32.mrf.mxu0
      %v1439 = vpop.f32.mrf.mxu0
      %v1440 = vadd.f32 %v1376, %v1439
      %v1441 = vpop.f32.mrf.mxu0
      %1442 = vmatprep.mubr.bf16.mxu0 0
      %1443 = vmatmul.mubr.bf16.gmra.mxu0 %v1394
      %v1444 = vpop.f32.mrf.mxu0
      %v1445 = vadd.f32 %v1376, %v1444
      %v1446 = vpop.f32.mrf.mxu0
      %v1447 = vpop.f32.mrf.mxu0
      %v1448 = vadd.f32 %v1376, %v1447
      %v1449 = vpop.f32.mrf.mxu0
      %1450 = vmatprep.mubr.bf16.mxu0 0
      %1451 = vmatmul.mubr.bf16.gmra.mxu0 %v1397
      %v1452 = vpop.f32.mrf.mxu0
      %v1453 = vadd.f32 %v1376, %v1452
      %v1454 = vpop.f32.mrf.mxu0
      %v1455 = vpop.f32.mrf.mxu0
      %v1456 = vadd.f32 %v1376, %v1455
      %v1457 = vpop.f32.mrf.mxu0
      %1458 = vmatprep.mubr.bf16.mxu0 0
      %1459 = vmatmul.mubr.bf16.gmra.mxu0 %v1400
      %v1460 = vpop.f32.mrf.mxu0
      %v1461 = vadd.f32 %v1376, %v1460
      %v1462 = vpop.f32.mrf.mxu0
      %v1463 = vpop.f32.mrf.mxu0
      %v1464 = vadd.f32 %v1376, %v1463
      %v1465 = vpop.f32.mrf.mxu0
      %1466 = vdwg.mxu0
      %v1467 = vmax.f32 %v1437, 0.0
      %v1468 = vmax.f32 %v1440, 0.0
      %v1469 = vmax.f32 %v1445, 0.0
      %v1470 = vmax.f32 %v1448, 0.0
      %v1471 = vmax.f32 %v1453, 0.0
      %v1472 = vmax.f32 %v1456, 0.0
      %v1473 = vmax.f32 %v1461, 0.0
      %v1474 = vmax.f32 %v1464, 0.0
      %v1475 = vpack.c.bf16 %v1468, %v1467
      %v1476 = vpack.c.bf16 %v1470, %v1469
      %v1477 = vpack.c.bf16 %v1472, %v1471
      %v1478 = vpack.c.bf16 %v1474, %v1473
      %v1479 = vld [vmem:[%s12] sm:$0xf]
      %v1480 = vld [vmem:[%s12 + $0x4] sm:$0xf]
      %v1481 = vld [vmem:[%s12 + $0x8] sm:$0xf]
      %v1482 = vld [vmem:[%s12 + $0xc] sm:$0xf]
      %v1483 = vld [vmem:[%s13] sm:$0x1]
      %v1485 = vlaneseq
      %v1486 = vshrl.u32 %v1485, 7
      %v1487 = vsub.s32 0, %v1486
      %v1488 = vrot.slane %v1483, %v1487
      %v1494 = vunpack.c.l.b16 %v1479
      %v1495 = vunpack.c.l.b16 %v1480
      %v1496 = vunpack.c.l.b16 %v1481
      %v1497 = vunpack.c.l.b16 %v1482
      %v1498 = vpack.c.b16 %v1495, %v1494
      %v1499 = vpack.c.b16 %v1497, %v1496
      %v1503 = vsel %vm809, %v1475, 0
      %v1506 = vsel %vm809, %v1476, 0
      %v1509 = vsel %vm809, %v1477, 0
      %v1512 = vsel %vm809, %v1478, 0
      %1514 = vmatprep.subr.bf16.mxu0 0
      %1515 = vmatpush1.bf16.msra.mxu0 0
      %1516 = vmatprep.subr.bf16.mxu0 0
      %1517 = vmatpush1.bf16.msra.mxu0 0
      %1518 = vmatprep.subr.bf16.mxu0 0
      %1519 = vmatpush1.bf16.msra.mxu0 0
      %1520 = vmatprep.subr.bf16.mxu0 0
      %1521 = vmatpush1.bf16.msra.mxu0 0
      %1522 = vmatprep.subr.bf16.mxu0 0
      %1523 = vmatpush1.bf16.msra.mxu0 0
      %1524 = vmatprep.subr.bf16.mxu0 0
      %1525 = vmatpush1.bf16.msra.mxu0 0
      %1526 = vmatprep.subr.bf16.mxu0 0
      %1527 = vmatpush1.bf16.msra.mxu0 %v1499
      %1528 = vmatprep.subr.bf16.mxu0 0
      %1529 = vmatpush1.bf16.msra.mxu0 %v1498
      %1530 = vmatprep.subr.bf16.mxu0 0
      %1531 = vmatpush2.bf16.msra.mxu0 0
      %1532 = vmatprep.subr.bf16.mxu0 0
      %1533 = vmatpush2.bf16.msra.mxu0 0
      %1534 = vmatprep.subr.bf16.mxu0 0
      %1535 = vmatpush2.bf16.msra.mxu0 0
      %1536 = vmatprep.subr.bf16.mxu0 0
      %1537 = vmatpush2.bf16.msra.mxu0 0
      %1538 = vmatprep.subr.bf16.mxu0 0
      %1539 = vmatpush2.bf16.msra.mxu0 0
      %1540 = vmatprep.subr.bf16.mxu0 0
      %1541 = vmatpush2.bf16.msra.mxu0 0
      %1542 = vmatprep.subr.bf16.mxu0 0
      %1543 = vmatpush2.bf16.msra.mxu0 0
      %1544 = vmatprep.subr.bf16.mxu0 0
      %1545 = vmatpush2.bf16.msra.mxu0 0
      %1546 = vmatprep.mubr.bf16.mxu0 0
      %1547 = vmatmul.mubr.bf16.gmra.mxu0 %v1503
      %v1548 = vpop.f32.mrf.mxu0
      %v1549 = vadd.f32 %v1488, %v1548
      %v1550 = vpop.f32.mrf.mxu0
      %v1551 = vpop.f32.mrf.mxu0
      %v1552 = vadd.f32 %v1488, %v1551
      %v1553 = vpop.f32.mrf.mxu0
      %1554 = vmatprep.mubr.bf16.mxu0 0
      %1555 = vmatmul.mubr.bf16.gmra.mxu0 %v1506
      %v1556 = vpop.f32.mrf.mxu0
      %v1557 = vadd.f32 %v1488, %v1556
      %v1558 = vpop.f32.mrf.mxu0
      %v1559 = vpop.f32.mrf.mxu0
      %v1560 = vadd.f32 %v1488, %v1559
      %v1561 = vpop.f32.mrf.mxu0
      %1562 = vmatprep.mubr.bf16.mxu0 0
      %1563 = vmatmul.mubr.bf16.gmra.mxu0 %v1509
      %v1564 = vpop.f32.mrf.mxu0
      %v1565 = vadd.f32 %v1488, %v1564
      %v1566 = vpop.f32.mrf.mxu0
      %v1567 = vpop.f32.mrf.mxu0
      %v1568 = vadd.f32 %v1488, %v1567
      %v1569 = vpop.f32.mrf.mxu0
      %1570 = vmatprep.mubr.bf16.mxu0 0
      %1571 = vmatmul.mubr.bf16.gmra.mxu0 %v1512
      %v1572 = vpop.f32.mrf.mxu0
      %v1573 = vadd.f32 %v1488, %v1572
      %v1574 = vpop.f32.mrf.mxu0
      %v1575 = vpop.f32.mrf.mxu0
      %v1576 = vadd.f32 %v1488, %v1575
      %v1577 = vpop.f32.mrf.mxu0
      %1578 = vdwg.mxu0
      %v1579 = vld [vmem:[%s706] sm:$0xff]
      %v1580 = vlaneseq
      %v1581 = vshrl.u32 %v1580, 7
      %v1582 = vsub.s32 0, %v1581
      %v1583 = vrot.slane %v1579, %v1582
      %1585 = vbcast.lane.b32.xlu0 %v1583, 256
      %v1586 = vpop.permute.xlu0 %1585
      %v1587 = vlaneseq
      %v1588 = vshrl.u32 %v1587, 7
      %v1589 = vsub.s32 1, %v1588
      %v1590 = vrot.slane %v1579, %v1589
      %1592 = vbcast.lane.b32.xlu0 %v1590, 256
      %v1593 = vpop.permute.xlu0 %1592
      %v1594 = vlaneseq
      %v1595 = vshrl.u32 %v1594, 7
      %v1596 = vsub.s32 2, %v1595
      %v1597 = vrot.slane %v1579, %v1596
      %1599 = vbcast.lane.b32.xlu0 %v1597, 256
      %v1600 = vpop.permute.xlu0 %1599
      %v1601 = vlaneseq
      %v1602 = vshrl.u32 %v1601, 7
      %v1603 = vsub.s32 3, %v1602
      %v1604 = vrot.slane %v1579, %v1603
      %1606 = vbcast.lane.b32.xlu0 %v1604, 256
      %v1607 = vpop.permute.xlu0 %1606
      %v1608 = vlaneseq
      %v1609 = vshrl.u32 %v1608, 7
      %v1610 = vsub.s32 4, %v1609
      %v1611 = vrot.slane %v1579, %v1610
      %1613 = vbcast.lane.b32.xlu0 %v1611, 256
      %v1614 = vpop.permute.xlu0 %1613
      %v1615 = vlaneseq
      %v1616 = vshrl.u32 %v1615, 7
      %v1617 = vsub.s32 5, %v1616
      %v1618 = vrot.slane %v1579, %v1617
      %1620 = vbcast.lane.b32.xlu0 %v1618, 256
      %v1621 = vpop.permute.xlu0 %1620
      %v1622 = vlaneseq
      %v1623 = vshrl.u32 %v1622, 7
      %v1624 = vsub.s32 6, %v1623
      %v1625 = vrot.slane %v1579, %v1624
      %1627 = vbcast.lane.b32.xlu0 %v1625, 256
      %v1628 = vpop.permute.xlu0 %1627
      %v1629 = vlaneseq
      %v1630 = vshrl.u32 %v1629, 7
      %v1631 = vsub.s32 7, %v1630
      %v1632 = vrot.slane %v1579, %v1631
      %1634 = vbcast.lane.b32.xlu0 %v1632, 256
      %v1635 = vpop.permute.xlu0 %1634
      %vm1636 = vcmp.gt.f32.partialorder %v1586, 0.5
      %vm1637 = vcmp.gt.f32.partialorder %v1593, 0.5
      %vm1638 = vcmp.gt.f32.partialorder %v1600, 0.5
      %vm1639 = vcmp.gt.f32.partialorder %v1607, 0.5
      %vm1640 = vcmp.gt.f32.partialorder %v1614, 0.5
      %vm1641 = vcmp.gt.f32.partialorder %v1621, 0.5
      %vm1642 = vcmp.gt.f32.partialorder %v1628, 0.5
      %vm1643 = vcmp.gt.f32.partialorder %v1635, 0.5
      %v1644 = vsel %vm1636, 1, 0
      %v1645 = vsel %vm1637, 1, 0
      %v1646 = vsel %vm1638, 1, 0
      %v1647 = vsel %vm1639, 1, 0
      %v1648 = vsel %vm1640, 1, 0
      %v1649 = vsel %vm1641, 1, 0
      %v1650 = vsel %vm1642, 1, 0
      %v1651 = vsel %vm1643, 1, 0
      %vm1652 = vcmp.eq.s32.totalorder %v1644, 1
      %vm1653 = vcmp.eq.s32.totalorder %v1645, 1
      %vm1654 = vcmp.eq.s32.totalorder %v1646, 1
      %vm1655 = vcmp.eq.s32.totalorder %v1647, 1
      %vm1656 = vcmp.eq.s32.totalorder %v1648, 1
      %vm1657 = vcmp.eq.s32.totalorder %v1649, 1
      %vm1658 = vcmp.eq.s32.totalorder %v1650, 1
      %vm1659 = vcmp.eq.s32.totalorder %v1651, 1
      %v1660 = vsel %vm1652, %v1549, -1e+09
      %v1661 = vsel %vm1653, %v1552, -1e+09
      %v1662 = vsel %vm1654, %v1557, -1e+09
      %v1663 = vsel %vm1655, %v1560, -1e+09
      %v1664 = vsel %vm1656, %v1565, -1e+09
      %v1665 = vsel %vm1657, %v1568, -1e+09
      %v1666 = vsel %vm1658, %v1573, -1e+09
      %v1667 = vsel %vm1659, %v1576, -1e+09
      %v1668 = vsel %vm809, %v1660, -inf
      %v1669 = vsel %vm809, %v1661, -inf
      %v1670 = vsel %vm809, %v1662, -inf
      %v1671 = vsel %vm809, %v1663, -inf
      %v1672 = vsel %vm809, %v1664, -inf
      %v1673 = vmax.f32 %v1668, %v1672
      %v1674 = vsel %vm809, %v1665, -inf
      %v1675 = vmax.f32 %v1669, %v1674
      %v1676 = vsel %vm809, %v1666, -inf
      %v1677 = vmax.f32 %v1670, %v1676
      %v1678 = vsel %vm809, %v1667, -inf
      %v1679 = vmax.f32 %v1671, %v1678
      %v1680 = vmax.f32 %v1673, %v1675
      %v1681 = vmax.f32 %v1677, %v1679
      %v1682 = vmax.f32 %v1680, %v1681
      %v1683 = vpack.c.bf16 %v1682, %v1682
      %v1684 = vld [vmem:[%s14] sm:$0xf]
      %v1685 = vld [vmem:[%s14 + $0x4] sm:$0xf]
      %v1686 = vld [vmem:[%s14 + $0x8] sm:$0xf]
      %v1687 = vld [vmem:[%s14 + $0xc] sm:$0xf]
      %v1688 = vld [vmem:[%s15] sm:$0x1]
      %v1690 = vlaneseq
      %v1691 = vshrl.u32 %v1690, 7
      %v1692 = vsub.s32 0, %v1691
      %v1693 = vrot.slane %v1688, %v1692
      %v1699 = vunpack.c.l.b16 %v1684
      %v1700 = vunpack.c.l.b16 %v1685
      %v1701 = vunpack.c.l.b16 %v1686
      %v1702 = vunpack.c.l.b16 %v1687
      %v1703 = vpack.c.b16 %v1700, %v1699
      %v1704 = vpack.c.b16 %v1702, %v1701
      %v1708 = vsel %vm809, %v1683, 0
      %1710 = vmatprep.subr.bf16.mxu0 0
      %1711 = vmatpush1.bf16.msra.mxu0 0
      %1712 = vmatprep.subr.bf16.mxu0 0
      %1713 = vmatpush1.bf16.msra.mxu0 0
      %1714 = vmatprep.subr.bf16.mxu0 0
      %1715 = vmatpush1.bf16.msra.mxu0 0
      %1716 = vmatprep.subr.bf16.mxu0 0
      %1717 = vmatpush1.bf16.msra.mxu0 0
      %1718 = vmatprep.subr.bf16.mxu0 0
      %1719 = vmatpush1.bf16.msra.mxu0 0
      %1720 = vmatprep.subr.bf16.mxu0 0
      %1721 = vmatpush1.bf16.msra.mxu0 0
      %1722 = vmatprep.subr.bf16.mxu0 0
      %1723 = vmatpush1.bf16.msra.mxu0 %v1704
      %1724 = vmatprep.subr.bf16.mxu0 0
      %1725 = vmatpush1.bf16.msra.mxu0 %v1703
      %1726 = vmatprep.subr.bf16.mxu0 0
      %1727 = vmatpush2.bf16.msra.mxu0 0
      %1728 = vmatprep.subr.bf16.mxu0 0
      %1729 = vmatpush2.bf16.msra.mxu0 0
      %1730 = vmatprep.subr.bf16.mxu0 0
      %1731 = vmatpush2.bf16.msra.mxu0 0
      %1732 = vmatprep.subr.bf16.mxu0 0
      %1733 = vmatpush2.bf16.msra.mxu0 0
      %1734 = vmatprep.subr.bf16.mxu0 0
      %1735 = vmatpush2.bf16.msra.mxu0 0
      %1736 = vmatprep.subr.bf16.mxu0 0
      %1737 = vmatpush2.bf16.msra.mxu0 0
      %1738 = vmatprep.subr.bf16.mxu0 0
      %1739 = vmatpush2.bf16.msra.mxu0 0
      %1740 = vmatprep.subr.bf16.mxu0 0
      %1741 = vmatpush2.bf16.msra.mxu0 0
      %1742 = vmatprep.mubr.bf16.mxu0 0
      %1743 = vmatmul.mubr.bf16.gmra.mxu0 %v1708
      %v1744 = vpop.f32.mrf.mxu0
      %v1745 = vadd.f32 %v1693, %v1744
      %v1746 = vpop.f32.mrf.mxu0
      %v1747 = vpop.f32.mrf.mxu0
      %v1748 = vpop.f32.mrf.mxu0
      %1749 = vdwg.mxu0
      %v1750 = vadd.f32 %v930, %v1745
      %v1751 = vmax.f32 %v1750, 0.0
      %v1752 = vsel %vm809, %v1751, 0.0
      %1753 = vadd.xlane.f32.xlu0 %v1752
      %v1754 = vpop.xlane.xlu0 %1753
      %v1755 = vrcp.pop 32.0
      %v1756 = vmul.f32 %v1754, %v1755
      %v1757 = vsub.f32 %v1751, %v1756
      %v1758 = vmul.f32 %v1757, %v1757
      %v1759 = vsel %vm809, %v1758, 0.0
      %1760 = vadd.xlane.f32.xlu0 %v1759
      %v1761 = vpop.xlane.xlu0 %1760
      %v1762 = vmul.f32 %v1761, %v1755
      %v1763 = vadd.f32 %v1762, 1e-05
      %v1764 = vrsqrt.pop %v1763
      %v1765 = vmul.f32 %v1757, %v1764
      %v1766 = vld [vmem:[%s18] sm:$0x1]
      %v1768 = vlaneseq
      %v1769 = vshrl.u32 %v1768, 7
      %v1770 = vsub.s32 0, %v1769
      %v1771 = vrot.slane %v1766, %v1770
      %v1773 = vmul.f32 %v1765, %v1771
      %v1774 = vld [vmem:[%s19] sm:$0x1]
      %v1776 = vlaneseq
      %v1777 = vshrl.u32 %v1776, 7
      %v1778 = vsub.s32 0, %v1777
      %v1779 = vrot.slane %v1774, %v1778
      %v1781 = vadd.f32 %v1773, %v1779
      %v1783 = vrot.slane %v1781, 1
      %1784 = vrot.lane.b32.xlu0 %v1783, 32
      %v1785 = vpop.permute.xlu0 %1784
      %v1787 = vrot.slane %v1781, 2
      %1788 = vrot.lane.b32.xlu0 %v1787, 64
      %v1789 = vpop.permute.xlu0 %1788
      %v1791 = vrot.slane %v1781, 3
      %1792 = vrot.lane.b32.xlu0 %v1791, 96
      %v1793 = vpop.permute.xlu0 %1792
      %v1795 = vrot.slane %v1781, 4
      %v1797 = vrot.slane %v1781, 5
      %1798 = vrot.lane.b32.xlu0 %v1797, 32
      %v1799 = vpop.permute.xlu0 %1798
      %v1801 = vrot.slane %v1781, 6
      %1802 = vrot.lane.b32.xlu0 %v1801, 64
      %v1803 = vpop.permute.xlu0 %1802
      %v1805 = vrot.slane %v1781, 7
      %1806 = vrot.lane.b32.xlu0 %v1805, 96
      %v1807 = vpop.permute.xlu0 %1806
      %v1809 = vsel %vm809, %v1781, %v1785
      %vm1810 = vcmask 523264
      %v1811 = vsel %vm1810, %v1809, %v1789
      %vm1812 = vcmask 785408
      %v1813 = vsel %vm1812, %v1811, %v1793
      %v1814 = vsel %vm809, %v1795, %v1799
      %v1815 = vsel %vm1810, %v1814, %v1803
      %v1816 = vsel %vm1812, %v1815, %v1807
      %v1819 = vcombine.low %v1813, %v1816
      %v1821 = vunpack.c.l.s4 1966171168
      %v1822 = vunpack.c.0.s8 %v1821
      %v1823 = vlaneseq
      %v1824 = vshrl.u32 %v1823, 7
      %v1825 = vsub.s32 %v1822, %v1824
      %v1826 = vrot.slane %v1819, %v1825
      %v1828 = vunpack.c.l.s4 1966171168
      %v1829 = vunpack.c.0.s8 %v1828
      %v1830 = vlaneseq
      %v1831 = vshrl.u32 %v1830, 7
      %v1832 = vsub.s32 %v1829, %v1831
      %v1833 = vrot.slane %v1826, %v1832
      %v1835 = vlaneseq
      %vm1836 = vcmp.ge.s32.totalorder %v1835, 0
      %vm1837 = vcmp.lt.s32.totalorder %v1835, 256
      %vm1838 = vmand %vm1836, %vm1837
      %1839 = vst.msk [vmem:[%s710] sm:$0x3] %vm1838, %v1833
      %v1841 = vcombine.high %v889, %v889
      %v1843 = vunpack.c.l.s4 1966171168
      %v1844 = vunpack.c.0.s8 %v1843
      %v1845 = vlaneseq
      %v1846 = vshrl.u32 %v1845, 7
      %v1847 = vsub.s32 %v1844, %v1846
      %v1848 = vrot.slane %v889, %v1847
      %v1850 = vunpack.c.l.s4 1966171168
      %v1851 = vunpack.c.0.s8 %v1850
      %v1852 = vlaneseq
      %v1853 = vshrl.u32 %v1852, 7
      %v1854 = vsub.s32 %v1851, %v1853
      %v1855 = vrot.slane %v1841, %v1854
      %v1856 = vcombine.high %v1848, %v1848
      %v1857 = vcombine.high %v1855, %v1855
      %v1859 = vunpack.c.l.s4 1966171168
      %v1860 = vunpack.c.0.s8 %v1859
      %v1861 = vlaneseq
      %v1862 = vshrl.u32 %v1861, 7
      %v1863 = vsub.s32 %v1860, %v1862
      %v1864 = vrot.slane %v1848, %v1863
      %v1866 = vunpack.c.l.s4 1966171168
      %v1867 = vunpack.c.0.s8 %v1866
      %v1868 = vlaneseq
      %v1869 = vshrl.u32 %v1868, 7
      %v1870 = vsub.s32 %v1867, %v1869
      %v1871 = vrot.slane %v1855, %v1870
      %v1873 = vunpack.c.l.s4 1966171168
      %v1874 = vunpack.c.0.s8 %v1873
      %v1875 = vlaneseq
      %v1876 = vshrl.u32 %v1875, 7
      %v1877 = vsub.s32 %v1874, %v1876
      %v1878 = vrot.slane %v1856, %v1877
      %v1880 = vunpack.c.l.s4 1966171168
      %v1881 = vunpack.c.0.s8 %v1880
      %v1882 = vlaneseq
      %v1883 = vshrl.u32 %v1882, 7
      %v1884 = vsub.s32 %v1881, %v1883
      %v1885 = vrot.slane %v1857, %v1884
      %v1886 = vcombine.high %v1864, %v1864
      %v1887 = vcombine.high %v1871, %v1871
      %v1888 = vcombine.high %v1878, %v1878
      %v1889 = vcombine.high %v1885, %v1885
      %v1890 = vlaneseq
      %v1891 = vshrl.u32 %v1890, 7
      %v1892 = vsub.s32 0, %v1891
      %v1893 = vrot.slane %v1864, %v1892
      %v1894 = vlaneseq
      %v1895 = vshrl.u32 %v1894, 7
      %v1896 = vsub.s32 0, %v1895
      %v1897 = vrot.slane %v1878, %v1896
      %v1898 = vlaneseq
      %v1899 = vshrl.u32 %v1898, 7
      %v1900 = vsub.s32 0, %v1899
      %v1901 = vrot.slane %v1886, %v1900
      %v1902 = vlaneseq
      %v1903 = vshrl.u32 %v1902, 7
      %v1904 = vsub.s32 0, %v1903
      %v1905 = vrot.slane %v1888, %v1904
      %v1906 = vlaneseq
      %v1907 = vshrl.u32 %v1906, 7
      %v1908 = vsub.s32 0, %v1907
      %v1909 = vrot.slane %v1871, %v1908
      %v1910 = vlaneseq
      %v1911 = vshrl.u32 %v1910, 7
      %v1912 = vsub.s32 0, %v1911
      %v1913 = vrot.slane %v1885, %v1912
      %v1914 = vlaneseq
      %v1915 = vshrl.u32 %v1914, 7
      %v1916 = vsub.s32 0, %v1915
      %v1917 = vrot.slane %v1887, %v1916
      %v1918 = vlaneseq
      %v1919 = vshrl.u32 %v1918, 7
      %v1920 = vsub.s32 0, %v1919
      %v1921 = vrot.slane %v1889, %v1920
      %v1930 = vadd.f32 %v1893, %v1059
      %v1931 = vadd.f32 %v1897, %v1063
      %v1932 = vadd.f32 %v1901, %v1069
      %v1933 = vadd.f32 %v1905, %v1073
      %v1934 = vadd.f32 %v1909, %v1079
      %v1935 = vadd.f32 %v1913, %v1083
      %v1936 = vadd.f32 %v1917, %v1089
      %v1937 = vadd.f32 %v1921, %v1093
      %v1946 = vrot.slane %v1130, 1
      %v1947 = vrot.slane %v1134, 1
      %v1948 = vrot.slane %v1140, 1
      %v1949 = vrot.slane %v1144, 1
      %v1950 = vrot.slane %v1150, 1
      %v1951 = vrot.slane %v1154, 1
      %v1952 = vrot.slane %v1160, 1
      %v1953 = vrot.slane %v1164, 1
      %1954 = vrot.lane.b32.xlu0 %v1946, 8
      %v1955 = vpop.permute.xlu0 %1954
      %1956 = vrot.lane.b32.xlu0 %v1947, 8
      %v1957 = vpop.permute.xlu0 %1956
      %1958 = vrot.lane.b32.xlu0 %v1948, 8
      %v1959 = vpop.permute.xlu0 %1958
      %1960 = vrot.lane.b32.xlu0 %v1949, 8
      %v1961 = vpop.permute.xlu0 %1960
      %1962 = vrot.lane.b32.xlu0 %v1950, 8
      %v1963 = vpop.permute.xlu0 %1962
      %1964 = vrot.lane.b32.xlu0 %v1951, 8
      %v1965 = vpop.permute.xlu0 %1964
      %1966 = vrot.lane.b32.xlu0 %v1952, 8
      %v1967 = vpop.permute.xlu0 %1966
      %1968 = vrot.lane.b32.xlu0 %v1953, 8
      %v1969 = vpop.permute.xlu0 %1968
      %v1978 = vrot.slane %v1130, 2
      %v1979 = vrot.slane %v1134, 2
      %v1980 = vrot.slane %v1140, 2
      %v1981 = vrot.slane %v1144, 2
      %v1982 = vrot.slane %v1150, 2
      %v1983 = vrot.slane %v1154, 2
      %v1984 = vrot.slane %v1160, 2
      %v1985 = vrot.slane %v1164, 2
      %1986 = vrot.lane.b32.xlu0 %v1978, 16
      %v1987 = vpop.permute.xlu0 %1986
      %1988 = vrot.lane.b32.xlu0 %v1979, 16
      %v1989 = vpop.permute.xlu0 %1988
      %1990 = vrot.lane.b32.xlu0 %v1980, 16
      %v1991 = vpop.permute.xlu0 %1990
      %1992 = vrot.lane.b32.xlu0 %v1981, 16
      %v1993 = vpop.permute.xlu0 %1992
      %1994 = vrot.lane.b32.xlu0 %v1982, 16
      %v1995 = vpop.permute.xlu0 %1994
      %1996 = vrot.lane.b32.xlu0 %v1983, 16
      %v1997 = vpop.permute.xlu0 %1996
      %1998 = vrot.lane.b32.xlu0 %v1984, 16
      %v1999 = vpop.permute.xlu0 %1998
      %2000 = vrot.lane.b32.xlu0 %v1985, 16
      %v2001 = vpop.permute.xlu0 %2000
      %v2010 = vrot.slane %v1130, 3
      %v2011 = vrot.slane %v1134, 3
      %v2012 = vrot.slane %v1140, 3
      %v2013 = vrot.slane %v1144, 3
      %v2014 = vrot.slane %v1150, 3
      %v2015 = vrot.slane %v1154, 3
      %v2016 = vrot.slane %v1160, 3
      %v2017 = vrot.slane %v1164, 3
      %2018 = vrot.lane.b32.xlu0 %v2010, 24
      %v2019 = vpop.permute.xlu0 %2018
      %2020 = vrot.lane.b32.xlu0 %v2011, 24
      %v2021 = vpop.permute.xlu0 %2020
      %2022 = vrot.lane.b32.xlu0 %v2012, 24
      %v2023 = vpop.permute.xlu0 %2022
      %2024 = vrot.lane.b32.xlu0 %v2013, 24
      %v2025 = vpop.permute.xlu0 %2024
      %2026 = vrot.lane.b32.xlu0 %v2014, 24
      %v2027 = vpop.permute.xlu0 %2026
      %2028 = vrot.lane.b32.xlu0 %v2015, 24
      %v2029 = vpop.permute.xlu0 %2028
      %2030 = vrot.lane.b32.xlu0 %v2016, 24
      %v2031 = vpop.permute.xlu0 %2030
      %2032 = vrot.lane.b32.xlu0 %v2017, 24
      %v2033 = vpop.permute.xlu0 %2032
      %v2042 = vrot.slane %v1130, 4
      %v2043 = vrot.slane %v1134, 4
      %v2044 = vrot.slane %v1140, 4
      %v2045 = vrot.slane %v1144, 4
      %v2046 = vrot.slane %v1150, 4
      %v2047 = vrot.slane %v1154, 4
      %v2048 = vrot.slane %v1160, 4
      %v2049 = vrot.slane %v1164, 4
      %2050 = vrot.lane.b32.xlu0 %v2042, 32
      %v2051 = vpop.permute.xlu0 %2050
      %2052 = vrot.lane.b32.xlu0 %v2043, 32
      %v2053 = vpop.permute.xlu0 %2052
      %2054 = vrot.lane.b32.xlu0 %v2044, 32
      %v2055 = vpop.permute.xlu0 %2054
      %2056 = vrot.lane.b32.xlu0 %v2045, 32
      %v2057 = vpop.permute.xlu0 %2056
      %2058 = vrot.lane.b32.xlu0 %v2046, 32
      %v2059 = vpop.permute.xlu0 %2058
      %2060 = vrot.lane.b32.xlu0 %v2047, 32
      %v2061 = vpop.permute.xlu0 %2060
      %2062 = vrot.lane.b32.xlu0 %v2048, 32
      %v2063 = vpop.permute.xlu0 %2062
      %2064 = vrot.lane.b32.xlu0 %v2049, 32
      %v2065 = vpop.permute.xlu0 %2064
      %v2074 = vrot.slane %v1130, 5
      %v2075 = vrot.slane %v1134, 5
      %v2076 = vrot.slane %v1140, 5
      %v2077 = vrot.slane %v1144, 5
      %v2078 = vrot.slane %v1150, 5
      %v2079 = vrot.slane %v1154, 5
      %v2080 = vrot.slane %v1160, 5
      %v2081 = vrot.slane %v1164, 5
      %2082 = vrot.lane.b32.xlu0 %v2074, 40
      %v2083 = vpop.permute.xlu0 %2082
      %2084 = vrot.lane.b32.xlu0 %v2075, 40
      %v2085 = vpop.permute.xlu0 %2084
      %2086 = vrot.lane.b32.xlu0 %v2076, 40
      %v2087 = vpop.permute.xlu0 %2086
      %2088 = vrot.lane.b32.xlu0 %v2077, 40
      %v2089 = vpop.permute.xlu0 %2088
      %2090 = vrot.lane.b32.xlu0 %v2078, 40
      %v2091 = vpop.permute.xlu0 %2090
      %2092 = vrot.lane.b32.xlu0 %v2079, 40
      %v2093 = vpop.permute.xlu0 %2092
      %2094 = vrot.lane.b32.xlu0 %v2080, 40
      %v2095 = vpop.permute.xlu0 %2094
      %2096 = vrot.lane.b32.xlu0 %v2081, 40
      %v2097 = vpop.permute.xlu0 %2096
      %v2106 = vrot.slane %v1130, 6
      %v2107 = vrot.slane %v1134, 6
      %v2108 = vrot.slane %v1140, 6
      %v2109 = vrot.slane %v1144, 6
      %v2110 = vrot.slane %v1150, 6
      %v2111 = vrot.slane %v1154, 6
      %v2112 = vrot.slane %v1160, 6
      %v2113 = vrot.slane %v1164, 6
      %2114 = vrot.lane.b32.xlu0 %v2106, 48
      %v2115 = vpop.permute.xlu0 %2114
      %2116 = vrot.lane.b32.xlu0 %v2107, 48
      %v2117 = vpop.permute.xlu0 %2116
      %2118 = vrot.lane.b32.xlu0 %v2108, 48
      %v2119 = vpop.permute.xlu0 %2118
      %2120 = vrot.lane.b32.xlu0 %v2109, 48
      %v2121 = vpop.permute.xlu0 %2120
      %2122 = vrot.lane.b32.xlu0 %v2110, 48
      %v2123 = vpop.permute.xlu0 %2122
      %2124 = vrot.lane.b32.xlu0 %v2111, 48
      %v2125 = vpop.permute.xlu0 %2124
      %2126 = vrot.lane.b32.xlu0 %v2112, 48
      %v2127 = vpop.permute.xlu0 %2126
      %2128 = vrot.lane.b32.xlu0 %v2113, 48
      %v2129 = vpop.permute.xlu0 %2128
      %v2138 = vrot.slane %v1130, 7
      %v2139 = vrot.slane %v1134, 7
      %v2140 = vrot.slane %v1140, 7
      %v2141 = vrot.slane %v1144, 7
      %v2142 = vrot.slane %v1150, 7
      %v2143 = vrot.slane %v1154, 7
      %v2144 = vrot.slane %v1160, 7
      %v2145 = vrot.slane %v1164, 7
      %2146 = vrot.lane.b32.xlu0 %v2138, 56
      %v2147 = vpop.permute.xlu0 %2146
      %2148 = vrot.lane.b32.xlu0 %v2139, 56
      %v2149 = vpop.permute.xlu0 %2148
      %2150 = vrot.lane.b32.xlu0 %v2140, 56
      %v2151 = vpop.permute.xlu0 %2150
      %2152 = vrot.lane.b32.xlu0 %v2141, 56
      %v2153 = vpop.permute.xlu0 %2152
      %2154 = vrot.lane.b32.xlu0 %v2142, 56
      %v2155 = vpop.permute.xlu0 %2154
      %2156 = vrot.lane.b32.xlu0 %v2143, 56
      %v2157 = vpop.permute.xlu0 %2156
      %2158 = vrot.lane.b32.xlu0 %v2144, 56
      %v2159 = vpop.permute.xlu0 %2158
      %2160 = vrot.lane.b32.xlu0 %v2145, 56
      %v2161 = vpop.permute.xlu0 %2160
      %vm2170 = vcmask 64512
      %v2171 = vsel %vm2170, %v1130, %v1955
      %v2172 = vsel %vm2170, %v1134, %v1957
      %v2173 = vsel %vm2170, %v1140, %v1959
      %v2174 = vsel %vm2170, %v1144, %v1961
      %v2175 = vsel %vm2170, %v1150, %v1963
      %v2176 = vsel %vm2170, %v1154, %v1965
      %v2177 = vsel %vm2170, %v1160, %v1967
      %v2178 = vsel %vm2170, %v1164, %v1969
      %v2179 = vsel %vm1009, %v2171, %v1987
      %v2180 = vsel %vm1009, %v2172, %v1989
      %v2181 = vsel %vm1009, %v2173, %v1991
      %v2182 = vsel %vm1009, %v2174, %v1993
      %v2183 = vsel %vm1009, %v2175, %v1995
      %v2184 = vsel %vm1009, %v2176, %v1997
      %v2185 = vsel %vm1009, %v2177, %v1999
      %v2186 = vsel %vm1009, %v2178, %v2001
      %vm2187 = vcmask 195584
      %v2188 = vsel %vm2187, %v2179, %v2019
      %v2189 = vsel %vm2187, %v2180, %v2021
      %v2190 = vsel %vm2187, %v2181, %v2023
      %v2191 = vsel %vm2187, %v2182, %v2025
      %v2192 = vsel %vm2187, %v2183, %v2027
      %v2193 = vsel %vm2187, %v2184, %v2029
      %v2194 = vsel %vm2187, %v2185, %v2031
      %v2195 = vsel %vm2187, %v2186, %v2033
      %v2196 = vsel %vm809, %v2188, %v2051
      %v2197 = vsel %vm809, %v2189, %v2053
      %v2198 = vsel %vm809, %v2190, %v2055
      %v2199 = vsel %vm809, %v2191, %v2057
      %v2200 = vsel %vm809, %v2192, %v2059
      %v2201 = vsel %vm809, %v2193, %v2061
      %v2202 = vsel %vm809, %v2194, %v2063
      %v2203 = vsel %vm809, %v2195, %v2065
      %vm2204 = vcmask 326656
      %v2205 = vsel %vm2204, %v2196, %v2083
      %v2206 = vsel %vm2204, %v2197, %v2085
      %v2207 = vsel %vm2204, %v2198, %v2087
      %v2208 = vsel %vm2204, %v2199, %v2089
      %v2209 = vsel %vm2204, %v2200, %v2091
      %v2210 = vsel %vm2204, %v2201, %v2093
      %v2211 = vsel %vm2204, %v2202, %v2095
      %v2212 = vsel %vm2204, %v2203, %v2097
      %vm2213 = vcmask 392192
      %v2214 = vsel %vm2213, %v2205, %v2115
      %v2215 = vsel %vm2213, %v2206, %v2117
      %v2216 = vsel %vm2213, %v2207, %v2119
      %v2217 = vsel %vm2213, %v2208, %v2121
      %v2218 = vsel %vm2213, %v2209, %v2123
      %v2219 = vsel %vm2213, %v2210, %v2125
      %v2220 = vsel %vm2213, %v2211, %v2127
      %v2221 = vsel %vm2213, %v2212, %v2129
      %vm2222 = vcmask 457728
      %v2223 = vsel %vm2222, %v2214, %v2147
      %v2224 = vsel %vm2222, %v2215, %v2149
      %v2225 = vsel %vm2222, %v2216, %v2151
      %v2226 = vsel %vm2222, %v2217, %v2153
      %v2227 = vsel %vm2222, %v2218, %v2155
      %v2228 = vsel %vm2222, %v2219, %v2157
      %v2229 = vsel %vm2222, %v2220, %v2159
      %v2230 = vsel %vm2222, %v2221, %v2161
      %2239 = vrot.lane.b32.xlu0 %v1930, 8
      %v2240 = vpop.permute.xlu0 %2239
      %2241 = vrot.lane.b32.xlu0 %v1931, 8
      %v2242 = vpop.permute.xlu0 %2241
      %2243 = vrot.lane.b32.xlu0 %v1932, 8
      %v2244 = vpop.permute.xlu0 %2243
      %2245 = vrot.lane.b32.xlu0 %v1933, 8
      %v2246 = vpop.permute.xlu0 %2245
      %2247 = vrot.lane.b32.xlu0 %v1934, 8
      %v2248 = vpop.permute.xlu0 %2247
      %2249 = vrot.lane.b32.xlu0 %v1935, 8
      %v2250 = vpop.permute.xlu0 %2249
      %2251 = vrot.lane.b32.xlu0 %v1936, 8
      %v2252 = vpop.permute.xlu0 %2251
      %2253 = vrot.lane.b32.xlu0 %v1937, 8
      %v2254 = vpop.permute.xlu0 %2253
      %2263 = vrot.lane.b32.xlu0 %v1930, 16
      %v2264 = vpop.permute.xlu0 %2263
      %2265 = vrot.lane.b32.xlu0 %v1931, 16
      %v2266 = vpop.permute.xlu0 %2265
      %2267 = vrot.lane.b32.xlu0 %v1932, 16
      %v2268 = vpop.permute.xlu0 %2267
      %2269 = vrot.lane.b32.xlu0 %v1933, 16
      %v2270 = vpop.permute.xlu0 %2269
      %2271 = vrot.lane.b32.xlu0 %v1934, 16
      %v2272 = vpop.permute.xlu0 %2271
      %2273 = vrot.lane.b32.xlu0 %v1935, 16
      %v2274 = vpop.permute.xlu0 %2273
      %2275 = vrot.lane.b32.xlu0 %v1936, 16
      %v2276 = vpop.permute.xlu0 %2275
      %2277 = vrot.lane.b32.xlu0 %v1937, 16
      %v2278 = vpop.permute.xlu0 %2277
      %2287 = vrot.lane.b32.xlu0 %v1930, 24
      %v2288 = vpop.permute.xlu0 %2287
      %2289 = vrot.lane.b32.xlu0 %v1931, 24
      %v2290 = vpop.permute.xlu0 %2289
      %2291 = vrot.lane.b32.xlu0 %v1932, 24
      %v2292 = vpop.permute.xlu0 %2291
      %2293 = vrot.lane.b32.xlu0 %v1933, 24
      %v2294 = vpop.permute.xlu0 %2293
      %2295 = vrot.lane.b32.xlu0 %v1934, 24
      %v2296 = vpop.permute.xlu0 %2295
      %2297 = vrot.lane.b32.xlu0 %v1935, 24
      %v2298 = vpop.permute.xlu0 %2297
      %2299 = vrot.lane.b32.xlu0 %v1936, 24
      %v2300 = vpop.permute.xlu0 %2299
      %2301 = vrot.lane.b32.xlu0 %v1937, 24
      %v2302 = vpop.permute.xlu0 %2301
      %2311 = vrot.lane.b32.xlu0 %v1930, 32
      %v2312 = vpop.permute.xlu0 %2311
      %2313 = vrot.lane.b32.xlu0 %v1931, 32
      %v2314 = vpop.permute.xlu0 %2313
      %2315 = vrot.lane.b32.xlu0 %v1932, 32
      %v2316 = vpop.permute.xlu0 %2315
      %2317 = vrot.lane.b32.xlu0 %v1933, 32
      %v2318 = vpop.permute.xlu0 %2317
      %2319 = vrot.lane.b32.xlu0 %v1934, 32
      %v2320 = vpop.permute.xlu0 %2319
      %2321 = vrot.lane.b32.xlu0 %v1935, 32
      %v2322 = vpop.permute.xlu0 %2321
      %2323 = vrot.lane.b32.xlu0 %v1936, 32
      %v2324 = vpop.permute.xlu0 %2323
      %2325 = vrot.lane.b32.xlu0 %v1937, 32
      %v2326 = vpop.permute.xlu0 %2325
      %2335 = vrot.lane.b32.xlu0 %v1930, 40
      %v2336 = vpop.permute.xlu0 %2335
      %2337 = vrot.lane.b32.xlu0 %v1931, 40
      %v2338 = vpop.permute.xlu0 %2337
      %2339 = vrot.lane.b32.xlu0 %v1932, 40
      %v2340 = vpop.permute.xlu0 %2339
      %2341 = vrot.lane.b32.xlu0 %v1933, 40
      %v2342 = vpop.permute.xlu0 %2341
      %2343 = vrot.lane.b32.xlu0 %v1934, 40
      %v2344 = vpop.permute.xlu0 %2343
      %2345 = vrot.lane.b32.xlu0 %v1935, 40
      %v2346 = vpop.permute.xlu0 %2345
      %2347 = vrot.lane.b32.xlu0 %v1936, 40
      %v2348 = vpop.permute.xlu0 %2347
      %2349 = vrot.lane.b32.xlu0 %v1937, 40
      %v2350 = vpop.permute.xlu0 %2349
      %2359 = vrot.lane.b32.xlu0 %v1930, 48
      %v2360 = vpop.permute.xlu0 %2359
      %2361 = vrot.lane.b32.xlu0 %v1931, 48
      %v2362 = vpop.permute.xlu0 %2361
      %2363 = vrot.lane.b32.xlu0 %v1932, 48
      %v2364 = vpop.permute.xlu0 %2363
      %2365 = vrot.lane.b32.xlu0 %v1933, 48
      %v2366 = vpop.permute.xlu0 %2365
      %2367 = vrot.lane.b32.xlu0 %v1934, 48
      %v2368 = vpop.permute.xlu0 %2367
      %2369 = vrot.lane.b32.xlu0 %v1935, 48
      %v2370 = vpop.permute.xlu0 %2369
      %2371 = vrot.lane.b32.xlu0 %v1936, 48
      %v2372 = vpop.permute.xlu0 %2371
      %2373 = vrot.lane.b32.xlu0 %v1937, 48
      %v2374 = vpop.permute.xlu0 %2373
      %2383 = vrot.lane.b32.xlu0 %v1930, 56
      %v2384 = vpop.permute.xlu0 %2383
      %2385 = vrot.lane.b32.xlu0 %v1931, 56
      %v2386 = vpop.permute.xlu0 %2385
      %2387 = vrot.lane.b32.xlu0 %v1932, 56
      %v2388 = vpop.permute.xlu0 %2387
      %2389 = vrot.lane.b32.xlu0 %v1933, 56
      %v2390 = vpop.permute.xlu0 %2389
      %2391 = vrot.lane.b32.xlu0 %v1934, 56
      %v2392 = vpop.permute.xlu0 %2391
      %2393 = vrot.lane.b32.xlu0 %v1935, 56
      %v2394 = vpop.permute.xlu0 %2393
      %2395 = vrot.lane.b32.xlu0 %v1936, 56
      %v2396 = vpop.permute.xlu0 %2395
      %2397 = vrot.lane.b32.xlu0 %v1937, 56
      %v2398 = vpop.permute.xlu0 %2397
      %v2407 = vsel %vm2170, %v1930, %v2240
      %v2408 = vsel %vm2170, %v1931, %v2242
      %v2409 = vsel %vm2170, %v1932, %v2244
      %v2410 = vsel %vm2170, %v1933, %v2246
      %v2411 = vsel %vm2170, %v1934, %v2248
      %v2412 = vsel %vm2170, %v1935, %v2250
      %v2413 = vsel %vm2170, %v1936, %v2252
      %v2414 = vsel %vm2170, %v1937, %v2254
      %v2415 = vsel %vm1009, %v2407, %v2264
      %v2416 = vsel %vm1009, %v2408, %v2266
      %v2417 = vsel %vm1009, %v2409, %v2268
      %v2418 = vsel %vm1009, %v2410, %v2270
      %v2419 = vsel %vm1009, %v2411, %v2272
      %v2420 = vsel %vm1009, %v2412, %v2274
      %v2421 = vsel %vm1009, %v2413, %v2276
      %v2422 = vsel %vm1009, %v2414, %v2278
      %v2423 = vsel %vm2187, %v2415, %v2288
      %v2424 = vsel %vm2187, %v2416, %v2290
      %v2425 = vsel %vm2187, %v2417, %v2292
      %v2426 = vsel %vm2187, %v2418, %v2294
      %v2427 = vsel %vm2187, %v2419, %v2296
      %v2428 = vsel %vm2187, %v2420, %v2298
      %v2429 = vsel %vm2187, %v2421, %v2300
      %v2430 = vsel %vm2187, %v2422, %v2302
      %v2431 = vsel %vm809, %v2423, %v2312
      %v2432 = vsel %vm809, %v2424, %v2314
      %v2433 = vsel %vm809, %v2425, %v2316
      %v2434 = vsel %vm809, %v2426, %v2318
      %v2435 = vsel %vm809, %v2427, %v2320
      %v2436 = vsel %vm809, %v2428, %v2322
      %v2437 = vsel %vm809, %v2429, %v2324
      %v2438 = vsel %vm809, %v2430, %v2326
      %v2439 = vsel %vm2204, %v2431, %v2336
      %v2440 = vsel %vm2204, %v2432, %v2338
      %v2441 = vsel %vm2204, %v2433, %v2340
      %v2442 = vsel %vm2204, %v2434, %v2342
      %v2443 = vsel %vm2204, %v2435, %v2344
      %v2444 = vsel %vm2204, %v2436, %v2346
      %v2445 = vsel %vm2204, %v2437, %v2348
      %v2446 = vsel %vm2204, %v2438, %v2350
      %v2447 = vsel %vm2213, %v2439, %v2360
      %v2448 = vsel %vm2213, %v2440, %v2362
      %v2449 = vsel %vm2213, %v2441, %v2364
      %v2450 = vsel %vm2213, %v2442, %v2366
      %v2451 = vsel %vm2213, %v2443, %v2368
      %v2452 = vsel %vm2213, %v2444, %v2370
      %v2453 = vsel %vm2213, %v2445, %v2372
      %v2454 = vsel %vm2213, %v2446, %v2374
      %v2455 = vsel %vm2222, %v2447, %v2384
      %v2456 = vsel %vm2222, %v2448, %v2386
      %v2457 = vsel %vm2222, %v2449, %v2388
      %v2458 = vsel %vm2222, %v2450, %v2390
      %v2459 = vsel %vm2222, %v2451, %v2392
      %v2460 = vsel %vm2222, %v2452, %v2394
      %v2461 = vsel %vm2222, %v2453, %v2396
      %v2462 = vsel %vm2222, %v2454, %v2398
      %v2463 = vlaneseq
      %v2464 = vshrl.u32 %v2463, 7
      %v2465 = vsub.s32 0, %v2464
      %v2466 = vrot.slane %v2223, %v2465
      %v2467 = vlaneseq
      %v2468 = vshrl.u32 %v2467, 7
      %v2469 = vsub.s32 0, %v2468
      %v2470 = vrot.slane %v2224, %v2469
      %v2471 = vlaneseq
      %v2472 = vshrl.u32 %v2471, 7
      %v2473 = vsub.s32 0, %v2472
      %v2474 = vrot.slane %v2225, %v2473
      %v2475 = vlaneseq
      %v2476 = vshrl.u32 %v2475, 7
      %v2477 = vsub.s32 0, %v2476
      %v2478 = vrot.slane %v2226, %v2477
      %v2479 = vlaneseq
      %v2480 = vshrl.u32 %v2479, 7
      %v2481 = vsub.s32 0, %v2480
      %v2482 = vrot.slane %v2227, %v2481
      %v2483 = vlaneseq
      %v2484 = vshrl.u32 %v2483, 7
      %v2485 = vsub.s32 0, %v2484
      %v2486 = vrot.slane %v2228, %v2485
      %v2487 = vlaneseq
      %v2488 = vshrl.u32 %v2487, 7
      %v2489 = vsub.s32 0, %v2488
      %v2490 = vrot.slane %v2229, %v2489
      %v2491 = vlaneseq
      %v2492 = vshrl.u32 %v2491, 7
      %v2493 = vsub.s32 0, %v2492
      %v2494 = vrot.slane %v2230, %v2493
      %v2495 = vadd.f32 %v2455, %v2466
      %v2496 = vadd.f32 %v2456, %v2470
      %v2497 = vadd.f32 %v2457, %v2474
      %v2498 = vadd.f32 %v2458, %v2478
      %v2499 = vadd.f32 %v2459, %v2482
      %v2500 = vadd.f32 %v2460, %v2486
      %v2501 = vadd.f32 %v2461, %v2490
      %v2502 = vadd.f32 %v2462, %v2494
      %v2503 = vsel %vm1810, %v2495, -inf
      %v2504 = vsel %vm1810, %v2496, -inf
      %v2505 = vsel %vm1810, %v2497, -inf
      %v2506 = vsel %vm1810, %v2498, -inf
      %v2507 = vsel %vm1810, %v2499, -inf
      %v2508 = vmax.f32 %v2503, %v2507
      %v2509 = vsel %vm1810, %v2500, -inf
      %v2510 = vmax.f32 %v2504, %v2509
      %v2511 = vsel %vm1810, %v2501, -inf
      %v2512 = vmax.f32 %v2505, %v2511
      %v2513 = vsel %vm1810, %v2502, -inf
      %v2514 = vmax.f32 %v2506, %v2513
      %v2515 = vmax.f32 %v2508, %v2510
      %v2516 = vmax.f32 %v2512, %v2514
      %v2517 = vmax.f32 %v2515, %v2516
      %2519 = vrot.lane.b32.xlu0 %v891, 8
      %v2520 = vpop.permute.xlu0 %2519
      %2522 = vrot.lane.b32.xlu0 %v891, 16
      %v2523 = vpop.permute.xlu0 %2522
      %2525 = vrot.lane.b32.xlu0 %v891, 24
      %v2526 = vpop.permute.xlu0 %2525
      %2528 = vrot.lane.b32.xlu0 %v891, 32
      %v2529 = vpop.permute.xlu0 %2528
      %2531 = vrot.lane.b32.xlu0 %v891, 40
      %v2532 = vpop.permute.xlu0 %2531
      %2534 = vrot.lane.b32.xlu0 %v891, 48
      %v2535 = vpop.permute.xlu0 %2534
      %2537 = vrot.lane.b32.xlu0 %v891, 56
      %v2538 = vpop.permute.xlu0 %2537
      %v2540 = vsel %vm2170, %v891, %v2520
      %v2541 = vsel %vm1009, %v2540, %v2523
      %v2542 = vsel %vm2187, %v2541, %v2526
      %v2543 = vsel %vm809, %v2542, %v2529
      %v2544 = vsel %vm2204, %v2543, %v2532
      %v2545 = vsel %vm2213, %v2544, %v2535
      %v2546 = vsel %vm2222, %v2545, %v2538
      %v2547 = vadd.f32 %v2517, %v2546
      %v2548 = vrot.slane %v889, 1
      %2549 = vrot.lane.b32.xlu0 %v2548, 8
      %v2550 = vpop.permute.xlu0 %2549
      %v2552 = vrot.slane %v889, 2
      %2553 = vrot.lane.b32.xlu0 %v2552, 16
      %v2554 = vpop.permute.xlu0 %2553
      %v2556 = vrot.slane %v889, 3
      %2557 = vrot.lane.b32.xlu0 %v2556, 24
      %v2558 = vpop.permute.xlu0 %2557
      %v2560 = vrot.slane %v889, 4
      %2561 = vrot.lane.b32.xlu0 %v2560, 32
      %v2562 = vpop.permute.xlu0 %2561
      %v2564 = vrot.slane %v889, 5
      %2565 = vrot.lane.b32.xlu0 %v2564, 40
      %v2566 = vpop.permute.xlu0 %2565
      %v2568 = vrot.slane %v889, 6
      %2569 = vrot.lane.b32.xlu0 %v2568, 48
      %v2570 = vpop.permute.xlu0 %2569
      %v2572 = vrot.slane %v889, 7
      %2573 = vrot.lane.b32.xlu0 %v2572, 56
      %v2574 = vpop.permute.xlu0 %2573
      %v2576 = vsel %vm2170, %v889, %v2550
      %v2577 = vsel %vm1009, %v2576, %v2554
      %v2578 = vsel %vm2187, %v2577, %v2558
      %v2579 = vsel %vm809, %v2578, %v2562
      %v2580 = vsel %vm2204, %v2579, %v2566
      %v2581 = vsel %vm2213, %v2580, %v2570
      %v2582 = vsel %vm2222, %v2581, %v2574
      %v2583 = vlaneseq
      %v2584 = vshrl.u32 %v2583, 7
      %v2585 = vsub.s32 0, %v2584
      %v2586 = vrot.slane %v2582, %v2585
      %v2587 = vadd.f32 %v2547, %v2586
      %v2596 = vrot.slane %v1132, 1
      %v2597 = vrot.slane %v1136, 1
      %v2598 = vrot.slane %v1142, 1
      %v2599 = vrot.slane %v1146, 1
      %v2600 = vrot.slane %v1152, 1
      %v2601 = vrot.slane %v1156, 1
      %v2602 = vrot.slane %v1162, 1
      %v2603 = vrot.slane %v1166, 1
      %2604 = vrot.lane.b32.xlu0 %v2596, 8
      %v2605 = vpop.permute.xlu0 %2604
      %2606 = vrot.lane.b32.xlu0 %v2597, 8
      %v2607 = vpop.permute.xlu0 %2606
      %2608 = vrot.lane.b32.xlu0 %v2598, 8
      %v2609 = vpop.permute.xlu0 %2608
      %2610 = vrot.lane.b32.xlu0 %v2599, 8
      %v2611 = vpop.permute.xlu0 %2610
      %2612 = vrot.lane.b32.xlu0 %v2600, 8
      %v2613 = vpop.permute.xlu0 %2612
      %2614 = vrot.lane.b32.xlu0 %v2601, 8
      %v2615 = vpop.permute.xlu0 %2614
      %2616 = vrot.lane.b32.xlu0 %v2602, 8
      %v2617 = vpop.permute.xlu0 %2616
      %2618 = vrot.lane.b32.xlu0 %v2603, 8
      %v2619 = vpop.permute.xlu0 %2618
      %v2628 = vrot.slane %v1132, 2
      %v2629 = vrot.slane %v1136, 2
      %v2630 = vrot.slane %v1142, 2
      %v2631 = vrot.slane %v1146, 2
      %v2632 = vrot.slane %v1152, 2
      %v2633 = vrot.slane %v1156, 2
      %v2634 = vrot.slane %v1162, 2
      %v2635 = vrot.slane %v1166, 2
      %2636 = vrot.lane.b32.xlu0 %v2628, 16
      %v2637 = vpop.permute.xlu0 %2636
      %2638 = vrot.lane.b32.xlu0 %v2629, 16
      %v2639 = vpop.permute.xlu0 %2638
      %2640 = vrot.lane.b32.xlu0 %v2630, 16
      %v2641 = vpop.permute.xlu0 %2640
      %2642 = vrot.lane.b32.xlu0 %v2631, 16
      %v2643 = vpop.permute.xlu0 %2642
      %2644 = vrot.lane.b32.xlu0 %v2632, 16
      %v2645 = vpop.permute.xlu0 %2644
      %2646 = vrot.lane.b32.xlu0 %v2633, 16
      %v2647 = vpop.permute.xlu0 %2646
      %2648 = vrot.lane.b32.xlu0 %v2634, 16
      %v2649 = vpop.permute.xlu0 %2648
      %2650 = vrot.lane.b32.xlu0 %v2635, 16
      %v2651 = vpop.permute.xlu0 %2650
      %v2660 = vrot.slane %v1132, 3
      %v2661 = vrot.slane %v1136, 3
      %v2662 = vrot.slane %v1142, 3
      %v2663 = vrot.slane %v1146, 3
      %v2664 = vrot.slane %v1152, 3
      %v2665 = vrot.slane %v1156, 3
      %v2666 = vrot.slane %v1162, 3
      %v2667 = vrot.slane %v1166, 3
      %2668 = vrot.lane.b32.xlu0 %v2660, 24
      %v2669 = vpop.permute.xlu0 %2668
      %2670 = vrot.lane.b32.xlu0 %v2661, 24
      %v2671 = vpop.permute.xlu0 %2670
      %2672 = vrot.lane.b32.xlu0 %v2662, 24
      %v2673 = vpop.permute.xlu0 %2672
      %2674 = vrot.lane.b32.xlu0 %v2663, 24
      %v2675 = vpop.permute.xlu0 %2674
      %2676 = vrot.lane.b32.xlu0 %v2664, 24
      %v2677 = vpop.permute.xlu0 %2676
      %2678 = vrot.lane.b32.xlu0 %v2665, 24
      %v2679 = vpop.permute.xlu0 %2678
      %2680 = vrot.lane.b32.xlu0 %v2666, 24
      %v2681 = vpop.permute.xlu0 %2680
      %2682 = vrot.lane.b32.xlu0 %v2667, 24
      %v2683 = vpop.permute.xlu0 %2682
      %v2692 = vrot.slane %v1132, 4
      %v2693 = vrot.slane %v1136, 4
      %v2694 = vrot.slane %v1142, 4
      %v2695 = vrot.slane %v1146, 4
      %v2696 = vrot.slane %v1152, 4
      %v2697 = vrot.slane %v1156, 4
      %v2698 = vrot.slane %v1162, 4
      %v2699 = vrot.slane %v1166, 4
      %2700 = vrot.lane.b32.xlu0 %v2692, 32
      %v2701 = vpop.permute.xlu0 %2700
      %2702 = vrot.lane.b32.xlu0 %v2693, 32
      %v2703 = vpop.permute.xlu0 %2702
      %2704 = vrot.lane.b32.xlu0 %v2694, 32
      %v2705 = vpop.permute.xlu0 %2704
      %2706 = vrot.lane.b32.xlu0 %v2695, 32
      %v2707 = vpop.permute.xlu0 %2706
      %2708 = vrot.lane.b32.xlu0 %v2696, 32
      %v2709 = vpop.permute.xlu0 %2708
      %2710 = vrot.lane.b32.xlu0 %v2697, 32
      %v2711 = vpop.permute.xlu0 %2710
      %2712 = vrot.lane.b32.xlu0 %v2698, 32
      %v2713 = vpop.permute.xlu0 %2712
      %2714 = vrot.lane.b32.xlu0 %v2699, 32
      %v2715 = vpop.permute.xlu0 %2714
      %v2724 = vrot.slane %v1132, 5
      %v2725 = vrot.slane %v1136, 5
      %v2726 = vrot.slane %v1142, 5
      %v2727 = vrot.slane %v1146, 5
      %v2728 = vrot.slane %v1152, 5
      %v2729 = vrot.slane %v1156, 5
      %v2730 = vrot.slane %v1162, 5
      %v2731 = vrot.slane %v1166, 5
      %2732 = vrot.lane.b32.xlu0 %v2724, 40
      %v2733 = vpop.permute.xlu0 %2732
      %2734 = vrot.lane.b32.xlu0 %v2725, 40
      %v2735 = vpop.permute.xlu0 %2734
      %2736 = vrot.lane.b32.xlu0 %v2726, 40
      %v2737 = vpop.permute.xlu0 %2736
      %2738 = vrot.lane.b32.xlu0 %v2727, 40
      %v2739 = vpop.permute.xlu0 %2738
      %2740 = vrot.lane.b32.xlu0 %v2728, 40
      %v2741 = vpop.permute.xlu0 %2740
      %2742 = vrot.lane.b32.xlu0 %v2729, 40
      %v2743 = vpop.permute.xlu0 %2742
      %2744 = vrot.lane.b32.xlu0 %v2730, 40
      %v2745 = vpop.permute.xlu0 %2744
      %2746 = vrot.lane.b32.xlu0 %v2731, 40
      %v2747 = vpop.permute.xlu0 %2746
      %v2756 = vrot.slane %v1132, 6
      %v2757 = vrot.slane %v1136, 6
      %v2758 = vrot.slane %v1142, 6
      %v2759 = vrot.slane %v1146, 6
      %v2760 = vrot.slane %v1152, 6
      %v2761 = vrot.slane %v1156, 6
      %v2762 = vrot.slane %v1162, 6
      %v2763 = vrot.slane %v1166, 6
      %2764 = vrot.lane.b32.xlu0 %v2756, 48
      %v2765 = vpop.permute.xlu0 %2764
      %2766 = vrot.lane.b32.xlu0 %v2757, 48
      %v2767 = vpop.permute.xlu0 %2766
      %2768 = vrot.lane.b32.xlu0 %v2758, 48
      %v2769 = vpop.permute.xlu0 %2768
      %2770 = vrot.lane.b32.xlu0 %v2759, 48
      %v2771 = vpop.permute.xlu0 %2770
      %2772 = vrot.lane.b32.xlu0 %v2760, 48
      %v2773 = vpop.permute.xlu0 %2772
      %2774 = vrot.lane.b32.xlu0 %v2761, 48
      %v2775 = vpop.permute.xlu0 %2774
      %2776 = vrot.lane.b32.xlu0 %v2762, 48
      %v2777 = vpop.permute.xlu0 %2776
      %2778 = vrot.lane.b32.xlu0 %v2763, 48
      %v2779 = vpop.permute.xlu0 %2778
      %v2788 = vrot.slane %v1132, 7
      %v2789 = vrot.slane %v1136, 7
      %v2790 = vrot.slane %v1142, 7
      %v2791 = vrot.slane %v1146, 7
      %v2792 = vrot.slane %v1152, 7
      %v2793 = vrot.slane %v1156, 7
      %v2794 = vrot.slane %v1162, 7
      %v2795 = vrot.slane %v1166, 7
      %2796 = vrot.lane.b32.xlu0 %v2788, 56
      %v2797 = vpop.permute.xlu0 %2796
      %2798 = vrot.lane.b32.xlu0 %v2789, 56
      %v2799 = vpop.permute.xlu0 %2798
      %2800 = vrot.lane.b32.xlu0 %v2790, 56
      %v2801 = vpop.permute.xlu0 %2800
      %2802 = vrot.lane.b32.xlu0 %v2791, 56
      %v2803 = vpop.permute.xlu0 %2802
      %2804 = vrot.lane.b32.xlu0 %v2792, 56
      %v2805 = vpop.permute.xlu0 %2804
      %2806 = vrot.lane.b32.xlu0 %v2793, 56
      %v2807 = vpop.permute.xlu0 %2806
      %2808 = vrot.lane.b32.xlu0 %v2794, 56
      %v2809 = vpop.permute.xlu0 %2808
      %2810 = vrot.lane.b32.xlu0 %v2795, 56
      %v2811 = vpop.permute.xlu0 %2810
      %v2820 = vsel %vm2170, %v1132, %v2605
      %v2821 = vsel %vm2170, %v1136, %v2607
      %v2822 = vsel %vm2170, %v1142, %v2609
      %v2823 = vsel %vm2170, %v1146, %v2611
      %v2824 = vsel %vm2170, %v1152, %v2613
      %v2825 = vsel %vm2170, %v1156, %v2615
      %v2826 = vsel %vm2170, %v1162, %v2617
      %v2827 = vsel %vm2170, %v1166, %v2619
      %v2828 = vsel %vm1009, %v2820, %v2637
      %v2829 = vsel %vm1009, %v2821, %v2639
      %v2830 = vsel %vm1009, %v2822, %v2641
      %v2831 = vsel %vm1009, %v2823, %v2643
      %v2832 = vsel %vm1009, %v2824, %v2645
      %v2833 = vsel %vm1009, %v2825, %v2647
      %v2834 = vsel %vm1009, %v2826, %v2649
      %v2835 = vsel %vm1009, %v2827, %v2651
      %v2836 = vsel %vm2187, %v2828, %v2669
      %v2837 = vsel %vm2187, %v2829, %v2671
      %v2838 = vsel %vm2187, %v2830, %v2673
      %v2839 = vsel %vm2187, %v2831, %v2675
      %v2840 = vsel %vm2187, %v2832, %v2677
      %v2841 = vsel %vm2187, %v2833, %v2679
      %v2842 = vsel %vm2187, %v2834, %v2681
      %v2843 = vsel %vm2187, %v2835, %v2683
      %v2844 = vsel %vm809, %v2836, %v2701
      %v2845 = vsel %vm809, %v2837, %v2703
      %v2846 = vsel %vm809, %v2838, %v2705
      %v2847 = vsel %vm809, %v2839, %v2707
      %v2848 = vsel %vm809, %v2840, %v2709
      %v2849 = vsel %vm809, %v2841, %v2711
      %v2850 = vsel %vm809, %v2842, %v2713
      %v2851 = vsel %vm809, %v2843, %v2715
      %v2852 = vsel %vm2204, %v2844, %v2733
      %v2853 = vsel %vm2204, %v2845, %v2735
      %v2854 = vsel %vm2204, %v2846, %v2737
      %v2855 = vsel %vm2204, %v2847, %v2739
      %v2856 = vsel %vm2204, %v2848, %v2741
      %v2857 = vsel %vm2204, %v2849, %v2743
      %v2858 = vsel %vm2204, %v2850, %v2745
      %v2859 = vsel %vm2204, %v2851, %v2747
      %v2860 = vsel %vm2213, %v2852, %v2765
      %v2861 = vsel %vm2213, %v2853, %v2767
      %v2862 = vsel %vm2213, %v2854, %v2769
      %v2863 = vsel %vm2213, %v2855, %v2771
      %v2864 = vsel %vm2213, %v2856, %v2773
      %v2865 = vsel %vm2213, %v2857, %v2775
      %v2866 = vsel %vm2213, %v2858, %v2777
      %v2867 = vsel %vm2213, %v2859, %v2779
      %v2868 = vsel %vm2222, %v2860, %v2797
      %v2869 = vsel %vm2222, %v2861, %v2799
      %v2870 = vsel %vm2222, %v2862, %v2801
      %v2871 = vsel %vm2222, %v2863, %v2803
      %v2872 = vsel %vm2222, %v2864, %v2805
      %v2873 = vsel %vm2222, %v2865, %v2807
      %v2874 = vsel %vm2222, %v2866, %v2809
      %v2875 = vsel %vm2222, %v2867, %v2811
      %v2884 = vrot.slane %v2869, 7
      %vm2885 = vcmask 1041409
      %v2886 = vsel %vm2885, %v2884, %v2868
      %v2887 = vrot.slane %v2870, 6
      %vm2888 = vcmask 1042434
      %v2889 = vsel %vm2888, %v2887, %v2886
      %v2890 = vrot.slane %v2871, 5
      %vm2891 = vcmask 1043459
      %v2892 = vsel %vm2891, %v2890, %v2889
      %v2893 = vrot.slane %v2872, 4
      %vm2894 = vcmask 1044484
      %v2895 = vsel %vm2894, %v2893, %v2892
      %v2896 = vrot.slane %v2873, 3
      %vm2897 = vcmask 1045509
      %v2898 = vsel %vm2897, %v2896, %v2895
      %v2899 = vrot.slane %v2874, 2
      %vm2900 = vcmask 1046534
      %v2901 = vsel %vm2900, %v2899, %v2898
      %v2902 = vrot.slane %v2875, 1
      %vm2903 = vcmask 1047559
      %v2904 = vsel %vm2903, %v2902, %v2901
      %v2906 = vadd.f32 %v2587, %v2904
      %2908 = vrot.lane.b32.xlu0 %v1233, 8
      %v2909 = vpop.permute.xlu0 %2908
      %2911 = vrot.lane.b32.xlu0 %v1233, 16
      %v2912 = vpop.permute.xlu0 %2911
      %2914 = vrot.lane.b32.xlu0 %v1233, 24
      %v2915 = vpop.permute.xlu0 %2914
      %2917 = vrot.lane.b32.xlu0 %v1233, 32
      %v2918 = vpop.permute.xlu0 %2917
      %2920 = vrot.lane.b32.xlu0 %v1233, 40
      %v2921 = vpop.permute.xlu0 %2920
      %2923 = vrot.lane.b32.xlu0 %v1233, 48
      %v2924 = vpop.permute.xlu0 %2923
      %2926 = vrot.lane.b32.xlu0 %v1233, 56
      %v2927 = vpop.permute.xlu0 %2926
      %v2929 = vsel %vm2170, %v1233, %v2909
      %v2930 = vsel %vm1009, %v2929, %v2912
      %v2931 = vsel %vm2187, %v2930, %v2915
      %v2932 = vsel %vm809, %v2931, %v2918
      %v2933 = vsel %vm2204, %v2932, %v2921
      %v2934 = vsel %vm2213, %v2933, %v2924
      %v2935 = vsel %vm2222, %v2934, %v2927
      %v2936 = vlaneseq
      %v2937 = vshrl.u32 %v2936, 7
      %v2938 = vsub.s32 0, %v2937
      %v2939 = vrot.slane %v2935, %v2938
      %v2940 = vadd.f32 %v2906, %v2939
      %v2941 = vpack.c.bf16 %v2940, %v2940
      %v2942 = vld [vmem:[%s16] sm:$0xf]
      %v2943 = vld [vmem:[%s17] sm:$0x1]
      %v2945 = vlaneseq
      %v2946 = vshrl.u32 %v2945, 7
      %v2947 = vsub.s32 0, %v2946
      %v2948 = vrot.slane %v2943, %v2947
      %v2951 = vsel %vm2170, %v2941, 0
      %vm2953 = vcmask 1043456
      %v2955 = vsel %vm2953, %v2942, 0
      %2957 = vmatprep.subr.bf16.mxu0 0
      %2958 = vmatpush1.bf16.msra.mxu0 0
      %2959 = vmatprep.subr.bf16.mxu0 0
      %2960 = vmatpush1.bf16.msra.mxu0 0
      %2961 = vmatprep.subr.bf16.mxu0 0
      %2962 = vmatpush1.bf16.msra.mxu0 0
      %2963 = vmatprep.subr.bf16.mxu0 0
      %2964 = vmatpush1.bf16.msra.mxu0 0
      %2965 = vmatprep.subr.bf16.mxu0 0
      %2966 = vmatpush1.bf16.msra.mxu0 0
      %2967 = vmatprep.subr.bf16.mxu0 0
      %2968 = vmatpush1.bf16.msra.mxu0 0
      %2969 = vmatprep.subr.bf16.mxu0 0
      %2970 = vmatpush1.bf16.msra.mxu0 0
      %2971 = vmatprep.subr.bf16.mxu0 0
      %2972 = vmatpush1.bf16.msra.mxu0 %v2955
      %2973 = vmatprep.subr.bf16.mxu0 0
      %2974 = vmatpush2.bf16.msra.mxu0 0
      %2975 = vmatprep.subr.bf16.mxu0 0
      %2976 = vmatpush2.bf16.msra.mxu0 0
      %2977 = vmatprep.subr.bf16.mxu0 0
      %2978 = vmatpush2.bf16.msra.mxu0 0
      %2979 = vmatprep.subr.bf16.mxu0 0
      %2980 = vmatpush2.bf16.msra.mxu0 0
      %2981 = vmatprep.subr.bf16.mxu0 0
      %2982 = vmatpush2.bf16.msra.mxu0 0
      %2983 = vmatprep.subr.bf16.mxu0 0
      %2984 = vmatpush2.bf16.msra.mxu0 0
      %2985 = vmatprep.subr.bf16.mxu0 0
      %2986 = vmatpush2.bf16.msra.mxu0 0
      %2987 = vmatprep.subr.bf16.mxu0 0
      %2988 = vmatpush2.bf16.msra.mxu0 0
      %2989 = vmatprep.mubr.bf16.mxu0 0
      %2990 = vmatmul.mubr.bf16.gmra.mxu0 %v2951
      %v2991 = vpop.f32.mrf.mxu0
      %v2992 = vadd.f32 %v2948, %v2991
      %v2993 = vpop.f32.mrf.mxu0
      %v2994 = vpop.f32.mrf.mxu0
      %v2995 = vpop.f32.mrf.mxu0
      %2996 = vdwg.mxu0
      %v2997 = vmax.f32 %v2992, 0.0
      %v2998 = vsel %vm809, %v2997, 0.0
      %2999 = vadd.xlane.f32.xlu0 %v2998
      %v3000 = vpop.xlane.xlu0 %2999
      %v3001 = vmul.f32 %v3000, %v1755
      %v3002 = vsub.f32 %v2997, %v3001
      %v3003 = vmul.f32 %v3002, %v3002
      %v3004 = vsel %vm809, %v3003, 0.0
      %3005 = vadd.xlane.f32.xlu0 %v3004
      %v3006 = vpop.xlane.xlu0 %3005
      %v3007 = vmul.f32 %v3006, %v1755
      %v3008 = vadd.f32 %v3007, 1e-05
      %v3009 = vrsqrt.pop %v3008
      %v3010 = vmul.f32 %v3002, %v3009
      %v3011 = vld [vmem:[%s18] sm:$0x1]
      %v3013 = vlaneseq
      %v3014 = vshrl.u32 %v3013, 7
      %v3015 = vsub.s32 0, %v3014
      %v3016 = vrot.slane %v3011, %v3015
      %v3018 = vmul.f32 %v3010, %v3016
      %v3019 = vld [vmem:[%s19] sm:$0x1]
      %v3021 = vlaneseq
      %v3022 = vshrl.u32 %v3021, 7
      %v3023 = vsub.s32 0, %v3022
      %v3024 = vrot.slane %v3019, %v3023
      %v3026 = vadd.f32 %v3018, %v3024
      %3028 = vrot.lane.b32.xlu0 %v2941, 120
      %v3029 = vpop.permute.xlu0 %3028
      %v3031 = vsel %vm2170, %v3029, 0
      %3033 = vmatprep.subr.bf16.mxu0 0
      %3034 = vmatpush1.bf16.msra.mxu0 0
      %3035 = vmatprep.subr.bf16.mxu0 0
      %3036 = vmatpush1.bf16.msra.mxu0 0
      %3037 = vmatprep.subr.bf16.mxu0 0
      %3038 = vmatpush1.bf16.msra.mxu0 0
      %3039 = vmatprep.subr.bf16.mxu0 0
      %3040 = vmatpush1.bf16.msra.mxu0 0
      %3041 = vmatprep.subr.bf16.mxu0 0
      %3042 = vmatpush1.bf16.msra.mxu0 0
      %3043 = vmatprep.subr.bf16.mxu0 0
      %3044 = vmatpush1.bf16.msra.mxu0 0
      %3045 = vmatprep.subr.bf16.mxu0 0
      %3046 = vmatpush1.bf16.msra.mxu0 0
      %3047 = vmatprep.subr.bf16.mxu0 0
      %3048 = vmatpush1.bf16.msra.mxu0 %v2955
      %3049 = vmatprep.subr.bf16.mxu0 0
      %3050 = vmatpush2.bf16.msra.mxu0 0
      %3051 = vmatprep.subr.bf16.mxu0 0
      %3052 = vmatpush2.bf16.msra.mxu0 0
      %3053 = vmatprep.subr.bf16.mxu0 0
      %3054 = vmatpush2.bf16.msra.mxu0 0
      %3055 = vmatprep.subr.bf16.mxu0 0
      %3056 = vmatpush2.bf16.msra.mxu0 0
      %3057 = vmatprep.subr.bf16.mxu0 0
      %3058 = vmatpush2.bf16.msra.mxu0 0
      %3059 = vmatprep.subr.bf16.mxu0 0
      %3060 = vmatpush2.bf16.msra.mxu0 0
      %3061 = vmatprep.subr.bf16.mxu0 0
      %3062 = vmatpush2.bf16.msra.mxu0 0
      %3063 = vmatprep.subr.bf16.mxu0 0
      %3064 = vmatpush2.bf16.msra.mxu0 0
      %3065 = vmatprep.mubr.bf16.mxu0 0
      %3066 = vmatmul.mubr.bf16.gmra.mxu0 %v3031
      %v3067 = vpop.f32.mrf.mxu0
      %v3068 = vadd.f32 %v2948, %v3067
      %v3069 = vpop.f32.mrf.mxu0
      %v3070 = vpop.f32.mrf.mxu0
      %v3071 = vpop.f32.mrf.mxu0
      %3072 = vdwg.mxu0
      %v3073 = vmax.f32 %v3068, 0.0
      %v3074 = vsel %vm809, %v3073, 0.0
      %3075 = vadd.xlane.f32.xlu0 %v3074
      %v3076 = vpop.xlane.xlu0 %3075
      %v3077 = vmul.f32 %v3076, %v1755
      %v3078 = vsub.f32 %v3073, %v3077
      %v3079 = vmul.f32 %v3078, %v3078
      %v3080 = vsel %vm809, %v3079, 0.0
      %3081 = vadd.xlane.f32.xlu0 %v3080
      %v3082 = vpop.xlane.xlu0 %3081
      %v3083 = vmul.f32 %v3082, %v1755
      %v3084 = vadd.f32 %v3083, 1e-05
      %v3085 = vrsqrt.pop %v3084
      %v3086 = vmul.f32 %v3078, %v3085
      %v3087 = vmul.f32 %v3086, %v3016
      %v3088 = vadd.f32 %v3087, %v3024
      %3089 = vrot.lane.b32.xlu0 %v2941, 112
      %v3090 = vpop.permute.xlu0 %3089
      %v3092 = vsel %vm2170, %v3090, 0
      %3094 = vmatprep.subr.bf16.mxu0 0
      %3095 = vmatpush1.bf16.msra.mxu0 0
      %3096 = vmatprep.subr.bf16.mxu0 0
      %3097 = vmatpush1.bf16.msra.mxu0 0
      %3098 = vmatprep.subr.bf16.mxu0 0
      %3099 = vmatpush1.bf16.msra.mxu0 0
      %3100 = vmatprep.subr.bf16.mxu0 0
      %3101 = vmatpush1.bf16.msra.mxu0 0
      %3102 = vmatprep.subr.bf16.mxu0 0
      %3103 = vmatpush1.bf16.msra.mxu0 0
      %3104 = vmatprep.subr.bf16.mxu0 0
      %3105 = vmatpush1.bf16.msra.mxu0 0
      %3106 = vmatprep.subr.bf16.mxu0 0
      %3107 = vmatpush1.bf16.msra.mxu0 0
      %3108 = vmatprep.subr.bf16.mxu0 0
      %3109 = vmatpush1.bf16.msra.mxu0 %v2955
      %3110 = vmatprep.subr.bf16.mxu0 0
      %3111 = vmatpush2.bf16.msra.mxu0 0
      %3112 = vmatprep.subr.bf16.mxu0 0
      %3113 = vmatpush2.bf16.msra.mxu0 0
      %3114 = vmatprep.subr.bf16.mxu0 0
      %3115 = vmatpush2.bf16.msra.mxu0 0
      %3116 = vmatprep.subr.bf16.mxu0 0
      %3117 = vmatpush2.bf16.msra.mxu0 0
      %3118 = vmatprep.subr.bf16.mxu0 0
      %3119 = vmatpush2.bf16.msra.mxu0 0
      %3120 = vmatprep.subr.bf16.mxu0 0
      %3121 = vmatpush2.bf16.msra.mxu0 0
      %3122 = vmatprep.subr.bf16.mxu0 0
      %3123 = vmatpush2.bf16.msra.mxu0 0
      %3124 = vmatprep.subr.bf16.mxu0 0
      %3125 = vmatpush2.bf16.msra.mxu0 0
      %3126 = vmatprep.mubr.bf16.mxu0 0
      %3127 = vmatmul.mubr.bf16.gmra.mxu0 %v3092
      %v3128 = vpop.f32.mrf.mxu0
      %v3129 = vadd.f32 %v2948, %v3128
      %v3130 = vpop.f32.mrf.mxu0
      %v3131 = vpop.f32.mrf.mxu0
      %v3132 = vpop.f32.mrf.mxu0
      %3133 = vdwg.mxu0
      %v3134 = vmax.f32 %v3129, 0.0
      %v3135 = vsel %vm809, %v3134, 0.0
      %3136 = vadd.xlane.f32.xlu0 %v3135
      %v3137 = vpop.xlane.xlu0 %3136
      %v3138 = vmul.f32 %v3137, %v1755
      %v3139 = vsub.f32 %v3134, %v3138
      %v3140 = vmul.f32 %v3139, %v3139
      %v3141 = vsel %vm809, %v3140, 0.0
      %3142 = vadd.xlane.f32.xlu0 %v3141
      %v3143 = vpop.xlane.xlu0 %3142
      %v3144 = vmul.f32 %v3143, %v1755
      %v3145 = vadd.f32 %v3144, 1e-05
      %v3146 = vrsqrt.pop %v3145
      %v3147 = vmul.f32 %v3139, %v3146
      %v3148 = vmul.f32 %v3147, %v3016
      %v3149 = vadd.f32 %v3148, %v3024
      %3150 = vrot.lane.b32.xlu0 %v2941, 104
      %v3151 = vpop.permute.xlu0 %3150
      %v3153 = vsel %vm2170, %v3151, 0
      %3155 = vmatprep.subr.bf16.mxu0 0
      %3156 = vmatpush1.bf16.msra.mxu0 0
      %3157 = vmatprep.subr.bf16.mxu0 0
      %3158 = vmatpush1.bf16.msra.mxu0 0
      %3159 = vmatprep.subr.bf16.mxu0 0
      %3160 = vmatpush1.bf16.msra.mxu0 0
      %3161 = vmatprep.subr.bf16.mxu0 0
      %3162 = vmatpush1.bf16.msra.mxu0 0
      %3163 = vmatprep.subr.bf16.mxu0 0
      %3164 = vmatpush1.bf16.msra.mxu0 0
      %3165 = vmatprep.subr.bf16.mxu0 0
      %3166 = vmatpush1.bf16.msra.mxu0 0
      %3167 = vmatprep.subr.bf16.mxu0 0
      %3168 = vmatpush1.bf16.msra.mxu0 0
      %3169 = vmatprep.subr.bf16.mxu0 0
      %3170 = vmatpush1.bf16.msra.mxu0 %v2955
      %3171 = vmatprep.subr.bf16.mxu0 0
      %3172 = vmatpush2.bf16.msra.mxu0 0
      %3173 = vmatprep.subr.bf16.mxu0 0
      %3174 = vmatpush2.bf16.msra.mxu0 0
      %3175 = vmatprep.subr.bf16.mxu0 0
      %3176 = vmatpush2.bf16.msra.mxu0 0
      %3177 = vmatprep.subr.bf16.mxu0 0
      %3178 = vmatpush2.bf16.msra.mxu0 0
      %3179 = vmatprep.subr.bf16.mxu0 0
      %3180 = vmatpush2.bf16.msra.mxu0 0
      %3181 = vmatprep.subr.bf16.mxu0 0
      %3182 = vmatpush2.bf16.msra.mxu0 0
      %3183 = vmatprep.subr.bf16.mxu0 0
      %3184 = vmatpush2.bf16.msra.mxu0 0
      %3185 = vmatprep.subr.bf16.mxu0 0
      %3186 = vmatpush2.bf16.msra.mxu0 0
      %3187 = vmatprep.mubr.bf16.mxu0 0
      %3188 = vmatmul.mubr.bf16.gmra.mxu0 %v3153
      %v3189 = vpop.f32.mrf.mxu0
      %v3190 = vadd.f32 %v2948, %v3189
      %v3191 = vpop.f32.mrf.mxu0
      %v3192 = vpop.f32.mrf.mxu0
      %v3193 = vpop.f32.mrf.mxu0
      %3194 = vdwg.mxu0
      %v3195 = vmax.f32 %v3190, 0.0
      %v3196 = vsel %vm809, %v3195, 0.0
      %3197 = vadd.xlane.f32.xlu0 %v3196
      %v3198 = vpop.xlane.xlu0 %3197
      %v3199 = vmul.f32 %v3198, %v1755
      %v3200 = vsub.f32 %v3195, %v3199
      %v3201 = vmul.f32 %v3200, %v3200
      %v3202 = vsel %vm809, %v3201, 0.0
      %3203 = vadd.xlane.f32.xlu0 %v3202
      %v3204 = vpop.xlane.xlu0 %3203
      %v3205 = vmul.f32 %v3204, %v1755
      %v3206 = vadd.f32 %v3205, 1e-05
      %v3207 = vrsqrt.pop %v3206
      %v3208 = vmul.f32 %v3200, %v3207
      %v3209 = vmul.f32 %v3208, %v3016
      %v3210 = vadd.f32 %v3209, %v3024
      %3211 = vrot.lane.b32.xlu0 %v2941, 96
      %v3212 = vpop.permute.xlu0 %3211
      %v3214 = vsel %vm2170, %v3212, 0
      %3216 = vmatprep.subr.bf16.mxu0 0
      %3217 = vmatpush1.bf16.msra.mxu0 0
      %3218 = vmatprep.subr.bf16.mxu0 0
      %3219 = vmatpush1.bf16.msra.mxu0 0
      %3220 = vmatprep.subr.bf16.mxu0 0
      %3221 = vmatpush1.bf16.msra.mxu0 0
      %3222 = vmatprep.subr.bf16.mxu0 0
      %3223 = vmatpush1.bf16.msra.mxu0 0
      %3224 = vmatprep.subr.bf16.mxu0 0
      %3225 = vmatpush1.bf16.msra.mxu0 0
      %3226 = vmatprep.subr.bf16.mxu0 0
      %3227 = vmatpush1.bf16.msra.mxu0 0
      %3228 = vmatprep.subr.bf16.mxu0 0
      %3229 = vmatpush1.bf16.msra.mxu0 0
      %3230 = vmatprep.subr.bf16.mxu0 0
      %3231 = vmatpush1.bf16.msra.mxu0 %v2955
      %3232 = vmatprep.subr.bf16.mxu0 0
      %3233 = vmatpush2.bf16.msra.mxu0 0
      %3234 = vmatprep.subr.bf16.mxu0 0
      %3235 = vmatpush2.bf16.msra.mxu0 0
      %3236 = vmatprep.subr.bf16.mxu0 0
      %3237 = vmatpush2.bf16.msra.mxu0 0
      %3238 = vmatprep.subr.bf16.mxu0 0
      %3239 = vmatpush2.bf16.msra.mxu0 0
      %3240 = vmatprep.subr.bf16.mxu0 0
      %3241 = vmatpush2.bf16.msra.mxu0 0
      %3242 = vmatprep.subr.bf16.mxu0 0
      %3243 = vmatpush2.bf16.msra.mxu0 0
      %3244 = vmatprep.subr.bf16.mxu0 0
      %3245 = vmatpush2.bf16.msra.mxu0 0
      %3246 = vmatprep.subr.bf16.mxu0 0
      %3247 = vmatpush2.bf16.msra.mxu0 0
      %3248 = vmatprep.mubr.bf16.mxu0 0
      %3249 = vmatmul.mubr.bf16.gmra.mxu0 %v3214
      %v3250 = vpop.f32.mrf.mxu0
      %v3251 = vadd.f32 %v2948, %v3250
      %v3252 = vpop.f32.mrf.mxu0
      %v3253 = vpop.f32.mrf.mxu0
      %v3254 = vpop.f32.mrf.mxu0
      %3255 = vdwg.mxu0
      %v3256 = vmax.f32 %v3251, 0.0
      %v3257 = vsel %vm809, %v3256, 0.0
      %3258 = vadd.xlane.f32.xlu0 %v3257
      %v3259 = vpop.xlane.xlu0 %3258
      %v3260 = vmul.f32 %v3259, %v1755
      %v3261 = vsub.f32 %v3256, %v3260
      %v3262 = vmul.f32 %v3261, %v3261
      %v3263 = vsel %vm809, %v3262, 0.0
      %3264 = vadd.xlane.f32.xlu0 %v3263
      %v3265 = vpop.xlane.xlu0 %3264
      %v3266 = vmul.f32 %v3265, %v1755
      %v3267 = vadd.f32 %v3266, 1e-05
      %v3268 = vrsqrt.pop %v3267
      %v3269 = vmul.f32 %v3261, %v3268
      %v3270 = vmul.f32 %v3269, %v3016
      %v3271 = vadd.f32 %v3270, %v3024
      %3272 = vrot.lane.b32.xlu0 %v2941, 88
      %v3273 = vpop.permute.xlu0 %3272
      %v3275 = vsel %vm2170, %v3273, 0
      %3277 = vmatprep.subr.bf16.mxu0 0
      %3278 = vmatpush1.bf16.msra.mxu0 0
      %3279 = vmatprep.subr.bf16.mxu0 0
      %3280 = vmatpush1.bf16.msra.mxu0 0
      %3281 = vmatprep.subr.bf16.mxu0 0
      %3282 = vmatpush1.bf16.msra.mxu0 0
      %3283 = vmatprep.subr.bf16.mxu0 0
      %3284 = vmatpush1.bf16.msra.mxu0 0
      %3285 = vmatprep.subr.bf16.mxu0 0
      %3286 = vmatpush1.bf16.msra.mxu0 0
      %3287 = vmatprep.subr.bf16.mxu0 0
      %3288 = vmatpush1.bf16.msra.mxu0 0
      %3289 = vmatprep.subr.bf16.mxu0 0
      %3290 = vmatpush1.bf16.msra.mxu0 0
      %3291 = vmatprep.subr.bf16.mxu0 0
      %3292 = vmatpush1.bf16.msra.mxu0 %v2955
      %3293 = vmatprep.subr.bf16.mxu0 0
      %3294 = vmatpush2.bf16.msra.mxu0 0
      %3295 = vmatprep.subr.bf16.mxu0 0
      %3296 = vmatpush2.bf16.msra.mxu0 0
      %3297 = vmatprep.subr.bf16.mxu0 0
      %3298 = vmatpush2.bf16.msra.mxu0 0
      %3299 = vmatprep.subr.bf16.mxu0 0
      %3300 = vmatpush2.bf16.msra.mxu0 0
      %3301 = vmatprep.subr.bf16.mxu0 0
      %3302 = vmatpush2.bf16.msra.mxu0 0
      %3303 = vmatprep.subr.bf16.mxu0 0
      %3304 = vmatpush2.bf16.msra.mxu0 0
      %3305 = vmatprep.subr.bf16.mxu0 0
      %3306 = vmatpush2.bf16.msra.mxu0 0
      %3307 = vmatprep.subr.bf16.mxu0 0
      %3308 = vmatpush2.bf16.msra.mxu0 0
      %3309 = vmatprep.mubr.bf16.mxu0 0
      %3310 = vmatmul.mubr.bf16.gmra.mxu0 %v3275
      %v3311 = vpop.f32.mrf.mxu0
      %v3312 = vadd.f32 %v2948, %v3311
      %v3313 = vpop.f32.mrf.mxu0
      %v3314 = vpop.f32.mrf.mxu0
      %v3315 = vpop.f32.mrf.mxu0
      %3316 = vdwg.mxu0
      %v3317 = vmax.f32 %v3312, 0.0
      %v3318 = vsel %vm809, %v3317, 0.0
      %3319 = vadd.xlane.f32.xlu0 %v3318
      %v3320 = vpop.xlane.xlu0 %3319
      %v3321 = vmul.f32 %v3320, %v1755
      %v3322 = vsub.f32 %v3317, %v3321
      %v3323 = vmul.f32 %v3322, %v3322
      %v3324 = vsel %vm809, %v3323, 0.0
      %3325 = vadd.xlane.f32.xlu0 %v3324
      %v3326 = vpop.xlane.xlu0 %3325
      %v3327 = vmul.f32 %v3326, %v1755
      %v3328 = vadd.f32 %v3327, 1e-05
      %v3329 = vrsqrt.pop %v3328
      %v3330 = vmul.f32 %v3322, %v3329
      %v3331 = vmul.f32 %v3330, %v3016
      %v3332 = vadd.f32 %v3331, %v3024
      %3333 = vrot.lane.b32.xlu0 %v2941, 80
      %v3334 = vpop.permute.xlu0 %3333
      %v3336 = vsel %vm2170, %v3334, 0
      %3338 = vmatprep.subr.bf16.mxu0 0
      %3339 = vmatpush1.bf16.msra.mxu0 0
      %3340 = vmatprep.subr.bf16.mxu0 0
      %3341 = vmatpush1.bf16.msra.mxu0 0
      %3342 = vmatprep.subr.bf16.mxu0 0
      %3343 = vmatpush1.bf16.msra.mxu0 0
      %3344 = vmatprep.subr.bf16.mxu0 0
      %3345 = vmatpush1.bf16.msra.mxu0 0
      %3346 = vmatprep.subr.bf16.mxu0 0
      %3347 = vmatpush1.bf16.msra.mxu0 0
      %3348 = vmatprep.subr.bf16.mxu0 0
      %3349 = vmatpush1.bf16.msra.mxu0 0
      %3350 = vmatprep.subr.bf16.mxu0 0
      %3351 = vmatpush1.bf16.msra.mxu0 0
      %3352 = vmatprep.subr.bf16.mxu0 0
      %3353 = vmatpush1.bf16.msra.mxu0 %v2955
      %3354 = vmatprep.subr.bf16.mxu0 0
      %3355 = vmatpush2.bf16.msra.mxu0 0
      %3356 = vmatprep.subr.bf16.mxu0 0
      %3357 = vmatpush2.bf16.msra.mxu0 0
      %3358 = vmatprep.subr.bf16.mxu0 0
      %3359 = vmatpush2.bf16.msra.mxu0 0
      %3360 = vmatprep.subr.bf16.mxu0 0
      %3361 = vmatpush2.bf16.msra.mxu0 0
      %3362 = vmatprep.subr.bf16.mxu0 0
      %3363 = vmatpush2.bf16.msra.mxu0 0
      %3364 = vmatprep.subr.bf16.mxu0 0
      %3365 = vmatpush2.bf16.msra.mxu0 0
      %3366 = vmatprep.subr.bf16.mxu0 0
      %3367 = vmatpush2.bf16.msra.mxu0 0
      %3368 = vmatprep.subr.bf16.mxu0 0
      %3369 = vmatpush2.bf16.msra.mxu0 0
      %3370 = vmatprep.mubr.bf16.mxu0 0
      %3371 = vmatmul.mubr.bf16.gmra.mxu0 %v3336
      %v3372 = vpop.f32.mrf.mxu0
      %v3373 = vadd.f32 %v2948, %v3372
      %v3374 = vpop.f32.mrf.mxu0
      %v3375 = vpop.f32.mrf.mxu0
      %v3376 = vpop.f32.mrf.mxu0
      %3377 = vdwg.mxu0
      %v3378 = vmax.f32 %v3373, 0.0
      %v3379 = vsel %vm809, %v3378, 0.0
      %3380 = vadd.xlane.f32.xlu0 %v3379
      %v3381 = vpop.xlane.xlu0 %3380
      %v3382 = vmul.f32 %v3381, %v1755
      %v3383 = vsub.f32 %v3378, %v3382
      %v3384 = vmul.f32 %v3383, %v3383
      %v3385 = vsel %vm809, %v3384, 0.0
      %3386 = vadd.xlane.f32.xlu0 %v3385
      %v3387 = vpop.xlane.xlu0 %3386
      %v3388 = vmul.f32 %v3387, %v1755
      %v3389 = vadd.f32 %v3388, 1e-05
      %v3390 = vrsqrt.pop %v3389
      %v3391 = vmul.f32 %v3383, %v3390
      %v3392 = vmul.f32 %v3391, %v3016
      %v3393 = vadd.f32 %v3392, %v3024
      %3394 = vrot.lane.b32.xlu0 %v2941, 72
      %v3395 = vpop.permute.xlu0 %3394
      %v3397 = vsel %vm2170, %v3395, 0
      %3399 = vmatprep.subr.bf16.mxu0 0
      %3400 = vmatpush1.bf16.msra.mxu0 0
      %3401 = vmatprep.subr.bf16.mxu0 0
      %3402 = vmatpush1.bf16.msra.mxu0 0
      %3403 = vmatprep.subr.bf16.mxu0 0
      %3404 = vmatpush1.bf16.msra.mxu0 0
      %3405 = vmatprep.subr.bf16.mxu0 0
      %3406 = vmatpush1.bf16.msra.mxu0 0
      %3407 = vmatprep.subr.bf16.mxu0 0
      %3408 = vmatpush1.bf16.msra.mxu0 0
      %3409 = vmatprep.subr.bf16.mxu0 0
      %3410 = vmatpush1.bf16.msra.mxu0 0
      %3411 = vmatprep.subr.bf16.mxu0 0
      %3412 = vmatpush1.bf16.msra.mxu0 0
      %3413 = vmatprep.subr.bf16.mxu0 0
      %3414 = vmatpush1.bf16.msra.mxu0 %v2955
      %3415 = vmatprep.subr.bf16.mxu0 0
      %3416 = vmatpush2.bf16.msra.mxu0 0
      %3417 = vmatprep.subr.bf16.mxu0 0
      %3418 = vmatpush2.bf16.msra.mxu0 0
      %3419 = vmatprep.subr.bf16.mxu0 0
      %3420 = vmatpush2.bf16.msra.mxu0 0
      %3421 = vmatprep.subr.bf16.mxu0 0
      %3422 = vmatpush2.bf16.msra.mxu0 0
      %3423 = vmatprep.subr.bf16.mxu0 0
      %3424 = vmatpush2.bf16.msra.mxu0 0
      %3425 = vmatprep.subr.bf16.mxu0 0
      %3426 = vmatpush2.bf16.msra.mxu0 0
      %3427 = vmatprep.subr.bf16.mxu0 0
      %3428 = vmatpush2.bf16.msra.mxu0 0
      %3429 = vmatprep.subr.bf16.mxu0 0
      %3430 = vmatpush2.bf16.msra.mxu0 0
      %3431 = vmatprep.mubr.bf16.mxu0 0
      %3432 = vmatmul.mubr.bf16.gmra.mxu0 %v3397
      %v3433 = vpop.f32.mrf.mxu0
      %v3434 = vadd.f32 %v2948, %v3433
      %v3435 = vpop.f32.mrf.mxu0
      %v3436 = vpop.f32.mrf.mxu0
      %v3437 = vpop.f32.mrf.mxu0
      %3438 = vdwg.mxu0
      %v3439 = vmax.f32 %v3434, 0.0
      %v3440 = vsel %vm809, %v3439, 0.0
      %3441 = vadd.xlane.f32.xlu0 %v3440
      %v3442 = vpop.xlane.xlu0 %3441
      %v3443 = vmul.f32 %v3442, %v1755
      %v3444 = vsub.f32 %v3439, %v3443
      %v3445 = vmul.f32 %v3444, %v3444
      %v3446 = vsel %vm809, %v3445, 0.0
      %3447 = vadd.xlane.f32.xlu0 %v3446
      %v3448 = vpop.xlane.xlu0 %3447
      %v3449 = vmul.f32 %v3448, %v1755
      %v3450 = vadd.f32 %v3449, 1e-05
      %v3451 = vrsqrt.pop %v3450
      %v3452 = vmul.f32 %v3444, %v3451
      %v3453 = vmul.f32 %v3452, %v3016
      %v3454 = vadd.f32 %v3453, %v3024
      %3456 = vrot.lane.b32.xlu0 %v3088, 32
      %v3457 = vpop.permute.xlu0 %3456
      %3460 = vrot.lane.b32.xlu0 %v3149, 64
      %v3461 = vpop.permute.xlu0 %3460
      %3464 = vrot.lane.b32.xlu0 %v3210, 96
      %v3465 = vpop.permute.xlu0 %3464
      %3468 = vrot.lane.b32.xlu0 %v3332, 32
      %v3469 = vpop.permute.xlu0 %3468
      %3472 = vrot.lane.b32.xlu0 %v3393, 64
      %v3473 = vpop.permute.xlu0 %3472
      %3476 = vrot.lane.b32.xlu0 %v3454, 96
      %v3477 = vpop.permute.xlu0 %3476
      %v3479 = vsel %vm809, %v3026, %v3457
      %v3480 = vsel %vm1810, %v3479, %v3461
      %v3481 = vsel %vm1812, %v3480, %v3465
      %v3482 = vsel %vm809, %v3271, %v3469
      %v3483 = vsel %vm1810, %v3482, %v3473
      %v3484 = vsel %vm1812, %v3483, %v3477
      %3485 = vst [vmem:[%s715] sm:$0xff] %v3481
      %3486 = vst [vmem:[%s715 + $0x8] sm:$0xff] %v3484
      %p3487 = scmp.lt.s32.totalorder %s33, 1
      %s3488 = scalar_select %p3487, %s33, 1
      %s3489 = smul.addr %s3488, 2
      %s3490 = scalar_lea.vmem %s20, %s3489
      %p3491 = scmp.lt.s32.totalorder %s33, 1
      %s3492 = scalar_select %p3491, %s33, 1
      %s3493 = smul.addr %s3492, 2
      %s3494 = smul.addr %s3493, 8
      %s3495 = scalar_lea.vmem %s21, %s3494
      // Predicated region
      $region101: #{pgn_forward.1} parent=99 // pred_check
        %p3496 = pneg %p491
      $region102: #{pgn_forward.1} parent=99 // pred_check_branch
        %3498 = sbr.rel (%p3496) target = $region104
      $region103: #{pgn_forward.1} parent=99 // pred_region
        _
      $region104: #{pgn_forward.1} parent=99 // pred_fallthru
        _
      // Predicated region
      $region105: #{pgn_forward.1} parent=99 // pred_check
        %p3499 = pneg %p517
      $region106: #{pgn_forward.1} parent=99 // pred_check_branch
        %3501 = sbr.rel (%p3499) target = $region108
      $region107: #{pgn_forward.1} parent=99 // pred_region
        _
      $region108: #{pgn_forward.1} parent=99 // pred_fallthru
        _
    $region100: #{pgn_forward.1} parent=5 // pred_fallthru
      _
    %p3502 = scmp.le.s32.totalorder 2, %s28
    // Predicated region
    $region109: #{pgn_forward.1} parent=5 // pred_check
      %p3503 = pneg %p3502
    $region110: #{pgn_forward.1} parent=5 // pred_check_branch
      %3505 = sbr.rel (%p3503) target = $region112
    $region111: #{pgn_forward.1} parent=5 // pred_region
      %s3506 = ssub.s32 %s28, 2
      // Predicated region
      $region113: #{pgn_forward.1} parent=111 // pred_check
        %p3507 = pneg %p497
      $region114: #{pgn_forward.1} parent=111 // pred_check_branch
        %3509 = sbr.rel (%p3507) target = $region116
      $region115: #{pgn_forward.1} parent=111 // pred_region
        %p3510 = scmp.lt.s32.totalorder %s34, 1
        %s3511 = scalar_select %p3510, %s34, 1
        %s3512 = smul.addr %s3511, 2
        %s3513 = scalar_lea.vmem %s20, %s3512
      $region116: #{pgn_forward.1} parent=111 // pred_fallthru
        _
      // Predicated region
      $region117: #{pgn_forward.1} parent=111 // pred_check
        %p3514 = pneg %p523
      $region118: #{pgn_forward.1} parent=111 // pred_check_branch
        %3516 = sbr.rel (%p3514) target = $region120
      $region119: #{pgn_forward.1} parent=111 // pred_region
        %p3517 = scmp.lt.s32.totalorder %s34, 1
        %s3518 = scalar_select %p3517, %s34, 1
        %s3519 = smul.addr %s3518, 2
        %s3520 = smul.addr %s3519, 8
        %s3521 = scalar_lea.vmem %s21, %s3520
      $region120: #{pgn_forward.1} parent=111 // pred_fallthru
        _
    $region112: #{pgn_forward.1} parent=5 // pred_fallthru
      _
  $region6: #{pgn_forward.1} parent=0 // loop_footer
    %s32 = sadd.s32 1, %s28
  $region7: #{pgn_forward.1} parent=0 // loop_footer_branch
    %27 = sbr.rel target = $region3
  $region8: #{pgn_forward.1} parent=0 // loop_exit
    _

</llo_original>
